<compile_context>
chip_gen: v7x
topology: tpu7x:2x2x1
jax: 0.10.0
libtpu: 0.0.40
codegen_flags: <defaults>
</compile_context>

<pallas_src>
import functools

import jax
import jax.numpy as jnp
from jax import lax
from jax.experimental import pallas as pl
from jax.experimental.pallas import tpu as pltpu

D_MODEL = 32
NUM_HEADS = 4
D_FF = 64
D_HEAD = D_MODEL // NUM_HEADS
LN_EPS = 1e-5


# --------------------------- in-kernel helpers ------------------------------

def _layer_norm(x, gamma, beta, eps):
    # PyTorch nn.LayerNorm: biased variance, eps inside rsqrt, affine.
    mean = jnp.mean(x, axis=-1, keepdims=True)
    var = jnp.mean((x - mean) ** 2, axis=-1, keepdims=True)
    return (x - mean) * lax.rsqrt(var + eps) * gamma + beta


def _project_heads(x, w_h, b_h):
    """x: [S, D]; w_h: [N, D, dh]; b_h: [N, 1, dh] -> [N, S, dh].

    One leading-batch-dim matmul that produces a head-major layout, so no
    per-head lane slices are ever needed downstream.
    """
    n = w_h.shape[0]
    xb = jnp.broadcast_to(x[None], (n, x.shape[0], x.shape[1]))
    return jnp.einsum('nsd,ndf->nsf', xb, w_h,
                      preferred_element_type=jnp.float32) + b_h


def _attention(q_h, k_h, v_h, wo_h, bo, causal):
    """Head-batched attention.  q_h: [H, Sq, dh]; k_h/v_h: [H, Sk, dh];
    wo_h: [H, dh, D]; bo: [1, D].  The 1/sqrt(dh) scale is pre-folded into the
    Q projection weights.  Returns [Sq, D]."""
    _, sq, _ = q_h.shape
    sk = k_h.shape[1]
    s = jnp.einsum('hqd,hkd->hqk', q_h, k_h,
                   preferred_element_type=jnp.float32)
    if causal:  # mask built once, broadcast over all heads
        row = lax.broadcasted_iota(jnp.int32, (sq, sk), 0)
        col = lax.broadcasted_iota(jnp.int32, (sq, sk), 1)
        s = jnp.where((row >= col)[None, :, :], s, -1e30)
    m = jnp.max(s, axis=-1, keepdims=True)
    p = jnp.exp(s - m)
    denom = jnp.sum(p, axis=-1, keepdims=True)
    attn = p * pl.reciprocal(denom, approx=True)   # EUP slot, frees the VPU
    ctx = jnp.einsum('hqk,hkd->hqd', attn, v_h,
                     preferred_element_type=jnp.float32)
    # Per-head output projection, summed over heads == concat(heads) @ Wo.
    out = jnp.einsum('hqd,hdf->hqf', ctx, wo_h,
                     preferred_element_type=jnp.float32)
    return jnp.sum(out, axis=0) + bo


# ------------------------------ fused kernel --------------------------------

def _decoder_layer_kernel(y_ref, enc_ref,
                          wqkv_m_ref, bqkv_m_ref, wo_m_ref, bo_m_ref,
                          g1_ref, be1_ref,
                          wq_e_ref, bq_e_ref, wkv_e_ref, bkv_e_ref,
                          wo_e_ref, bo_e_ref,
                          g2_ref, be2_ref,
                          w1_ref, bf1_ref, w2_ref, bf2_ref,
                          g3_ref, be3_ref,
                          o_ref, *, num_heads, eps, causal_self_attn):
    H = num_heads
    y = y_ref[...]        # [Sq, D]  (batch dim squeezed by the BlockSpec)
    enc = enc_ref[...]    # [Se, D]

    # ---- masked self-attention (reference harness passes dec_mask=None) ----
    qkv = _project_heads(y, wqkv_m_ref[...], bqkv_m_ref[...])      # [3H, Sq, dh]
    a = _attention(qkv[0:H], qkv[H:2 * H], qkv[2 * H:3 * H],
                   wo_m_ref[...], bo_m_ref[...], causal_self_attn)
    y = _layer_norm(y + a, g1_ref[...], be1_ref[...], eps)

    # ---- cross-attention over the encoder output (enc_mask=None) ----
    q_h = _project_heads(y, wq_e_ref[...], bq_e_ref[...])          # [H, Sq, dh]
    kv = _project_heads(enc, wkv_e_ref[...], bkv_e_ref[...])       # [2H, Se, dh]
    a = _attention(q_h, kv[0:H], kv[H:2 * H],
                   wo_e_ref[...], bo_e_ref[...], False)
    y = _layer_norm(y + a, g2_ref[...], be2_ref[...], eps)

    # ---- position-wise FFN (ReLU) ----
    h = jnp.maximum(
        jnp.dot(y, w1_ref[...], preferred_element_type=jnp.float32) + bf1_ref[...],
        0.0)
    f = jnp.dot(h, w2_ref[...], preferred_element_type=jnp.float32) + bf2_ref[...]
    o_ref[...] = _layer_norm(y + f, g3_ref[...], be3_ref[...], eps).astype(o_ref.dtype)


# ------------------------------- wrapper ------------------------------------

def decoder_layer(y, enc_in, packed, enc_mask=None, dec_mask=None,
                  causal_self_attn=False):
    # TODO(synk): arbitrary enc_mask/dec_mask tensors are not supported (the
    # reference MultiHeadAttention mask format is unspecified); only mask=None
    # (plus an optional built-in causal flag for self-attention) is implemented.
    assert enc_mask is None and dec_mask is None
    B, S, D = y.shape
    Se = enc_in.shape[1]

    weights = (
        packed["wqkv_m"], packed["bqkv_m"], packed["wo_m"], packed["bo_m"],
        packed["g1"], packed["be1"],
        packed["wq_e"], packed["bq_e"], packed["wkv_e"], packed["bkv_e"],
        packed["wo_e"], packed["bo_e"], packed["g2"], packed["be2"],
        packed["w1"], packed["bf1"], packed["w2"], packed["bf2"],
        packed["g3"], packed["be3"],
    )

    def full_spec(w):   # full-array VMEM resident, same block every grid step
        nd = w.ndim
        return pl.BlockSpec(w.shape, lambda b: (0,) * nd)

    kern = functools.partial(_decoder_layer_kernel, num_heads=NUM_HEADS,
                             eps=LN_EPS, causal_self_attn=causal_self_attn)
    return pl.pallas_call(
        kern,
        out_shape=jax.ShapeDtypeStruct((B, S, D), y.dtype),
        grid=(B,),  # batch-parallel grid: uses both TensorCores on v7x
        in_specs=[pl.BlockSpec((None, S, D), lambda b: (b, 0, 0)),
                  pl.BlockSpec((None, Se, D), lambda b: (b, 0, 0))]
                 + [full_spec(w) for w in weights],
        out_specs=pl.BlockSpec((None, S, D), lambda b: (b, 0, 0)),
        compiler_params=pltpu.CompilerParams(
            dimension_semantics=("parallel",)),
    )(y, enc_in, *weights)


# --------------------------- deterministic params ---------------------------

def init_params(key):
    def lin(k, din, dout, scale=0.05):
        kw, kb = jax.random.split(k)
        return (scale * jax.random.normal(kw, (din, dout), jnp.float32),
                scale * jax.random.normal(kb, (dout,), jnp.float32))

    def mha_params(k):
        ks = jax.random.split(k, 4)
        wq, bq = lin(ks[0], D_MODEL, D_MODEL)
        wk, bk = lin(ks[1], D_MODEL, D_MODEL)
        wv, bv = lin(ks[2], D_MODEL, D_MODEL)
        wo, bo = lin(ks[3], D_MODEL, D_MODEL)
        return dict(wq=wq, bq=bq, wk=wk, bk=bk, wv=wv, bv=bv, wo=wo, bo=bo)

    def ln_params():
        return dict(gamma=jnp.ones((D_MODEL,), jnp.float32),
                    beta=jnp.zeros((D_MODEL,), jnp.float32))

    k1, k2, k3, k4 = jax.random.split(key, 4)
    w1, b1 = lin(k3, D_MODEL, D_FF)
    w2, b2 = lin(k4, D_FF, D_MODEL)
    return dict(masked_mha=mha_params(k1), enc_mha=mha_params(k2),
                enc_ffn=dict(w1=w1, b1=b1, w2=w2, b2=b2),
                ln_mha=ln_params(), ln_enc_mha=ln_params(), ln_ffn=ln_params())


def pack_params(params):
    """One-time weight packing (kept OUT of the jitted per-call path).

    * Q/K/V and Wo are re-laid out per head ([N, D, dh] / [H, dh, D]) so the
      kernel never slices heads out of a lane-packed [*, D] tensor.
    * The 1/sqrt(d_head) softmax scale is folded into Wq / bq.
    """
    H, dh = NUM_HEADS, D_HEAD
    scale = 1.0 / (dh ** 0.5)
    row = lambda v: v.reshape(1, -1)

    def heads_in(w):    # [D, D] -> [H, D, dh]  (split output columns by head)
        return jnp.transpose(w.reshape(D_MODEL, H, dh), (1, 0, 2))

    def heads_bias(b):  # [D] -> [H, 1, dh]
        return b.reshape(H, 1, dh)

    def heads_out(w):   # [D, D] -> [H, dh, D]  (split input rows by head)
        return w.reshape(H, dh, D_MODEL)

    mm, em, ff = params["masked_mha"], params["enc_mha"], params["enc_ffn"]

    return dict(
        wqkv_m=jnp.concatenate([heads_in(mm["wq"]) * scale,
                                heads_in(mm["wk"]), heads_in(mm["wv"])], axis=0),
        bqkv_m=jnp.concatenate([heads_bias(mm["bq"]) * scale,
                                heads_bias(mm["bk"]), heads_bias(mm["bv"])], axis=0),
        wo_m=heads_out(mm["wo"]), bo_m=row(mm["bo"]),
        g1=row(params["ln_mha"]["gamma"]), be1=row(params["ln_mha"]["beta"]),
        wq_e=heads_in(em["wq"]) * scale, bq_e=heads_bias(em["bq"]) * scale,
        wkv_e=jnp.concatenate([heads_in(em["wk"]), heads_in(em["wv"])], axis=0),
        bkv_e=jnp.concatenate([heads_bias(em["bk"]), heads_bias(em["bv"])], axis=0),
        wo_e=heads_out(em["wo"]), bo_e=row(em["bo"]),
        g2=row(params["ln_enc_mha"]["gamma"]), be2=row(params["ln_enc_mha"]["beta"]),
        w1=ff["w1"], bf1=row(ff["b1"]), w2=ff["w2"], bf2=row(ff["b2"]),
        g3=row(params["ln_ffn"]["gamma"]), be3=row(params["ln_ffn"]["beta"]),
    )


# ------------------------- pure-JAX reference (check) ------------------------

def decoder_layer_reference(y, enc_in, params):
    def ln(x, p):
        m = jnp.mean(x, axis=-1, keepdims=True)
        v = jnp.mean((x - m) ** 2, axis=-1, keepdims=True)
        return (x - m) / jnp.sqrt(v + LN_EPS) * p["gamma"] + p["beta"]

    def mha(q_in, k_in, v_in, p):
        B, Sq, D = q_in.shape
        Sk = k_in.shape[1]
        H, dh = NUM_HEADS, D_HEAD
        q = (q_in @ p["wq"] + p["bq"]).reshape(B, Sq, H, dh).transpose(0, 2, 1, 3)
        k = (k_in @ p["wk"] + p["bk"]).reshape(B, Sk, H, dh).transpose(0, 2, 1, 3)
        v = (v_in @ p["wv"] + p["bv"]).reshape(B, Sk, H, dh).transpose(0, 2, 1, 3)
        s = jnp.einsum('bhqd,bhkd->bhqk', q, k) / (dh ** 0.5)
        a = jax.nn.softmax(s, axis=-1)
        o = jnp.einsum('bhqk,bhkd->bhqd', a, v).transpose(0, 2, 1, 3).reshape(B, Sq, D)
        return o @ p["wo"] + p["bo"]

    def ffn(x, p):
        return jnp.maximum(x @ p["w1"] + p["b1"], 0.0) @ p["w2"] + p["b2"]

    y = ln(y + mha(y, y, y, params["masked_mha"]), params["ln_mha"])
    y = ln(y + mha(y, enc_in, enc_in, params["enc_mha"]), params["ln_enc_mha"])
    y = ln(y + ffn(y, params["enc_ffn"]), params["ln_ffn"])
    return y


# ---------------------------------- main -------------------------------------

if __name__ == "__main__":
    B, S_DEC, S_ENC = 2, 8, 8
    key = jax.random.PRNGKey(0)
    k_y, k_enc, k_p = jax.random.split(key, 3)

    y = jax.random.normal(k_y, (B, S_DEC, D_MODEL), jnp.float32)
    enc_in = jax.random.normal(k_enc, (B, S_ENC, D_MODEL), jnp.float32)
    params = init_params(k_p)
    packed = pack_params(params)   # one-time packing, not in the per-call path

    fwd = jax.jit(lambda y_, e_, p_: decoder_layer(y_, e_, p_))
    out = jax.block_until_ready(fwd(y, enc_in, packed))

    assert out.shape == (B, S_DEC, D_MODEL)
    assert bool(jnp.all(jnp.isfinite(out)))

    with jax.default_matmul_precision("highest"):
        ref = decoder_layer_reference(y, enc_in, params)
    # approx reciprocal in the softmax -> allow a small (~2^-12 rel) deviation
    assert bool(jnp.allclose(out, ref, atol=2e-2, rtol=2e-2))
    print("KERNEL_OK")
</pallas_src>

<mosaic_0001>
module attributes {stable_mosaic.version = 11 : i64} {
  func.func @_decoder_layer_kernel(%arg0: i32, %arg1: memref<1x8x32xf32, #tpu.memory_space<vmem>>, %arg2: memref<1x8x32xf32, #tpu.memory_space<vmem>>, %arg3: memref<12x32x8xf32, #tpu.memory_space<vmem>>, %arg4: memref<12x1x8xf32, #tpu.memory_space<vmem>>, %arg5: memref<4x8x32xf32, #tpu.memory_space<vmem>>, %arg6: memref<1x32xf32, #tpu.memory_space<vmem>>, %arg7: memref<1x32xf32, #tpu.memory_space<vmem>>, %arg8: memref<1x32xf32, #tpu.memory_space<vmem>>, %arg9: memref<4x32x8xf32, #tpu.memory_space<vmem>>, %arg10: memref<4x1x8xf32, #tpu.memory_space<vmem>>, %arg11: memref<8x32x8xf32, #tpu.memory_space<vmem>>, %arg12: memref<8x1x8xf32, #tpu.memory_space<vmem>>, %arg13: memref<4x8x32xf32, #tpu.memory_space<vmem>>, %arg14: memref<1x32xf32, #tpu.memory_space<vmem>>, %arg15: memref<1x32xf32, #tpu.memory_space<vmem>>, %arg16: memref<1x32xf32, #tpu.memory_space<vmem>>, %arg17: memref<32x64xf32, #tpu.memory_space<vmem>>, %arg18: memref<1x64xf32, #tpu.memory_space<vmem>>, %arg19: memref<64x32xf32, #tpu.memory_space<vmem>>, %arg20: memref<1x32xf32, #tpu.memory_space<vmem>>, %arg21: memref<1x32xf32, #tpu.memory_space<vmem>>, %arg22: memref<1x32xf32, #tpu.memory_space<vmem>>, %arg23: memref<1x8x32xf32, #tpu.memory_space<vmem>>) attributes {dimension_semantics = [#tpu.dimension_semantics<parallel>], iteration_bounds = array<i64: 2>, scalar_prefetch = 0 : i64, scratch_operands = 0 : i64, tpu.core_type = #tpu.core_type<tc>, window_params = [{transform_indices = @transform_0, window_bounds = array<i64: 1, 8, 32>}, {transform_indices = @transform_1, window_bounds = array<i64: 1, 8, 32>}, {pipeline_mode = #tpu.pipeline_mode<synchronous>, transform_indices = @transform_2, window_bounds = array<i64: 12, 32, 8>}, {pipeline_mode = #tpu.pipeline_mode<synchronous>, transform_indices = @transform_3, window_bounds = array<i64: 12, 1, 8>}, {pipeline_mode = #tpu.pipeline_mode<synchronous>, transform_indices = @transform_4, window_bounds = array<i64: 4, 8, 32>}, {pipeline_mode = #tpu.pipeline_mode<synchronous>, transform_indices = @transform_5, window_bounds = array<i64: 1, 32>}, {pipeline_mode = #tpu.pipeline_mode<synchronous>, transform_indices = @transform_6, window_bounds = array<i64: 1, 32>}, {pipeline_mode = #tpu.pipeline_mode<synchronous>, transform_indices = @transform_7, window_bounds = array<i64: 1, 32>}, {pipeline_mode = #tpu.pipeline_mode<synchronous>, transform_indices = @transform_8, window_bounds = array<i64: 4, 32, 8>}, {pipeline_mode = #tpu.pipeline_mode<synchronous>, transform_indices = @transform_9, window_bounds = array<i64: 4, 1, 8>}, {pipeline_mode = #tpu.pipeline_mode<synchronous>, transform_indices = @transform_10, window_bounds = array<i64: 8, 32, 8>}, {pipeline_mode = #tpu.pipeline_mode<synchronous>, transform_indices = @transform_11, window_bounds = array<i64: 8, 1, 8>}, {pipeline_mode = #tpu.pipeline_mode<synchronous>, transform_indices = @transform_12, window_bounds = array<i64: 4, 8, 32>}, {pipeline_mode = #tpu.pipeline_mode<synchronous>, transform_indices = @transform_13, window_bounds = array<i64: 1, 32>}, {pipeline_mode = #tpu.pipeline_mode<synchronous>, transform_indices = @transform_14, window_bounds = array<i64: 1, 32>}, {pipeline_mode = #tpu.pipeline_mode<synchronous>, transform_indices = @transform_15, window_bounds = array<i64: 1, 32>}, {pipeline_mode = #tpu.pipeline_mode<synchronous>, transform_indices = @transform_16, window_bounds = array<i64: 32, 64>}, {pipeline_mode = #tpu.pipeline_mode<synchronous>, transform_indices = @transform_17, window_bounds = array<i64: 1, 64>}, {pipeline_mode = #tpu.pipeline_mode<synchronous>, transform_indices = @transform_18, window_bounds = array<i64: 64, 32>}, {pipeline_mode = #tpu.pipeline_mode<synchronous>, transform_indices = @transform_19, window_bounds = array<i64: 1, 32>}, {pipeline_mode = #tpu.pipeline_mode<synchronous>, transform_indices = @transform_20, window_bounds = array<i64: 1, 32>}, {pipeline_mode = #tpu.pipeline_mode<synchronous>, transform_indices = @transform_21, window_bounds = array<i64: 1, 32>}, {transform_indices = @transform_22, window_bounds = array<i64: 1, 8, 32>}]} {
    %c0 = arith.constant 0 : index
    %c0_0 = arith.constant 0 : index
    %c0_1 = arith.constant 0 : index
    %0 = vector.load %arg1[%c0, %c0_0, %c0_1] : memref<1x8x32xf32, #tpu.memory_space<vmem>>, vector<1x8x32xf32>
    %1 = vector.shape_cast %0 : vector<1x8x32xf32> to vector<8x32xf32>
    %c0_2 = arith.constant 0 : index
    %c0_3 = arith.constant 0 : index
    %c0_4 = arith.constant 0 : index
    %2 = vector.load %arg2[%c0_2, %c0_3, %c0_4] : memref<1x8x32xf32, #tpu.memory_space<vmem>>, vector<1x8x32xf32>
    %3 = vector.shape_cast %2 : vector<1x8x32xf32> to vector<8x32xf32>
    %c0_5 = arith.constant 0 : index
    %c0_6 = arith.constant 0 : index
    %c0_7 = arith.constant 0 : index
    %4 = vector.load %arg3[%c0_5, %c0_6, %c0_7] : memref<12x32x8xf32, #tpu.memory_space<vmem>>, vector<12x32x8xf32>
    %c0_8 = arith.constant 0 : index
    %c0_9 = arith.constant 0 : index
    %c0_10 = arith.constant 0 : index
    %5 = vector.load %arg4[%c0_8, %c0_9, %c0_10] : memref<12x1x8xf32, #tpu.memory_space<vmem>>, vector<12x1x8xf32>
    %6 = vector.shape_cast %1 : vector<8x32xf32> to vector<1x8x32xf32>
    %7 = vector.shape_cast %6 : vector<1x8x32xf32> to vector<1x8x32xf32>
    %8 = vector.broadcast %7 : vector<1x8x32xf32> to vector<12x8x32xf32>
    "tpu.trace_start"() <{level = 10 : i32, message = "nsd,ndf->nsf"}> : () -> ()
    %cst = arith.constant dense<0.000000e+00> : vector<12x8x8xf32>
    %9 = tpu.matmul %8, %4, %cst {dimension_numbers = #tpu.dot_dimension_numbers<[2], [1], [1], [2], [0, 0, 0, 1, 1, 2], [0], [0]>} : vector<12x8x32xf32>, vector<12x32x8xf32>, vector<12x8x8xf32> -> vector<12x8x8xf32>
    "tpu.trace_stop"() : () -> ()
    %10 = vector.broadcast %5 : vector<12x1x8xf32> to vector<12x8x8xf32>
    %11 = arith.addf %9, %10 : vector<12x8x8xf32>
    %12 = vector.extract_strided_slice %11 {offsets = [0, 0, 0], sizes = [4, 8, 8], strides = [1, 1, 1]} : vector<12x8x8xf32> to vector<4x8x8xf32>
    %13 = vector.extract_strided_slice %11 {offsets = [4, 0, 0], sizes = [4, 8, 8], strides = [1, 1, 1]} : vector<12x8x8xf32> to vector<4x8x8xf32>
    %14 = vector.extract_strided_slice %11 {offsets = [8, 0, 0], sizes = [4, 8, 8], strides = [1, 1, 1]} : vector<12x8x8xf32> to vector<4x8x8xf32>
    %c0_11 = arith.constant 0 : index
    %c0_12 = arith.constant 0 : index
    %c0_13 = arith.constant 0 : index
    %15 = vector.load %arg5[%c0_11, %c0_12, %c0_13] : memref<4x8x32xf32, #tpu.memory_space<vmem>>, vector<4x8x32xf32>
    %c0_14 = arith.constant 0 : index
    %c0_15 = arith.constant 0 : index
    %16 = vector.load %arg6[%c0_14, %c0_15] : memref<1x32xf32, #tpu.memory_space<vmem>>, vector<1x32xf32>
    "tpu.trace_start"() <{level = 10 : i32, message = "hqd,hkd->hqk"}> : () -> ()
    %cst_16 = arith.constant dense<0.000000e+00> : vector<4x8x8xf32>
    %17 = tpu.matmul %12, %13, %cst_16 {dimension_numbers = #tpu.dot_dimension_numbers<[2], [2], [1], [1], [0, 0, 0, 1, 1, 1], [0], [0]>} : vector<4x8x8xf32>, vector<4x8x8xf32>, vector<4x8x8xf32> -> vector<4x8x8xf32>
    "tpu.trace_stop"() : () -> ()
    %cst_17 = arith.constant dense<0xFF800000> : vector<4x8xf32>
    %18 = vector.multi_reduction <maximumf>, %17, %cst_17 [2] : vector<4x8x8xf32> to vector<4x8xf32>
    %19 = vector.shape_cast %18 : vector<4x8xf32> to vector<4x8x1xf32>
    %20 = vector.broadcast %19 : vector<4x8x1xf32> to vector<4x8x8xf32>
    %21 = arith.subf %17, %20 : vector<4x8x8xf32>
    %22 = math.exp %21 : vector<4x8x8xf32>
    %cst_18 = arith.constant dense<0.000000e+00> : vector<4x8xf32>
    %23 = vector.multi_reduction <add>, %22, %cst_18 [2] : vector<4x8x8xf32> to vector<4x8xf32>
    %24 = vector.shape_cast %23 : vector<4x8xf32> to vector<4x8x1xf32>
    %25 = tpu.reciprocal %24 {approx = true} : vector<4x8x1xf32> -> vector<4x8x1xf32>
    %26 = vector.broadcast %25 : vector<4x8x1xf32> to vector<4x8x8xf32>
    %27 = arith.mulf %22, %26 : vector<4x8x8xf32>
    "tpu.trace_start"() <{level = 10 : i32, message = "hqk,hkd->hqd"}> : () -> ()
    %cst_19 = arith.constant dense<0.000000e+00> : vector<4x8x8xf32>
    %28 = tpu.matmul %27, %14, %cst_19 {dimension_numbers = #tpu.dot_dimension_numbers<[2], [1], [1], [2], [0, 0, 0, 1, 1, 2], [0], [0]>} : vector<4x8x8xf32>, vector<4x8x8xf32>, vector<4x8x8xf32> -> vector<4x8x8xf32>
    "tpu.trace_stop"() : () -> ()
    "tpu.trace_start"() <{level = 10 : i32, message = "hqd,hdf->hqf"}> : () -> ()
    %cst_20 = arith.constant dense<0.000000e+00> : vector<4x8x32xf32>
    %29 = tpu.matmul %28, %15, %cst_20 {dimension_numbers = #tpu.dot_dimension_numbers<[2], [1], [1], [2], [0, 0, 0, 1, 1, 2], [0], [0]>} : vector<4x8x8xf32>, vector<4x8x32xf32>, vector<4x8x32xf32> -> vector<4x8x32xf32>
    "tpu.trace_stop"() : () -> ()
    %cst_21 = arith.constant dense<0.000000e+00> : vector<8x32xf32>
    %30 = vector.multi_reduction <add>, %29, %cst_21 [0] : vector<4x8x32xf32> to vector<8x32xf32>
    %31 = vector.broadcast %16 : vector<1x32xf32> to vector<8x32xf32>
    %32 = arith.addf %30, %31 : vector<8x32xf32>
    %33 = arith.addf %1, %32 : vector<8x32xf32>
    %c0_22 = arith.constant 0 : index
    %c0_23 = arith.constant 0 : index
    %34 = vector.load %arg7[%c0_22, %c0_23] : memref<1x32xf32, #tpu.memory_space<vmem>>, vector<1x32xf32>
    %c0_24 = arith.constant 0 : index
    %c0_25 = arith.constant 0 : index
    %35 = vector.load %arg8[%c0_24, %c0_25] : memref<1x32xf32, #tpu.memory_space<vmem>>, vector<1x32xf32>
    %cst_26 = arith.constant dense<0.000000e+00> : vector<8xf32>
    %36 = vector.multi_reduction <add>, %33, %cst_26 [1] : vector<8x32xf32> to vector<8xf32>
    %37 = vector.shape_cast %36 : vector<8xf32> to vector<8x1xf32>
    %cst_27 = arith.constant 3.200000e+01 : f32
    %38 = vector.broadcast %cst_27 : f32 to vector<8x1xf32>
    %39 = arith.divf %37, %38 : vector<8x1xf32>
    %40 = vector.broadcast %39 : vector<8x1xf32> to vector<8x32xf32>
    %41 = arith.subf %33, %40 : vector<8x32xf32>
    %42 = arith.mulf %41, %41 : vector<8x32xf32>
    %cst_28 = arith.constant dense<0.000000e+00> : vector<8xf32>
    %43 = vector.multi_reduction <add>, %42, %cst_28 [1] : vector<8x32xf32> to vector<8xf32>
    %44 = vector.shape_cast %43 : vector<8xf32> to vector<8x1xf32>
    %cst_29 = arith.constant 3.200000e+01 : f32
    %45 = vector.broadcast %cst_29 : f32 to vector<8x1xf32>
    %46 = arith.divf %44, %45 : vector<8x1xf32>
    %47 = vector.broadcast %39 : vector<8x1xf32> to vector<8x32xf32>
    %48 = arith.subf %33, %47 : vector<8x32xf32>
    %cst_30 = arith.constant 9.99999974E-6 : f32
    %49 = vector.broadcast %cst_30 : f32 to vector<8x1xf32>
    %50 = arith.addf %46, %49 : vector<8x1xf32>
    %51 = math.rsqrt %50 : vector<8x1xf32>
    %52 = vector.broadcast %51 : vector<8x1xf32> to vector<8x32xf32>
    %53 = arith.mulf %48, %52 : vector<8x32xf32>
    %54 = vector.broadcast %34 : vector<1x32xf32> to vector<8x32xf32>
    %55 = arith.mulf %53, %54 : vector<8x32xf32>
    %56 = vector.broadcast %35 : vector<1x32xf32> to vector<8x32xf32>
    %57 = arith.addf %55, %56 : vector<8x32xf32>
    %c0_31 = arith.constant 0 : index
    %c0_32 = arith.constant 0 : index
    %c0_33 = arith.constant 0 : index
    %58 = vector.load %arg9[%c0_31, %c0_32, %c0_33] : memref<4x32x8xf32, #tpu.memory_space<vmem>>, vector<4x32x8xf32>
    %c0_34 = arith.constant 0 : index
    %c0_35 = arith.constant 0 : index
    %c0_36 = arith.constant 0 : index
    %59 = vector.load %arg10[%c0_34, %c0_35, %c0_36] : memref<4x1x8xf32, #tpu.memory_space<vmem>>, vector<4x1x8xf32>
    %60 = vector.shape_cast %57 : vector<8x32xf32> to vector<1x8x32xf32>
    %61 = vector.shape_cast %60 : vector<1x8x32xf32> to vector<1x8x32xf32>
    %62 = vector.broadcast %61 : vector<1x8x32xf32> to vector<4x8x32xf32>
    "tpu.trace_start"() <{level = 10 : i32, message = "nsd,ndf->nsf"}> : () -> ()
    %cst_37 = arith.constant dense<0.000000e+00> : vector<4x8x8xf32>
    %63 = tpu.matmul %62, %58, %cst_37 {dimension_numbers = #tpu.dot_dimension_numbers<[2], [1], [1], [2], [0, 0, 0, 1, 1, 2], [0], [0]>} : vector<4x8x32xf32>, vector<4x32x8xf32>, vector<4x8x8xf32> -> vector<4x8x8xf32>
    "tpu.trace_stop"() : () -> ()
    %64 = vector.broadcast %59 : vector<4x1x8xf32> to vector<4x8x8xf32>
    %65 = arith.addf %63, %64 : vector<4x8x8xf32>
    %c0_38 = arith.constant 0 : index
    %c0_39 = arith.constant 0 : index
    %c0_40 = arith.constant 0 : index
    %66 = vector.load %arg11[%c0_38, %c0_39, %c0_40] : memref<8x32x8xf32, #tpu.memory_space<vmem>>, vector<8x32x8xf32>
    %c0_41 = arith.constant 0 : index
    %c0_42 = arith.constant 0 : index
    %c0_43 = arith.constant 0 : index
    %67 = vector.load %arg12[%c0_41, %c0_42, %c0_43] : memref<8x1x8xf32, #tpu.memory_space<vmem>>, vector<8x1x8xf32>
    %68 = vector.shape_cast %3 : vector<8x32xf32> to vector<1x8x32xf32>
    %69 = vector.shape_cast %68 : vector<1x8x32xf32> to vector<1x8x32xf32>
    %70 = vector.broadcast %69 : vector<1x8x32xf32> to vector<8x8x32xf32>
    "tpu.trace_start"() <{level = 10 : i32, message = "nsd,ndf->nsf"}> : () -> ()
    %cst_44 = arith.constant dense<0.000000e+00> : vector<8x8x8xf32>
    %71 = tpu.matmul %70, %66, %cst_44 {dimension_numbers = #tpu.dot_dimension_numbers<[2], [1], [1], [2], [0, 0, 0, 1, 1, 2], [0], [0]>} : vector<8x8x32xf32>, vector<8x32x8xf32>, vector<8x8x8xf32> -> vector<8x8x8xf32>
    "tpu.trace_stop"() : () -> ()
    %72 = vector.broadcast %67 : vector<8x1x8xf32> to vector<8x8x8xf32>
    %73 = arith.addf %71, %72 : vector<8x8x8xf32>
    %74 = vector.extract_strided_slice %73 {offsets = [0, 0, 0], sizes = [4, 8, 8], strides = [1, 1, 1]} : vector<8x8x8xf32> to vector<4x8x8xf32>
    %75 = vector.extract_strided_slice %73 {offsets = [4, 0, 0], sizes = [4, 8, 8], strides = [1, 1, 1]} : vector<8x8x8xf32> to vector<4x8x8xf32>
    %c0_45 = arith.constant 0 : index
    %c0_46 = arith.constant 0 : index
    %c0_47 = arith.constant 0 : index
    %76 = vector.load %arg13[%c0_45, %c0_46, %c0_47] : memref<4x8x32xf32, #tpu.memory_space<vmem>>, vector<4x8x32xf32>
    %c0_48 = arith.constant 0 : index
    %c0_49 = arith.constant 0 : index
    %77 = vector.load %arg14[%c0_48, %c0_49] : memref<1x32xf32, #tpu.memory_space<vmem>>, vector<1x32xf32>
    "tpu.trace_start"() <{level = 10 : i32, message = "hqd,hkd->hqk"}> : () -> ()
    %cst_50 = arith.constant dense<0.000000e+00> : vector<4x8x8xf32>
    %78 = tpu.matmul %65, %74, %cst_50 {dimension_numbers = #tpu.dot_dimension_numbers<[2], [2], [1], [1], [0, 0, 0, 1, 1, 1], [0], [0]>} : vector<4x8x8xf32>, vector<4x8x8xf32>, vector<4x8x8xf32> -> vector<4x8x8xf32>
    "tpu.trace_stop"() : () -> ()
    %cst_51 = arith.constant dense<0xFF800000> : vector<4x8xf32>
    %79 = vector.multi_reduction <maximumf>, %78, %cst_51 [2] : vector<4x8x8xf32> to vector<4x8xf32>
    %80 = vector.shape_cast %79 : vector<4x8xf32> to vector<4x8x1xf32>
    %81 = vector.broadcast %80 : vector<4x8x1xf32> to vector<4x8x8xf32>
    %82 = arith.subf %78, %81 : vector<4x8x8xf32>
    %83 = math.exp %82 : vector<4x8x8xf32>
    %cst_52 = arith.constant dense<0.000000e+00> : vector<4x8xf32>
    %84 = vector.multi_reduction <add>, %83, %cst_52 [2] : vector<4x8x8xf32> to vector<4x8xf32>
    %85 = vector.shape_cast %84 : vector<4x8xf32> to vector<4x8x1xf32>
    %86 = tpu.reciprocal %85 {approx = true} : vector<4x8x1xf32> -> vector<4x8x1xf32>
    %87 = vector.broadcast %86 : vector<4x8x1xf32> to vector<4x8x8xf32>
    %88 = arith.mulf %83, %87 : vector<4x8x8xf32>
    "tpu.trace_start"() <{level = 10 : i32, message = "hqk,hkd->hqd"}> : () -> ()
    %cst_53 = arith.constant dense<0.000000e+00> : vector<4x8x8xf32>
    %89 = tpu.matmul %88, %75, %cst_53 {dimension_numbers = #tpu.dot_dimension_numbers<[2], [1], [1], [2], [0, 0, 0, 1, 1, 2], [0], [0]>} : vector<4x8x8xf32>, vector<4x8x8xf32>, vector<4x8x8xf32> -> vector<4x8x8xf32>
    "tpu.trace_stop"() : () -> ()
    "tpu.trace_start"() <{level = 10 : i32, message = "hqd,hdf->hqf"}> : () -> ()
    %cst_54 = arith.constant dense<0.000000e+00> : vector<4x8x32xf32>
    %90 = tpu.matmul %89, %76, %cst_54 {dimension_numbers = #tpu.dot_dimension_numbers<[2], [1], [1], [2], [0, 0, 0, 1, 1, 2], [0], [0]>} : vector<4x8x8xf32>, vector<4x8x32xf32>, vector<4x8x32xf32> -> vector<4x8x32xf32>
    "tpu.trace_stop"() : () -> ()
    %cst_55 = arith.constant dense<0.000000e+00> : vector<8x32xf32>
    %91 = vector.multi_reduction <add>, %90, %cst_55 [0] : vector<4x8x32xf32> to vector<8x32xf32>
    %92 = vector.broadcast %77 : vector<1x32xf32> to vector<8x32xf32>
    %93 = arith.addf %91, %92 : vector<8x32xf32>
    %94 = arith.addf %57, %93 : vector<8x32xf32>
    %c0_56 = arith.constant 0 : index
    %c0_57 = arith.constant 0 : index
    %95 = vector.load %arg15[%c0_56, %c0_57] : memref<1x32xf32, #tpu.memory_space<vmem>>, vector<1x32xf32>
    %c0_58 = arith.constant 0 : index
    %c0_59 = arith.constant 0 : index
    %96 = vector.load %arg16[%c0_58, %c0_59] : memref<1x32xf32, #tpu.memory_space<vmem>>, vector<1x32xf32>
    %cst_60 = arith.constant dense<0.000000e+00> : vector<8xf32>
    %97 = vector.multi_reduction <add>, %94, %cst_60 [1] : vector<8x32xf32> to vector<8xf32>
    %98 = vector.shape_cast %97 : vector<8xf32> to vector<8x1xf32>
    %cst_61 = arith.constant 3.200000e+01 : f32
    %99 = vector.broadcast %cst_61 : f32 to vector<8x1xf32>
    %100 = arith.divf %98, %99 : vector<8x1xf32>
    %101 = vector.broadcast %100 : vector<8x1xf32> to vector<8x32xf32>
    %102 = arith.subf %94, %101 : vector<8x32xf32>
    %103 = arith.mulf %102, %102 : vector<8x32xf32>
    %cst_62 = arith.constant dense<0.000000e+00> : vector<8xf32>
    %104 = vector.multi_reduction <add>, %103, %cst_62 [1] : vector<8x32xf32> to vector<8xf32>
    %105 = vector.shape_cast %104 : vector<8xf32> to vector<8x1xf32>
    %cst_63 = arith.constant 3.200000e+01 : f32
    %106 = vector.broadcast %cst_63 : f32 to vector<8x1xf32>
    %107 = arith.divf %105, %106 : vector<8x1xf32>
    %108 = vector.broadcast %100 : vector<8x1xf32> to vector<8x32xf32>
    %109 = arith.subf %94, %108 : vector<8x32xf32>
    %cst_64 = arith.constant 9.99999974E-6 : f32
    %110 = vector.broadcast %cst_64 : f32 to vector<8x1xf32>
    %111 = arith.addf %107, %110 : vector<8x1xf32>
    %112 = math.rsqrt %111 : vector<8x1xf32>
    %113 = vector.broadcast %112 : vector<8x1xf32> to vector<8x32xf32>
    %114 = arith.mulf %109, %113 : vector<8x32xf32>
    %115 = vector.broadcast %95 : vector<1x32xf32> to vector<8x32xf32>
    %116 = arith.mulf %114, %115 : vector<8x32xf32>
    %117 = vector.broadcast %96 : vector<1x32xf32> to vector<8x32xf32>
    %118 = arith.addf %116, %117 : vector<8x32xf32>
    %c0_65 = arith.constant 0 : index
    %c0_66 = arith.constant 0 : index
    %119 = vector.load %arg17[%c0_65, %c0_66] : memref<32x64xf32, #tpu.memory_space<vmem>>, vector<32x64xf32>
    %cst_67 = arith.constant dense<0.000000e+00> : vector<8x64xf32>
    %120 = tpu.matmul %118, %119, %cst_67 {dimension_numbers = #tpu.dot_dimension_numbers<[1], [0], [0], [1], [0, 0, 1, 1], [], []>} : vector<8x32xf32>, vector<32x64xf32>, vector<8x64xf32> -> vector<8x64xf32>
    %c0_68 = arith.constant 0 : index
    %c0_69 = arith.constant 0 : index
    %121 = vector.load %arg18[%c0_68, %c0_69] : memref<1x64xf32, #tpu.memory_space<vmem>>, vector<1x64xf32>
    %122 = vector.broadcast %121 : vector<1x64xf32> to vector<8x64xf32>
    %123 = arith.addf %120, %122 : vector<8x64xf32>
    %cst_70 = arith.constant 0.000000e+00 : f32
    %124 = vector.broadcast %cst_70 : f32 to vector<8x64xf32>
    %125 = arith.maximumf %123, %124 : vector<8x64xf32>
    %c0_71 = arith.constant 0 : index
    %c0_72 = arith.constant 0 : index
    %126 = vector.load %arg19[%c0_71, %c0_72] : memref<64x32xf32, #tpu.memory_space<vmem>>, vector<64x32xf32>
    %cst_73 = arith.constant dense<0.000000e+00> : vector<8x32xf32>
    %127 = tpu.matmul %125, %126, %cst_73 {dimension_numbers = #tpu.dot_dimension_numbers<[1], [0], [0], [1], [0, 0, 1, 1], [], []>} : vector<8x64xf32>, vector<64x32xf32>, vector<8x32xf32> -> vector<8x32xf32>
    %c0_74 = arith.constant 0 : index
    %c0_75 = arith.constant 0 : index
    %128 = vector.load %arg20[%c0_74, %c0_75] : memref<1x32xf32, #tpu.memory_space<vmem>>, vector<1x32xf32>
    %129 = vector.broadcast %128 : vector<1x32xf32> to vector<8x32xf32>
    %130 = arith.addf %127, %129 : vector<8x32xf32>
    %131 = arith.addf %118, %130 : vector<8x32xf32>
    %c0_76 = arith.constant 0 : index
    %c0_77 = arith.constant 0 : index
    %132 = vector.load %arg21[%c0_76, %c0_77] : memref<1x32xf32, #tpu.memory_space<vmem>>, vector<1x32xf32>
    %c0_78 = arith.constant 0 : index
    %c0_79 = arith.constant 0 : index
    %133 = vector.load %arg22[%c0_78, %c0_79] : memref<1x32xf32, #tpu.memory_space<vmem>>, vector<1x32xf32>
    %cst_80 = arith.constant dense<0.000000e+00> : vector<8xf32>
    %134 = vector.multi_reduction <add>, %131, %cst_80 [1] : vector<8x32xf32> to vector<8xf32>
    %135 = vector.shape_cast %134 : vector<8xf32> to vector<8x1xf32>
    %cst_81 = arith.constant 3.200000e+01 : f32
    %136 = vector.broadcast %cst_81 : f32 to vector<8x1xf32>
    %137 = arith.divf %135, %136 : vector<8x1xf32>
    %138 = vector.broadcast %137 : vector<8x1xf32> to vector<8x32xf32>
    %139 = arith.subf %131, %138 : vector<8x32xf32>
    %140 = arith.mulf %139, %139 : vector<8x32xf32>
    %cst_82 = arith.constant dense<0.000000e+00> : vector<8xf32>
    %141 = vector.multi_reduction <add>, %140, %cst_82 [1] : vector<8x32xf32> to vector<8xf32>
    %142 = vector.shape_cast %141 : vector<8xf32> to vector<8x1xf32>
    %cst_83 = arith.constant 3.200000e+01 : f32
    %143 = vector.broadcast %cst_83 : f32 to vector<8x1xf32>
    %144 = arith.divf %142, %143 : vector<8x1xf32>
    %145 = vector.broadcast %137 : vector<8x1xf32> to vector<8x32xf32>
    %146 = arith.subf %131, %145 : vector<8x32xf32>
    %cst_84 = arith.constant 9.99999974E-6 : f32
    %147 = vector.broadcast %cst_84 : f32 to vector<8x1xf32>
    %148 = arith.addf %144, %147 : vector<8x1xf32>
    %149 = math.rsqrt %148 : vector<8x1xf32>
    %150 = vector.broadcast %149 : vector<8x1xf32> to vector<8x32xf32>
    %151 = arith.mulf %146, %150 : vector<8x32xf32>
    %152 = vector.broadcast %132 : vector<1x32xf32> to vector<8x32xf32>
    %153 = arith.mulf %151, %152 : vector<8x32xf32>
    %154 = vector.broadcast %133 : vector<1x32xf32> to vector<8x32xf32>
    %155 = arith.addf %153, %154 : vector<8x32xf32>
    %c0_85 = arith.constant 0 : index
    %c0_86 = arith.constant 0 : index
    %c0_87 = arith.constant 0 : index
    %156 = vector.load %arg23[%c0_85, %c0_86, %c0_87] : memref<1x8x32xf32, #tpu.memory_space<vmem>>, vector<1x8x32xf32>
    %157 = vector.shape_cast %156 : vector<1x8x32xf32> to vector<8x32xf32>
    %158 = vector.shape_cast %155 : vector<8x32xf32> to vector<1x8x32xf32>
    tpu.vector_store %arg23[%c0_85, %c0_86, %c0_87], %158 {strides = array<i32>} : memref<1x8x32xf32, #tpu.memory_space<vmem>>, vector<1x8x32xf32>,
    return
  }
  func.func @transform_0(%arg0: i32) -> (i32, i32, i32) {
    %c0_i32 = arith.constant 0 : i32
    %c0_i32_0 = arith.constant 0 : i32
    %c0_i32_1 = arith.constant 0 : i32
    return %arg0, %c0_i32, %c0_i32_0 : i32, i32, i32
  }
  func.func @transform_1(%arg0: i32) -> (i32, i32, i32) {
    %c0_i32 = arith.constant 0 : i32
    %c0_i32_0 = arith.constant 0 : i32
    %c0_i32_1 = arith.constant 0 : i32
    return %arg0, %c0_i32, %c0_i32_0 : i32, i32, i32
  }
  func.func @transform_2(%arg0: i32) -> (i32, i32, i32) {
    %c0_i32 = arith.constant 0 : i32
    %c0_i32_0 = arith.constant 0 : i32
    %c0_i32_1 = arith.constant 0 : i32
    %c0_i32_2 = arith.constant 0 : i32
    return %c0_i32, %c0_i32_0, %c0_i32_1 : i32, i32, i32
  }
  func.func @transform_3(%arg0: i32) -> (i32, i32, i32) {
    %c0_i32 = arith.constant 0 : i32
    %c0_i32_0 = arith.constant 0 : i32
    %c0_i32_1 = arith.constant 0 : i32
    %c0_i32_2 = arith.constant 0 : i32
    return %c0_i32, %c0_i32_0, %c0_i32_1 : i32, i32, i32
  }
  func.func @transform_4(%arg0: i32) -> (i32, i32, i32) {
    %c0_i32 = arith.constant 0 : i32
    %c0_i32_0 = arith.constant 0 : i32
    %c0_i32_1 = arith.constant 0 : i32
    %c0_i32_2 = arith.constant 0 : i32
    return %c0_i32, %c0_i32_0, %c0_i32_1 : i32, i32, i32
  }
  func.func @transform_5(%arg0: i32) -> (i32, i32) {
    %c0_i32 = arith.constant 0 : i32
    %c0_i32_0 = arith.constant 0 : i32
    %c0_i32_1 = arith.constant 0 : i32
    return %c0_i32, %c0_i32_0 : i32, i32
  }
  func.func @transform_6(%arg0: i32) -> (i32, i32) {
    %c0_i32 = arith.constant 0 : i32
    %c0_i32_0 = arith.constant 0 : i32
    %c0_i32_1 = arith.constant 0 : i32
    return %c0_i32, %c0_i32_0 : i32, i32
  }
  func.func @transform_7(%arg0: i32) -> (i32, i32) {
    %c0_i32 = arith.constant 0 : i32
    %c0_i32_0 = arith.constant 0 : i32
    %c0_i32_1 = arith.constant 0 : i32
    return %c0_i32, %c0_i32_0 : i32, i32
  }
  func.func @transform_8(%arg0: i32) -> (i32, i32, i32) {
    %c0_i32 = arith.constant 0 : i32
    %c0_i32_0 = arith.constant 0 : i32
    %c0_i32_1 = arith.constant 0 : i32
    %c0_i32_2 = arith.constant 0 : i32
    return %c0_i32, %c0_i32_0, %c0_i32_1 : i32, i32, i32
  }
  func.func @transform_9(%arg0: i32) -> (i32, i32, i32) {
    %c0_i32 = arith.constant 0 : i32
    %c0_i32_0 = arith.constant 0 : i32
    %c0_i32_1 = arith.constant 0 : i32
    %c0_i32_2 = arith.constant 0 : i32
    return %c0_i32, %c0_i32_0, %c0_i32_1 : i32, i32, i32
  }
  func.func @transform_10(%arg0: i32) -> (i32, i32, i32) {
    %c0_i32 = arith.constant 0 : i32
    %c0_i32_0 = arith.constant 0 : i32
    %c0_i32_1 = arith.constant 0 : i32
    %c0_i32_2 = arith.constant 0 : i32
    return %c0_i32, %c0_i32_0, %c0_i32_1 : i32, i32, i32
  }
  func.func @transform_11(%arg0: i32) -> (i32, i32, i32) {
    %c0_i32 = arith.constant 0 : i32
    %c0_i32_0 = arith.constant 0 : i32
    %c0_i32_1 = arith.constant 0 : i32
    %c0_i32_2 = arith.constant 0 : i32
    return %c0_i32, %c0_i32_0, %c0_i32_1 : i32, i32, i32
  }
  func.func @transform_12(%arg0: i32) -> (i32, i32, i32) {
    %c0_i32 = arith.constant 0 : i32
    %c0_i32_0 = arith.constant 0 : i32
    %c0_i32_1 = arith.constant 0 : i32
    %c0_i32_2 = arith.constant 0 : i32
    return %c0_i32, %c0_i32_0, %c0_i32_1 : i32, i32, i32
  }
  func.func @transform_13(%arg0: i32) -> (i32, i32) {
    %c0_i32 = arith.constant 0 : i32
    %c0_i32_0 = arith.constant 0 : i32
    %c0_i32_1 = arith.constant 0 : i32
    return %c0_i32, %c0_i32_0 : i32, i32
  }
  func.func @transform_14(%arg0: i32) -> (i32, i32) {
    %c0_i32 = arith.constant 0 : i32
    %c0_i32_0 = arith.constant 0 : i32
    %c0_i32_1 = arith.constant 0 : i32
    return %c0_i32, %c0_i32_0 : i32, i32
  }
  func.func @transform_15(%arg0: i32) -> (i32, i32) {
    %c0_i32 = arith.constant 0 : i32
    %c0_i32_0 = arith.constant 0 : i32
    %c0_i32_1 = arith.constant 0 : i32
    return %c0_i32, %c0_i32_0 : i32, i32
  }
  func.func @transform_16(%arg0: i32) -> (i32, i32) {
    %c0_i32 = arith.constant 0 : i32
    %c0_i32_0 = arith.constant 0 : i32
    %c0_i32_1 = arith.constant 0 : i32
    return %c0_i32, %c0_i32_0 : i32, i32
  }
  func.func @transform_17(%arg0: i32) -> (i32, i32) {
    %c0_i32 = arith.constant 0 : i32
    %c0_i32_0 = arith.constant 0 : i32
    %c0_i32_1 = arith.constant 0 : i32
    return %c0_i32, %c0_i32_0 : i32, i32
  }
  func.func @transform_18(%arg0: i32) -> (i32, i32) {
    %c0_i32 = arith.constant 0 : i32
    %c0_i32_0 = arith.constant 0 : i32
    %c0_i32_1 = arith.constant 0 : i32
    return %c0_i32, %c0_i32_0 : i32, i32
  }
  func.func @transform_19(%arg0: i32) -> (i32, i32) {
    %c0_i32 = arith.constant 0 : i32
    %c0_i32_0 = arith.constant 0 : i32
    %c0_i32_1 = arith.constant 0 : i32
    return %c0_i32, %c0_i32_0 : i32, i32
  }
  func.func @transform_20(%arg0: i32) -> (i32, i32) {
    %c0_i32 = arith.constant 0 : i32
    %c0_i32_0 = arith.constant 0 : i32
    %c0_i32_1 = arith.constant 0 : i32
    return %c0_i32, %c0_i32_0 : i32, i32
  }
  func.func @transform_21(%arg0: i32) -> (i32, i32) {
    %c0_i32 = arith.constant 0 : i32
    %c0_i32_0 = arith.constant 0 : i32
    %c0_i32_1 = arith.constant 0 : i32
    return %c0_i32, %c0_i32_0 : i32, i32
  }
  func.func @transform_22(%arg0: i32) -> (i32, i32, i32) {
    %c0_i32 = arith.constant 0 : i32
    %c0_i32_0 = arith.constant 0 : i32
    %c0_i32_1 = arith.constant 0 : i32
    return %arg0, %c0_i32, %c0_i32_0 : i32, i32, i32
  }
}

</mosaic_0001>

<llo_original>
// kernel: _lambda_.1
$region0: #{_lambda_.1}
  #allocation0 [shape = 'u32[]', space=smem, size = 0x4, offset = 0x4, fixed_abs, tag = 'smem constant byte address 0x4 - core index']
  #allocation1 [shape = 'u32[144,128]{1,0:T(1,128)}', space=vmem, size = 0x12000, scoped, tag = 'internal scratch']
  %s0 = inlined_call_operand.vmem [shape: f32[2,8,32], index: 0, kind: input, shape index: {}]
  %s1 = inlined_call_operand.vmem [shape: f32[2,8,32], index: 1, kind: input, shape index: {}]
  %s2 = inlined_call_operand.vmem [shape: f32[12,32,8], index: 2, kind: input, shape index: {}]
  %s3 = inlined_call_operand.vmem [shape: f32[12,1,8], index: 3, kind: input, shape index: {}]
  %s4 = inlined_call_operand.vmem [shape: f32[4,8,32], index: 4, kind: input, shape index: {}]
  %s5 = inlined_call_operand.vmem [shape: f32[1,32], index: 5, kind: input, shape index: {}]
  %s6 = inlined_call_operand.vmem [shape: f32[1,32], index: 6, kind: input, shape index: {}]
  %s7 = inlined_call_operand.vmem [shape: f32[1,32], index: 7, kind: input, shape index: {}]
  %s8 = inlined_call_operand.vmem [shape: f32[4,32,8], index: 8, kind: input, shape index: {}]
  %s9 = inlined_call_operand.vmem [shape: f32[4,1,8], index: 9, kind: input, shape index: {}]
  %s10 = inlined_call_operand.vmem [shape: f32[8,32,8], index: 10, kind: input, shape index: {}]
  %s11 = inlined_call_operand.vmem [shape: f32[8,1,8], index: 11, kind: input, shape index: {}]
  %s12 = inlined_call_operand.vmem [shape: f32[4,8,32], index: 12, kind: input, shape index: {}]
  %s13 = inlined_call_operand.vmem [shape: f32[1,32], index: 13, kind: input, shape index: {}]
  %s14 = inlined_call_operand.vmem [shape: f32[1,32], index: 14, kind: input, shape index: {}]
  %s15 = inlined_call_operand.vmem [shape: f32[1,32], index: 15, kind: input, shape index: {}]
  %s16 = inlined_call_operand.vmem [shape: f32[32,64], index: 16, kind: input, shape index: {}]
  %s17 = inlined_call_operand.vmem [shape: f32[1,64], index: 17, kind: input, shape index: {}]
  %s18 = inlined_call_operand.vmem [shape: f32[64,32], index: 18, kind: input, shape index: {}]
  %s19 = inlined_call_operand.vmem [shape: f32[1,32], index: 19, kind: input, shape index: {}]
  %s20 = inlined_call_operand.vmem [shape: f32[1,32], index: 20, kind: input, shape index: {}]
  %s21 = inlined_call_operand.vmem [shape: f32[1,32], index: 21, kind: input, shape index: {}]
  %s22 = inlined_call_operand.hbm [shape: f32[2,8,32], index: 22, kind: output, shape index: {}]
  %s23 = sld [smem:[#allocation0]]
  $region121: #{_lambda_.1} parent=0
    _
  %s25 = ssub.s32 1, %s23
  %s26 = scalar_select 0, %s25, %s23
  $region1: #{_lambda_.1} parent=0
    #allocation2 [shape = 'u8[8192]{0}', space=vmem, size = 0x2000, scoped, tag = 'output window, operand 0']
    #allocation3 [shape = 's32[2]{0}', space=sflag, size = 0x8, scoped, tag = 'scoped memory for _lambda_.1']
    %27 = vsyncpa [#allocation3], 0
    %s28 = scalar_lea.sflag [#allocation3], 1
    %29 = vsyncpa %s28, 0
    loop: start=0, step=1, limit=4
    $region2: #{_lambda_.1} parent=1 // loop_pre_header
      _
    $region3: #{_lambda_.1} parent=1 // loop_header
      %s31 = sphi 0, %s35
      %p32 = scmp.ge.s32.totalorder %s31, 4
      %s41 = sphi 0, %s43
      %s44 = sphi 0, %s41
      %s45 = sphi 0, %s44
      %s61 = sphi 0, %s45
      %s67 = sphi 0, %s69
      %s70 = sphi 0, %s67
      %s71 = sphi 0, %s70
      %s87 = sphi 0, %s71
      %s91 = sphi 0, %s91
      %s93 = sphi 0, %s91
      %s94 = sphi 0, %s93
      %s108 = sphi 0, %s94
      %s112 = sphi 0, %s112
      %s114 = sphi 0, %s112
      %s115 = sphi 0, %s114
      %s129 = sphi 0, %s115
      %s133 = sphi 0, %s133
      %s135 = sphi 0, %s133
      %s136 = sphi 0, %s135
      %s150 = sphi 0, %s136
      %s154 = sphi 0, %s154
      %s156 = sphi 0, %s154
      %s157 = sphi 0, %s156
      %s171 = sphi 0, %s157
      %s175 = sphi 0, %s175
      %s177 = sphi 0, %s175
      %s178 = sphi 0, %s177
      %s192 = sphi 0, %s178
      %s196 = sphi 0, %s196
      %s198 = sphi 0, %s196
      %s199 = sphi 0, %s198
      %s213 = sphi 0, %s199
      %s217 = sphi 0, %s217
      %s219 = sphi 0, %s217
      %s220 = sphi 0, %s219
      %s234 = sphi 0, %s220
      %s238 = sphi 0, %s238
      %s240 = sphi 0, %s238
      %s241 = sphi 0, %s240
      %s255 = sphi 0, %s241
      %s259 = sphi 0, %s259
      %s261 = sphi 0, %s259
      %s262 = sphi 0, %s261
      %s276 = sphi 0, %s262
      %s280 = sphi 0, %s280
      %s282 = sphi 0, %s280
      %s283 = sphi 0, %s282
      %s297 = sphi 0, %s283
      %s301 = sphi 0, %s301
      %s303 = sphi 0, %s301
      %s304 = sphi 0, %s303
      %s318 = sphi 0, %s304
      %s322 = sphi 0, %s322
      %s324 = sphi 0, %s322
      %s325 = sphi 0, %s324
      %s339 = sphi 0, %s325
      %s343 = sphi 0, %s343
      %s345 = sphi 0, %s343
      %s346 = sphi 0, %s345
      %s360 = sphi 0, %s346
      %s364 = sphi 0, %s364
      %s366 = sphi 0, %s364
      %s367 = sphi 0, %s366
      %s381 = sphi 0, %s367
      %s385 = sphi 0, %s385
      %s387 = sphi 0, %s385
      %s388 = sphi 0, %s387
      %s402 = sphi 0, %s388
      %s406 = sphi 0, %s406
      %s408 = sphi 0, %s406
      %s409 = sphi 0, %s408
      %s423 = sphi 0, %s409
      %s427 = sphi 0, %s427
      %s429 = sphi 0, %s427
      %s430 = sphi 0, %s429
      %s444 = sphi 0, %s430
      %s448 = sphi 0, %s448
      %s450 = sphi 0, %s448
      %s451 = sphi 0, %s450
      %s465 = sphi 0, %s451
      %s469 = sphi 0, %s469
      %s471 = sphi 0, %s469
      %s472 = sphi 0, %s471
      %s486 = sphi 0, %s472
      %s490 = sphi 0, %s490
      %s492 = sphi 0, %s490
      %s493 = sphi 0, %s492
      %s507 = sphi 0, %s493
      %s513 = sphi 0, %s515
      %s516 = sphi 0, %s513
      %s517 = sphi 0, %s516
      %s533 = sphi 0, %s517
    $region4: #{_lambda_.1} parent=1 // loop_header_branch
      %34 = sbr.rel (%p32) target = $region8
    $region5: #{_lambda_.1} parent=1 // loop_body
      %s36 = ssub.s32 %s31, 1
      %s37 = ssub.s32 %s31, 2
      %s38 = sadd.s32 %s31, 1
      %s39 = ssub.s32 %s31, %s38
      %p40 = scmp.eq.s32.totalorder %s39, 0
      %s42 = sadd.s32 %s41, 1
      %s43 = scalar_select %p40, %s41, %s42
      %p46 = pneg %p40
      %p47 = scmp.eq.s32.totalorder %s31, 1
      %p48 = por %p46, %p47
      %p49 = scmp.ne.s32.totalorder %s41, %s44
      %p50 = scmp.eq.s32.totalorder %s31, 0
      %p51 = por %p49, %p50
      %p52 = scmp.ne.s32.totalorder %s41, %s44
      %p53 = scmp.eq.s32.totalorder %s36, 1
      %p54 = por %p52, %p53
      %p55 = scmp.ne.s32.totalorder %s44, %s45
      %p56 = scmp.eq.s32.totalorder %s36, 0
      %p57 = por %p55, %p56
      %p58 = scmp.ne.s32.totalorder %s44, %s45
      %p59 = scmp.eq.s32.totalorder %s37, 1
      %p60 = por %p58, %p59
      %p62 = scmp.ne.s32.totalorder %s45, %s61
      %p63 = scmp.eq.s32.totalorder %s37, 0
      %p64 = por %p62, %p63
      %s65 = ssub.s32 %s31, %s38
      %p66 = scmp.eq.s32.totalorder %s65, 0
      %s68 = sadd.s32 %s67, 1
      %s69 = scalar_select %p66, %s67, %s68
      %p72 = pneg %p66
      %p73 = scmp.eq.s32.totalorder %s31, 1
      %p74 = por %p72, %p73
      %p75 = scmp.ne.s32.totalorder %s67, %s70
      %p76 = scmp.eq.s32.totalorder %s31, 0
      %p77 = por %p75, %p76
      %p78 = scmp.ne.s32.totalorder %s67, %s70
      %p79 = scmp.eq.s32.totalorder %s36, 1
      %p80 = por %p78, %p79
      %p81 = scmp.ne.s32.totalorder %s70, %s71
      %p82 = scmp.eq.s32.totalorder %s36, 0
      %p83 = por %p81, %p82
      %p84 = scmp.ne.s32.totalorder %s70, %s71
      %p85 = scmp.eq.s32.totalorder %s37, 1
      %p86 = por %p84, %p85
      %p88 = scmp.ne.s32.totalorder %s71, %s87
      %p89 = scmp.eq.s32.totalorder %s37, 0
      %p90 = por %p88, %p89
      %s92 = sadd.s32 %s91, 1
      %p95 = scmp.eq.s32.totalorder %s31, 1
      %p96 = scmp.ne.s32.totalorder %s91, %s93
      %p97 = scmp.eq.s32.totalorder %s31, 0
      %p98 = por %p96, %p97
      %p99 = scmp.ne.s32.totalorder %s91, %s93
      %p100 = scmp.eq.s32.totalorder %s36, 1
      %p101 = por %p99, %p100
      %p102 = scmp.ne.s32.totalorder %s93, %s94
      %p103 = scmp.eq.s32.totalorder %s36, 0
      %p104 = por %p102, %p103
      %p105 = scmp.ne.s32.totalorder %s93, %s94
      %p106 = scmp.eq.s32.totalorder %s37, 1
      %p107 = por %p105, %p106
      %p109 = scmp.ne.s32.totalorder %s94, %s108
      %p110 = scmp.eq.s32.totalorder %s37, 0
      %p111 = por %p109, %p110
      %s113 = sadd.s32 %s112, 1
      %p116 = scmp.eq.s32.totalorder %s31, 1
      %p117 = scmp.ne.s32.totalorder %s112, %s114
      %p118 = scmp.eq.s32.totalorder %s31, 0
      %p119 = por %p117, %p118
      %p120 = scmp.ne.s32.totalorder %s112, %s114
      %p121 = scmp.eq.s32.totalorder %s36, 1
      %p122 = por %p120, %p121
      %p123 = scmp.ne.s32.totalorder %s114, %s115
      %p124 = scmp.eq.s32.totalorder %s36, 0
      %p125 = por %p123, %p124
      %p126 = scmp.ne.s32.totalorder %s114, %s115
      %p127 = scmp.eq.s32.totalorder %s37, 1
      %p128 = por %p126, %p127
      %p130 = scmp.ne.s32.totalorder %s115, %s129
      %p131 = scmp.eq.s32.totalorder %s37, 0
      %p132 = por %p130, %p131
      %s134 = sadd.s32 %s133, 1
      %p137 = scmp.eq.s32.totalorder %s31, 1
      %p138 = scmp.ne.s32.totalorder %s133, %s135
      %p139 = scmp.eq.s32.totalorder %s31, 0
      %p140 = por %p138, %p139
      %p141 = scmp.ne.s32.totalorder %s133, %s135
      %p142 = scmp.eq.s32.totalorder %s36, 1
      %p143 = por %p141, %p142
      %p144 = scmp.ne.s32.totalorder %s135, %s136
      %p145 = scmp.eq.s32.totalorder %s36, 0
      %p146 = por %p144, %p145
      %p147 = scmp.ne.s32.totalorder %s135, %s136
      %p148 = scmp.eq.s32.totalorder %s37, 1
      %p149 = por %p147, %p148
      %p151 = scmp.ne.s32.totalorder %s136, %s150
      %p152 = scmp.eq.s32.totalorder %s37, 0
      %p153 = por %p151, %p152
      %s155 = sadd.s32 %s154, 1
      %p158 = scmp.eq.s32.totalorder %s31, 1
      %p159 = scmp.ne.s32.totalorder %s154, %s156
      %p160 = scmp.eq.s32.totalorder %s31, 0
      %p161 = por %p159, %p160
      %p162 = scmp.ne.s32.totalorder %s154, %s156
      %p163 = scmp.eq.s32.totalorder %s36, 1
      %p164 = por %p162, %p163
      %p165 = scmp.ne.s32.totalorder %s156, %s157
      %p166 = scmp.eq.s32.totalorder %s36, 0
      %p167 = por %p165, %p166
      %p168 = scmp.ne.s32.totalorder %s156, %s157
      %p169 = scmp.eq.s32.totalorder %s37, 1
      %p170 = por %p168, %p169
      %p172 = scmp.ne.s32.totalorder %s157, %s171
      %p173 = scmp.eq.s32.totalorder %s37, 0
      %p174 = por %p172, %p173
      %s176 = sadd.s32 %s175, 1
      %p179 = scmp.eq.s32.totalorder %s31, 1
      %p180 = scmp.ne.s32.totalorder %s175, %s177
      %p181 = scmp.eq.s32.totalorder %s31, 0
      %p182 = por %p180, %p181
      %p183 = scmp.ne.s32.totalorder %s175, %s177
      %p184 = scmp.eq.s32.totalorder %s36, 1
      %p185 = por %p183, %p184
      %p186 = scmp.ne.s32.totalorder %s177, %s178
      %p187 = scmp.eq.s32.totalorder %s36, 0
      %p188 = por %p186, %p187
      %p189 = scmp.ne.s32.totalorder %s177, %s178
      %p190 = scmp.eq.s32.totalorder %s37, 1
      %p191 = por %p189, %p190
      %p193 = scmp.ne.s32.totalorder %s178, %s192
      %p194 = scmp.eq.s32.totalorder %s37, 0
      %p195 = por %p193, %p194
      %s197 = sadd.s32 %s196, 1
      %p200 = scmp.eq.s32.totalorder %s31, 1
      %p201 = scmp.ne.s32.totalorder %s196, %s198
      %p202 = scmp.eq.s32.totalorder %s31, 0
      %p203 = por %p201, %p202
      %p204 = scmp.ne.s32.totalorder %s196, %s198
      %p205 = scmp.eq.s32.totalorder %s36, 1
      %p206 = por %p204, %p205
      %p207 = scmp.ne.s32.totalorder %s198, %s199
      %p208 = scmp.eq.s32.totalorder %s36, 0
      %p209 = por %p207, %p208
      %p210 = scmp.ne.s32.totalorder %s198, %s199
      %p211 = scmp.eq.s32.totalorder %s37, 1
      %p212 = por %p210, %p211
      %p214 = scmp.ne.s32.totalorder %s199, %s213
      %p215 = scmp.eq.s32.totalorder %s37, 0
      %p216 = por %p214, %p215
      %s218 = sadd.s32 %s217, 1
      %p221 = scmp.eq.s32.totalorder %s31, 1
      %p222 = scmp.ne.s32.totalorder %s217, %s219
      %p223 = scmp.eq.s32.totalorder %s31, 0
      %p224 = por %p222, %p223
      %p225 = scmp.ne.s32.totalorder %s217, %s219
      %p226 = scmp.eq.s32.totalorder %s36, 1
      %p227 = por %p225, %p226
      %p228 = scmp.ne.s32.totalorder %s219, %s220
      %p229 = scmp.eq.s32.totalorder %s36, 0
      %p230 = por %p228, %p229
      %p231 = scmp.ne.s32.totalorder %s219, %s220
      %p232 = scmp.eq.s32.totalorder %s37, 1
      %p233 = por %p231, %p232
      %p235 = scmp.ne.s32.totalorder %s220, %s234
      %p236 = scmp.eq.s32.totalorder %s37, 0
      %p237 = por %p235, %p236
      %s239 = sadd.s32 %s238, 1
      %p242 = scmp.eq.s32.totalorder %s31, 1
      %p243 = scmp.ne.s32.totalorder %s238, %s240
      %p244 = scmp.eq.s32.totalorder %s31, 0
      %p245 = por %p243, %p244
      %p246 = scmp.ne.s32.totalorder %s238, %s240
      %p247 = scmp.eq.s32.totalorder %s36, 1
      %p248 = por %p246, %p247
      %p249 = scmp.ne.s32.totalorder %s240, %s241
      %p250 = scmp.eq.s32.totalorder %s36, 0
      %p251 = por %p249, %p250
      %p252 = scmp.ne.s32.totalorder %s240, %s241
      %p253 = scmp.eq.s32.totalorder %s37, 1
      %p254 = por %p252, %p253
      %p256 = scmp.ne.s32.totalorder %s241, %s255
      %p257 = scmp.eq.s32.totalorder %s37, 0
      %p258 = por %p256, %p257
      %s260 = sadd.s32 %s259, 1
      %p263 = scmp.eq.s32.totalorder %s31, 1
      %p264 = scmp.ne.s32.totalorder %s259, %s261
      %p265 = scmp.eq.s32.totalorder %s31, 0
      %p266 = por %p264, %p265
      %p267 = scmp.ne.s32.totalorder %s259, %s261
      %p268 = scmp.eq.s32.totalorder %s36, 1
      %p269 = por %p267, %p268
      %p270 = scmp.ne.s32.totalorder %s261, %s262
      %p271 = scmp.eq.s32.totalorder %s36, 0
      %p272 = por %p270, %p271
      %p273 = scmp.ne.s32.totalorder %s261, %s262
      %p274 = scmp.eq.s32.totalorder %s37, 1
      %p275 = por %p273, %p274
      %p277 = scmp.ne.s32.totalorder %s262, %s276
      %p278 = scmp.eq.s32.totalorder %s37, 0
      %p279 = por %p277, %p278
      %s281 = sadd.s32 %s280, 1
      %p284 = scmp.eq.s32.totalorder %s31, 1
      %p285 = scmp.ne.s32.totalorder %s280, %s282
      %p286 = scmp.eq.s32.totalorder %s31, 0
      %p287 = por %p285, %p286
      %p288 = scmp.ne.s32.totalorder %s280, %s282
      %p289 = scmp.eq.s32.totalorder %s36, 1
      %p290 = por %p288, %p289
      %p291 = scmp.ne.s32.totalorder %s282, %s283
      %p292 = scmp.eq.s32.totalorder %s36, 0
      %p293 = por %p291, %p292
      %p294 = scmp.ne.s32.totalorder %s282, %s283
      %p295 = scmp.eq.s32.totalorder %s37, 1
      %p296 = por %p294, %p295
      %p298 = scmp.ne.s32.totalorder %s283, %s297
      %p299 = scmp.eq.s32.totalorder %s37, 0
      %p300 = por %p298, %p299
      %s302 = sadd.s32 %s301, 1
      %p305 = scmp.eq.s32.totalorder %s31, 1
      %p306 = scmp.ne.s32.totalorder %s301, %s303
      %p307 = scmp.eq.s32.totalorder %s31, 0
      %p308 = por %p306, %p307
      %p309 = scmp.ne.s32.totalorder %s301, %s303
      %p310 = scmp.eq.s32.totalorder %s36, 1
      %p311 = por %p309, %p310
      %p312 = scmp.ne.s32.totalorder %s303, %s304
      %p313 = scmp.eq.s32.totalorder %s36, 0
      %p314 = por %p312, %p313
      %p315 = scmp.ne.s32.totalorder %s303, %s304
      %p316 = scmp.eq.s32.totalorder %s37, 1
      %p317 = por %p315, %p316
      %p319 = scmp.ne.s32.totalorder %s304, %s318
      %p320 = scmp.eq.s32.totalorder %s37, 0
      %p321 = por %p319, %p320
      %s323 = sadd.s32 %s322, 1
      %p326 = scmp.eq.s32.totalorder %s31, 1
      %p327 = scmp.ne.s32.totalorder %s322, %s324
      %p328 = scmp.eq.s32.totalorder %s31, 0
      %p329 = por %p327, %p328
      %p330 = scmp.ne.s32.totalorder %s322, %s324
      %p331 = scmp.eq.s32.totalorder %s36, 1
      %p332 = por %p330, %p331
      %p333 = scmp.ne.s32.totalorder %s324, %s325
      %p334 = scmp.eq.s32.totalorder %s36, 0
      %p335 = por %p333, %p334
      %p336 = scmp.ne.s32.totalorder %s324, %s325
      %p337 = scmp.eq.s32.totalorder %s37, 1
      %p338 = por %p336, %p337
      %p340 = scmp.ne.s32.totalorder %s325, %s339
      %p341 = scmp.eq.s32.totalorder %s37, 0
      %p342 = por %p340, %p341
      %s344 = sadd.s32 %s343, 1
      %p347 = scmp.eq.s32.totalorder %s31, 1
      %p348 = scmp.ne.s32.totalorder %s343, %s345
      %p349 = scmp.eq.s32.totalorder %s31, 0
      %p350 = por %p348, %p349
      %p351 = scmp.ne.s32.totalorder %s343, %s345
      %p352 = scmp.eq.s32.totalorder %s36, 1
      %p353 = por %p351, %p352
      %p354 = scmp.ne.s32.totalorder %s345, %s346
      %p355 = scmp.eq.s32.totalorder %s36, 0
      %p356 = por %p354, %p355
      %p357 = scmp.ne.s32.totalorder %s345, %s346
      %p358 = scmp.eq.s32.totalorder %s37, 1
      %p359 = por %p357, %p358
      %p361 = scmp.ne.s32.totalorder %s346, %s360
      %p362 = scmp.eq.s32.totalorder %s37, 0
      %p363 = por %p361, %p362
      %s365 = sadd.s32 %s364, 1
      %p368 = scmp.eq.s32.totalorder %s31, 1
      %p369 = scmp.ne.s32.totalorder %s364, %s366
      %p370 = scmp.eq.s32.totalorder %s31, 0
      %p371 = por %p369, %p370
      %p372 = scmp.ne.s32.totalorder %s364, %s366
      %p373 = scmp.eq.s32.totalorder %s36, 1
      %p374 = por %p372, %p373
      %p375 = scmp.ne.s32.totalorder %s366, %s367
      %p376 = scmp.eq.s32.totalorder %s36, 0
      %p377 = por %p375, %p376
      %p378 = scmp.ne.s32.totalorder %s366, %s367
      %p379 = scmp.eq.s32.totalorder %s37, 1
      %p380 = por %p378, %p379
      %p382 = scmp.ne.s32.totalorder %s367, %s381
      %p383 = scmp.eq.s32.totalorder %s37, 0
      %p384 = por %p382, %p383
      %s386 = sadd.s32 %s385, 1
      %p389 = scmp.eq.s32.totalorder %s31, 1
      %p390 = scmp.ne.s32.totalorder %s385, %s387
      %p391 = scmp.eq.s32.totalorder %s31, 0
      %p392 = por %p390, %p391
      %p393 = scmp.ne.s32.totalorder %s385, %s387
      %p394 = scmp.eq.s32.totalorder %s36, 1
      %p395 = por %p393, %p394
      %p396 = scmp.ne.s32.totalorder %s387, %s388
      %p397 = scmp.eq.s32.totalorder %s36, 0
      %p398 = por %p396, %p397
      %p399 = scmp.ne.s32.totalorder %s387, %s388
      %p400 = scmp.eq.s32.totalorder %s37, 1
      %p401 = por %p399, %p400
      %p403 = scmp.ne.s32.totalorder %s388, %s402
      %p404 = scmp.eq.s32.totalorder %s37, 0
      %p405 = por %p403, %p404
      %s407 = sadd.s32 %s406, 1
      %p410 = scmp.eq.s32.totalorder %s31, 1
      %p411 = scmp.ne.s32.totalorder %s406, %s408
      %p412 = scmp.eq.s32.totalorder %s31, 0
      %p413 = por %p411, %p412
      %p414 = scmp.ne.s32.totalorder %s406, %s408
      %p415 = scmp.eq.s32.totalorder %s36, 1
      %p416 = por %p414, %p415
      %p417 = scmp.ne.s32.totalorder %s408, %s409
      %p418 = scmp.eq.s32.totalorder %s36, 0
      %p419 = por %p417, %p418
      %p420 = scmp.ne.s32.totalorder %s408, %s409
      %p421 = scmp.eq.s32.totalorder %s37, 1
      %p422 = por %p420, %p421
      %p424 = scmp.ne.s32.totalorder %s409, %s423
      %p425 = scmp.eq.s32.totalorder %s37, 0
      %p426 = por %p424, %p425
      %s428 = sadd.s32 %s427, 1
      %p431 = scmp.eq.s32.totalorder %s31, 1
      %p432 = scmp.ne.s32.totalorder %s427, %s429
      %p433 = scmp.eq.s32.totalorder %s31, 0
      %p434 = por %p432, %p433
      %p435 = scmp.ne.s32.totalorder %s427, %s429
      %p436 = scmp.eq.s32.totalorder %s36, 1
      %p437 = por %p435, %p436
      %p438 = scmp.ne.s32.totalorder %s429, %s430
      %p439 = scmp.eq.s32.totalorder %s36, 0
      %p440 = por %p438, %p439
      %p441 = scmp.ne.s32.totalorder %s429, %s430
      %p442 = scmp.eq.s32.totalorder %s37, 1
      %p443 = por %p441, %p442
      %p445 = scmp.ne.s32.totalorder %s430, %s444
      %p446 = scmp.eq.s32.totalorder %s37, 0
      %p447 = por %p445, %p446
      %s449 = sadd.s32 %s448, 1
      %p452 = scmp.eq.s32.totalorder %s31, 1
      %p453 = scmp.ne.s32.totalorder %s448, %s450
      %p454 = scmp.eq.s32.totalorder %s31, 0
      %p455 = por %p453, %p454
      %p456 = scmp.ne.s32.totalorder %s448, %s450
      %p457 = scmp.eq.s32.totalorder %s36, 1
      %p458 = por %p456, %p457
      %p459 = scmp.ne.s32.totalorder %s450, %s451
      %p460 = scmp.eq.s32.totalorder %s36, 0
      %p461 = por %p459, %p460
      %p462 = scmp.ne.s32.totalorder %s450, %s451
      %p463 = scmp.eq.s32.totalorder %s37, 1
      %p464 = por %p462, %p463
      %p466 = scmp.ne.s32.totalorder %s451, %s465
      %p467 = scmp.eq.s32.totalorder %s37, 0
      %p468 = por %p466, %p467
      %s470 = sadd.s32 %s469, 1
      %p473 = scmp.eq.s32.totalorder %s31, 1
      %p474 = scmp.ne.s32.totalorder %s469, %s471
      %p475 = scmp.eq.s32.totalorder %s31, 0
      %p476 = por %p474, %p475
      %p477 = scmp.ne.s32.totalorder %s469, %s471
      %p478 = scmp.eq.s32.totalorder %s36, 1
      %p479 = por %p477, %p478
      %p480 = scmp.ne.s32.totalorder %s471, %s472
      %p481 = scmp.eq.s32.totalorder %s36, 0
      %p482 = por %p480, %p481
      %p483 = scmp.ne.s32.totalorder %s471, %s472
      %p484 = scmp.eq.s32.totalorder %s37, 1
      %p485 = por %p483, %p484
      %p487 = scmp.ne.s32.totalorder %s472, %s486
      %p488 = scmp.eq.s32.totalorder %s37, 0
      %p489 = por %p487, %p488
      %s491 = sadd.s32 %s490, 1
      %p494 = scmp.eq.s32.totalorder %s31, 1
      %p495 = scmp.ne.s32.totalorder %s490, %s492
      %p496 = scmp.eq.s32.totalorder %s31, 0
      %p497 = por %p495, %p496
      %p498 = scmp.ne.s32.totalorder %s490, %s492
      %p499 = scmp.eq.s32.totalorder %s36, 1
      %p500 = por %p498, %p499
      %p501 = scmp.ne.s32.totalorder %s492, %s493
      %p502 = scmp.eq.s32.totalorder %s36, 0
      %p503 = por %p501, %p502
      %p504 = scmp.ne.s32.totalorder %s492, %s493
      %p505 = scmp.eq.s32.totalorder %s37, 1
      %p506 = por %p504, %p505
      %p508 = scmp.ne.s32.totalorder %s493, %s507
      %p509 = scmp.eq.s32.totalorder %s37, 0
      %p510 = por %p508, %p509
      %s511 = ssub.s32 %s31, %s38
      %p512 = scmp.eq.s32.totalorder %s511, 0
      %s514 = sadd.s32 %s513, 1
      %s515 = scalar_select %p512, %s513, %s514
      %p518 = pneg %p512
      %p519 = scmp.eq.s32.totalorder %s31, 1
      %p520 = por %p518, %p519
      %p521 = scmp.ne.s32.totalorder %s513, %s516
      %p522 = scmp.eq.s32.totalorder %s31, 0
      %p523 = por %p521, %p522
      %p524 = scmp.ne.s32.totalorder %s513, %s516
      %p525 = scmp.eq.s32.totalorder %s36, 1
      %p526 = por %p524, %p525
      %p527 = scmp.ne.s32.totalorder %s516, %s517
      %p528 = scmp.eq.s32.totalorder %s36, 0
      %p529 = por %p527, %p528
      %p530 = scmp.ne.s32.totalorder %s516, %s517
      %p531 = scmp.eq.s32.totalorder %s37, 1
      %p532 = por %p530, %p531
      %p534 = scmp.ne.s32.totalorder %s517, %s533
      %p535 = scmp.eq.s32.totalorder %s37, 0
      %p536 = por %p534, %p535
      %p537 = scmp.le.s32.totalorder 1, %s31
      %p538 = scmp.lt.s32.totalorder %s31, 3
      %p539 = pnand %p537, %p538
      %p540 = pneg %p539
      // Predicated region
      $region9: #{_lambda_.1} parent=5 // pred_check
        _
      $region10: #{_lambda_.1} parent=5 // pred_check_branch
        %542 = sbr.rel (%p539) target = $region12
      $region11: #{_lambda_.1} parent=5 // pred_region
        %s543 = ssub.s32 %s31, 1
        // Predicated region
        $region13: #{_lambda_.1} parent=11 // pred_check
          %p544 = pneg %p104
        $region14: #{_lambda_.1} parent=11 // pred_check_branch
          %546 = sbr.rel (%p544) target = $region16
        $region15: #{_lambda_.1} parent=11 // pred_region
          _
        $region16: #{_lambda_.1} parent=11 // pred_fallthru
          _
        // Predicated region
        $region17: #{_lambda_.1} parent=11 // pred_check
          %p547 = pneg %p125
        $region18: #{_lambda_.1} parent=11 // pred_check_branch
          %549 = sbr.rel (%p547) target = $region20
        $region19: #{_lambda_.1} parent=11 // pred_region
          _
        $region20: #{_lambda_.1} parent=11 // pred_fallthru
          _
        // Predicated region
        $region21: #{_lambda_.1} parent=11 // pred_check
          %p550 = pneg %p146
        $region22: #{_lambda_.1} parent=11 // pred_check_branch
          %552 = sbr.rel (%p550) target = $region24
        $region23: #{_lambda_.1} parent=11 // pred_region
          _
        $region24: #{_lambda_.1} parent=11 // pred_fallthru
          _
        // Predicated region
        $region25: #{_lambda_.1} parent=11 // pred_check
          %p553 = pneg %p167
        $region26: #{_lambda_.1} parent=11 // pred_check_branch
          %555 = sbr.rel (%p553) target = $region28
        $region27: #{_lambda_.1} parent=11 // pred_region
          _
        $region28: #{_lambda_.1} parent=11 // pred_fallthru
          _
        // Predicated region
        $region29: #{_lambda_.1} parent=11 // pred_check
          %p556 = pneg %p188
        $region30: #{_lambda_.1} parent=11 // pred_check_branch
          %558 = sbr.rel (%p556) target = $region32
        $region31: #{_lambda_.1} parent=11 // pred_region
          _
        $region32: #{_lambda_.1} parent=11 // pred_fallthru
          _
        // Predicated region
        $region33: #{_lambda_.1} parent=11 // pred_check
          %p559 = pneg %p209
        $region34: #{_lambda_.1} parent=11 // pred_check_branch
          %561 = sbr.rel (%p559) target = $region36
        $region35: #{_lambda_.1} parent=11 // pred_region
          _
        $region36: #{_lambda_.1} parent=11 // pred_fallthru
          _
        // Predicated region
        $region37: #{_lambda_.1} parent=11 // pred_check
          %p562 = pneg %p230
        $region38: #{_lambda_.1} parent=11 // pred_check_branch
          %564 = sbr.rel (%p562) target = $region40
        $region39: #{_lambda_.1} parent=11 // pred_region
          _
        $region40: #{_lambda_.1} parent=11 // pred_fallthru
          _
        // Predicated region
        $region41: #{_lambda_.1} parent=11 // pred_check
          %p565 = pneg %p251
        $region42: #{_lambda_.1} parent=11 // pred_check_branch
          %567 = sbr.rel (%p565) target = $region44
        $region43: #{_lambda_.1} parent=11 // pred_region
          _
        $region44: #{_lambda_.1} parent=11 // pred_fallthru
          _
        // Predicated region
        $region45: #{_lambda_.1} parent=11 // pred_check
          %p568 = pneg %p272
        $region46: #{_lambda_.1} parent=11 // pred_check_branch
          %570 = sbr.rel (%p568) target = $region48
        $region47: #{_lambda_.1} parent=11 // pred_region
          _
        $region48: #{_lambda_.1} parent=11 // pred_fallthru
          _
        // Predicated region
        $region49: #{_lambda_.1} parent=11 // pred_check
          %p571 = pneg %p293
        $region50: #{_lambda_.1} parent=11 // pred_check_branch
          %573 = sbr.rel (%p571) target = $region52
        $region51: #{_lambda_.1} parent=11 // pred_region
          _
        $region52: #{_lambda_.1} parent=11 // pred_fallthru
          _
        // Predicated region
        $region53: #{_lambda_.1} parent=11 // pred_check
          %p574 = pneg %p314
        $region54: #{_lambda_.1} parent=11 // pred_check_branch
          %576 = sbr.rel (%p574) target = $region56
        $region55: #{_lambda_.1} parent=11 // pred_region
          _
        $region56: #{_lambda_.1} parent=11 // pred_fallthru
          _
        // Predicated region
        $region57: #{_lambda_.1} parent=11 // pred_check
          %p577 = pneg %p335
        $region58: #{_lambda_.1} parent=11 // pred_check_branch
          %579 = sbr.rel (%p577) target = $region60
        $region59: #{_lambda_.1} parent=11 // pred_region
          _
        $region60: #{_lambda_.1} parent=11 // pred_fallthru
          _
        // Predicated region
        $region61: #{_lambda_.1} parent=11 // pred_check
          %p580 = pneg %p356
        $region62: #{_lambda_.1} parent=11 // pred_check_branch
          %582 = sbr.rel (%p580) target = $region64
        $region63: #{_lambda_.1} parent=11 // pred_region
          _
        $region64: #{_lambda_.1} parent=11 // pred_fallthru
          _
        // Predicated region
        $region65: #{_lambda_.1} parent=11 // pred_check
          %p583 = pneg %p377
        $region66: #{_lambda_.1} parent=11 // pred_check_branch
          %585 = sbr.rel (%p583) target = $region68
        $region67: #{_lambda_.1} parent=11 // pred_region
          _
        $region68: #{_lambda_.1} parent=11 // pred_fallthru
          _
        // Predicated region
        $region69: #{_lambda_.1} parent=11 // pred_check
          %p586 = pneg %p398
        $region70: #{_lambda_.1} parent=11 // pred_check_branch
          %588 = sbr.rel (%p586) target = $region72
        $region71: #{_lambda_.1} parent=11 // pred_region
          _
        $region72: #{_lambda_.1} parent=11 // pred_fallthru
          _
        // Predicated region
        $region73: #{_lambda_.1} parent=11 // pred_check
          %p589 = pneg %p419
        $region74: #{_lambda_.1} parent=11 // pred_check_branch
          %591 = sbr.rel (%p589) target = $region76
        $region75: #{_lambda_.1} parent=11 // pred_region
          _
        $region76: #{_lambda_.1} parent=11 // pred_fallthru
          _
        // Predicated region
        $region77: #{_lambda_.1} parent=11 // pred_check
          %p592 = pneg %p440
        $region78: #{_lambda_.1} parent=11 // pred_check_branch
          %594 = sbr.rel (%p592) target = $region80
        $region79: #{_lambda_.1} parent=11 // pred_region
          _
        $region80: #{_lambda_.1} parent=11 // pred_fallthru
          _
        // Predicated region
        $region81: #{_lambda_.1} parent=11 // pred_check
          %p595 = pneg %p461
        $region82: #{_lambda_.1} parent=11 // pred_check_branch
          %597 = sbr.rel (%p595) target = $region84
        $region83: #{_lambda_.1} parent=11 // pred_region
          _
        $region84: #{_lambda_.1} parent=11 // pred_fallthru
          _
        // Predicated region
        $region85: #{_lambda_.1} parent=11 // pred_check
          %p598 = pneg %p482
        $region86: #{_lambda_.1} parent=11 // pred_check_branch
          %600 = sbr.rel (%p598) target = $region88
        $region87: #{_lambda_.1} parent=11 // pred_region
          _
        $region88: #{_lambda_.1} parent=11 // pred_fallthru
          _
        // Predicated region
        $region89: #{_lambda_.1} parent=11 // pred_check
          %p601 = pneg %p503
        $region90: #{_lambda_.1} parent=11 // pred_check_branch
          %603 = sbr.rel (%p601) target = $region92
        $region91: #{_lambda_.1} parent=11 // pred_region
          _
        $region92: #{_lambda_.1} parent=11 // pred_fallthru
          _
      $region12: #{_lambda_.1} parent=5 // pred_fallthru
        _
      %p604 = scmp.lt.s32.totalorder %s31, 2
      // Predicated region
      $region93: #{_lambda_.1} parent=5 // pred_check
        %p605 = pneg %p604
      $region94: #{_lambda_.1} parent=5 // pred_check_branch
        %607 = sbr.rel (%p605) target = $region96
      $region95: #{_lambda_.1} parent=5 // pred_region
        // Predicated region
        $region97: #{_lambda_.1} parent=95 // pred_check
          %p608 = pneg %p51
        $region98: #{_lambda_.1} parent=95 // pred_check_branch
          %610 = sbr.rel (%p608) target = $region100
        $region99: #{_lambda_.1} parent=95 // pred_region
          %p611 = scmp.lt.s32.totalorder %s31, 1
          %s612 = scalar_select %p611, %s31, 1
          %s613 = smul.addr %s612, 8
          %s614 = scalar_lea.vmem %s0, %s613
        $region100: #{_lambda_.1} parent=95 // pred_fallthru
          _
        // Predicated region
        $region101: #{_lambda_.1} parent=95 // pred_check
          %p615 = pneg %p77
        $region102: #{_lambda_.1} parent=95 // pred_check_branch
          %617 = sbr.rel (%p615) target = $region104
        $region103: #{_lambda_.1} parent=95 // pred_region
          %p618 = scmp.lt.s32.totalorder %s31, 1
          %s619 = scalar_select %p618, %s31, 1
          %s620 = smul.addr %s619, 8
          %s621 = scalar_lea.vmem %s1, %s620
        $region104: #{_lambda_.1} parent=95 // pred_fallthru
          _
      $region96: #{_lambda_.1} parent=5 // pred_fallthru
        _
      %p622 = scmp.le.s32.totalorder 1, %s31
      %p623 = scmp.lt.s32.totalorder %s31, 3
      %p624 = pnand %p622, %p623
      %p625 = pneg %p624
      // Predicated region
      $region105: #{_lambda_.1} parent=5 // pred_check
        _
      $region106: #{_lambda_.1} parent=5 // pred_check_branch
        %627 = sbr.rel (%p624) target = $region108
      $region107: #{_lambda_.1} parent=5 // pred_region
        %s628 = ssub.s32 %s31, 1
        %p629 = scmp.lt.s32.totalorder %s36, 1
        %s630 = scalar_select %p629, %s36, 1
        %s631 = smul.addr %s630, 8
        %s632 = scalar_lea.vmem %s0, %s631
        %p633 = pneg %p57
        %p634 = pneg %p54
        %p635 = scmp.lt.s32.totalorder %s36, 1
        %s636 = scalar_select %p635, %s36, 1
        %s637 = smul.addr %s636, 8
        %s638 = scalar_lea.vmem %s1, %s637
        %p639 = pneg %p83
        %p640 = pneg %p80
        %p641 = pneg %p104
        %p642 = pneg %p101
        %p643 = pneg %p125
        %p644 = pneg %p122
        %p645 = pneg %p146
        %p646 = pneg %p143
        %p647 = pneg %p167
        %p648 = pneg %p164
        %p649 = pneg %p188
        %p650 = pneg %p185
        %p651 = pneg %p209
        %p652 = pneg %p206
        %p653 = pneg %p230
        %p654 = pneg %p227
        %p655 = pneg %p251
        %p656 = pneg %p248
        %p657 = pneg %p272
        %p658 = pneg %p269
        %p659 = pneg %p293
        %p660 = pneg %p290
        %p661 = pneg %p314
        %p662 = pneg %p311
        %p663 = pneg %p335
        %p664 = pneg %p332
        %p665 = pneg %p356
        %p666 = pneg %p353
        %p667 = pneg %p377
        %p668 = pneg %p374
        %p669 = pneg %p398
        %p670 = pneg %p395
        %p671 = pneg %p419
        %p672 = pneg %p416
        %p673 = pneg %p440
        %p674 = pneg %p437
        %p675 = pneg %p461
        %p676 = pneg %p458
        %p677 = pneg %p482
        %p678 = pneg %p479
        %p679 = pneg %p503
        %p680 = pneg %p500
        %p681 = pneg %p529
        %p682 = pneg %p526
        %s683 = sand.u32 %s516, 1
        %s684 = scalar_lea.sflag [#allocation3], %s683
        %s685 = sand.u32 %s516, 1
        %s686 = smul.addr %s685, 8
        %s687 = scalar_lea.vmem [#allocation2], %s686
        %p688 = scmp.lt.s32.totalorder %s36, 1
        %s689 = scalar_select %p688, %s36, 1
        %s690 = smul.addr %s689, 8
        %s691 = scalar_lea.vmem %s0, %s690
        %p692 = scmp.lt.s32.totalorder %s36, 1
        %s693 = scalar_select %p692, %s36, 1
        %s694 = smul.addr %s693, 8
        %s695 = scalar_lea.vmem %s1, %s694
        %v696 = vld [vmem:[%s691] sm:$0xff]
        %v697 = vld [vmem:[%s695] sm:$0xff]
        %v698 = vld [vmem:[%s2] sm:$0xff]
        %v699 = vld [vmem:[%s2 + $0x8] sm:$0xff]
        %v700 = vld [vmem:[%s2 + $0x10] sm:$0xff]
        %v701 = vld [vmem:[%s2 + $0x18] sm:$0xff]
        %v702 = vld [vmem:[%s2 + $0x20] sm:$0xff]
        %v703 = vld [vmem:[%s2 + $0x28] sm:$0xff]
        %v704 = vld [vmem:[%s2 + $0x30] sm:$0xff]
        %v705 = vld [vmem:[%s2 + $0x38] sm:$0xff]
        %v706 = vld [vmem:[%s2 + $0x40] sm:$0xff]
        %v707 = vld [vmem:[%s2 + $0x48] sm:$0xff]
        %v708 = vld [vmem:[%s2 + $0x50] sm:$0xff]
        %v709 = vld [vmem:[%s2 + $0x58] sm:$0xff]
        %v710 = vld [vmem:[%s2 + $0x60] sm:$0xff]
        %v711 = vld [vmem:[%s2 + $0x68] sm:$0xff]
        %v712 = vld [vmem:[%s2 + $0x70] sm:$0xff]
        %v713 = vld [vmem:[%s2 + $0x78] sm:$0xff]
        %v714 = vld [vmem:[%s2 + $0x80] sm:$0xff]
        %v715 = vld [vmem:[%s2 + $0x88] sm:$0xff]
        %v716 = vld [vmem:[%s2 + $0x90] sm:$0xff]
        %v717 = vld [vmem:[%s2 + $0x98] sm:$0xff]
        %v718 = vld [vmem:[%s2 + $0xa0] sm:$0xff]
        %v719 = vld [vmem:[%s2 + $0xa8] sm:$0xff]
        %v720 = vld [vmem:[%s2 + $0xb0] sm:$0xff]
        %v721 = vld [vmem:[%s2 + $0xb8] sm:$0xff]
        %v722 = vld [vmem:[%s2 + $0xc0] sm:$0xff]
        %v723 = vld [vmem:[%s2 + $0xc8] sm:$0xff]
        %v724 = vld [vmem:[%s2 + $0xd0] sm:$0xff]
        %v725 = vld [vmem:[%s2 + $0xd8] sm:$0xff]
        %v726 = vld [vmem:[%s2 + $0xe0] sm:$0xff]
        %v727 = vld [vmem:[%s2 + $0xe8] sm:$0xff]
        %v728 = vld [vmem:[%s2 + $0xf0] sm:$0xff]
        %v729 = vld [vmem:[%s2 + $0xf8] sm:$0xff]
        %v730 = vld [vmem:[%s2 + $0x100] sm:$0xff]
        %v731 = vld [vmem:[%s2 + $0x108] sm:$0xff]
        %v732 = vld [vmem:[%s2 + $0x110] sm:$0xff]
        %v733 = vld [vmem:[%s2 + $0x118] sm:$0xff]
        %v734 = vld [vmem:[%s2 + $0x120] sm:$0xff]
        %v735 = vld [vmem:[%s2 + $0x128] sm:$0xff]
        %v736 = vld [vmem:[%s2 + $0x130] sm:$0xff]
        %v737 = vld [vmem:[%s2 + $0x138] sm:$0xff]
        %v738 = vld [vmem:[%s2 + $0x140] sm:$0xff]
        %v739 = vld [vmem:[%s2 + $0x148] sm:$0xff]
        %v740 = vld [vmem:[%s2 + $0x150] sm:$0xff]
        %v741 = vld [vmem:[%s2 + $0x158] sm:$0xff]
        %v742 = vld [vmem:[%s2 + $0x160] sm:$0xff]
        %v743 = vld [vmem:[%s2 + $0x168] sm:$0xff]
        %v744 = vld [vmem:[%s2 + $0x170] sm:$0xff]
        %v745 = vld [vmem:[%s2 + $0x178] sm:$0xff]
        %v746 = vld [vmem:[%s3] sm:$0x1]
        %v747 = vld [vmem:[%s3 + $0x1] sm:$0x1]
        %v748 = vld [vmem:[%s3 + $0x2] sm:$0x1]
        %v749 = vld [vmem:[%s3 + $0x3] sm:$0x1]
        %v750 = vld [vmem:[%s3 + $0x4] sm:$0x1]
        %v751 = vld [vmem:[%s3 + $0x5] sm:$0x1]
        %v752 = vld [vmem:[%s3 + $0x6] sm:$0x1]
        %v753 = vld [vmem:[%s3 + $0x7] sm:$0x1]
        %v754 = vld [vmem:[%s3 + $0x8] sm:$0x1]
        %v755 = vld [vmem:[%s3 + $0x9] sm:$0x1]
        %v756 = vld [vmem:[%s3 + $0xa] sm:$0x1]
        %v757 = vld [vmem:[%s3 + $0xb] sm:$0x1]
        %v770 = vlaneseq
        %v771 = vshrl.u32 %v770, 7
        %v772 = vsub.s32 0, %v771
        %v773 = vrot.slane %v746, %v772
        %v774 = vlaneseq
        %v775 = vshrl.u32 %v774, 7
        %v776 = vsub.s32 0, %v775
        %v777 = vrot.slane %v747, %v776
        %v778 = vlaneseq
        %v779 = vshrl.u32 %v778, 7
        %v780 = vsub.s32 0, %v779
        %v781 = vrot.slane %v748, %v780
        %v782 = vlaneseq
        %v783 = vshrl.u32 %v782, 7
        %v784 = vsub.s32 0, %v783
        %v785 = vrot.slane %v749, %v784
        %v786 = vlaneseq
        %v787 = vshrl.u32 %v786, 7
        %v788 = vsub.s32 0, %v787
        %v789 = vrot.slane %v750, %v788
        %v790 = vlaneseq
        %v791 = vshrl.u32 %v790, 7
        %v792 = vsub.s32 0, %v791
        %v793 = vrot.slane %v751, %v792
        %v794 = vlaneseq
        %v795 = vshrl.u32 %v794, 7
        %v796 = vsub.s32 0, %v795
        %v797 = vrot.slane %v752, %v796
        %v798 = vlaneseq
        %v799 = vshrl.u32 %v798, 7
        %v800 = vsub.s32 0, %v799
        %v801 = vrot.slane %v753, %v800
        %v802 = vlaneseq
        %v803 = vshrl.u32 %v802, 7
        %v804 = vsub.s32 0, %v803
        %v805 = vrot.slane %v754, %v804
        %v806 = vlaneseq
        %v807 = vshrl.u32 %v806, 7
        %v808 = vsub.s32 0, %v807
        %v809 = vrot.slane %v755, %v808
        %v810 = vlaneseq
        %v811 = vshrl.u32 %v810, 7
        %v812 = vsub.s32 0, %v811
        %v813 = vrot.slane %v756, %v812
        %v814 = vlaneseq
        %v815 = vshrl.u32 %v814, 7
        %v816 = vsub.s32 0, %v815
        %v817 = vrot.slane %v757, %v816
        %vm830 = vcmask 261120
        %v832 = vsel %vm830, %v696, 0
        %834 = vmatprep.subr.mxu0 0.0
        %835 = vmatpush1.msra.mxu0 %v698
        %836 = vmatprep.subr.mxu0 0.0
        %837 = vmatpush1.msra.mxu0 %v699
        %838 = vmatprep.subr.mxu0 0.0
        %839 = vmatpush1.msra.mxu0 %v700
        %840 = vmatprep.subr.mxu0 0.0
        %841 = vmatpush1.msra.mxu0 %v701
        %842 = vmatprep.subr.mxu0 0.0
        %843 = vmatpush1.msra.mxu0 0.0
        %844 = vmatprep.subr.mxu0 0.0
        %845 = vmatpush1.msra.mxu0 0.0
        %846 = vmatprep.subr.mxu0 0.0
        %847 = vmatpush1.msra.mxu0 0.0
        %848 = vmatprep.subr.mxu0 0.0
        %849 = vmatpush1.msra.mxu0 0.0
        %850 = vmatprep.subr.mxu0 0.0
        %851 = vmatpush1.msra.mxu0 0.0
        %852 = vmatprep.subr.mxu0 0.0
        %853 = vmatpush1.msra.mxu0 0.0
        %854 = vmatprep.subr.mxu0 0.0
        %855 = vmatpush1.msra.mxu0 0.0
        %856 = vmatprep.subr.mxu0 0.0
        %857 = vmatpush1.msra.mxu0 0.0
        %858 = vmatprep.subr.mxu0 0.0
        %859 = vmatpush1.msra.mxu0 0.0
        %860 = vmatprep.subr.mxu0 0.0
        %861 = vmatpush1.msra.mxu0 0.0
        %862 = vmatprep.subr.mxu0 0.0
        %863 = vmatpush1.msra.mxu0 0.0
        %864 = vmatprep.subr.mxu0 0.0
        %865 = vmatpush1.msra.mxu0 0.0
        %866 = vmatprep.subr.mxu0 0.0
        %867 = vmatpush1.msra.mxu0 0.0
        %868 = vmatprep.subr.mxu0 0.0
        %869 = vmatpush1.msra.mxu0 0.0
        %870 = vmatprep.subr.mxu0 0.0
        %871 = vmatpush1.msra.mxu0 0.0
        %872 = vmatprep.subr.mxu0 0.0
        %873 = vmatpush1.msra.mxu0 0.0
        %874 = vmatprep.subr.mxu0 0.0
        %875 = vmatpush1.msra.mxu0 0.0
        %876 = vmatprep.subr.mxu0 0.0
        %877 = vmatpush1.msra.mxu0 0.0
        %878 = vmatprep.subr.mxu0 0.0
        %879 = vmatpush1.msra.mxu0 0.0
        %880 = vmatprep.subr.mxu0 0.0
        %881 = vmatpush1.msra.mxu0 0.0
        %882 = vmatprep.subr.mxu0 0.0
        %883 = vmatpush1.msra.mxu0 0.0
        %884 = vmatprep.subr.mxu0 0.0
        %885 = vmatpush1.msra.mxu0 0.0
        %886 = vmatprep.subr.mxu0 0.0
        %887 = vmatpush1.msra.mxu0 0.0
        %888 = vmatprep.subr.mxu0 0.0
        %889 = vmatpush1.msra.mxu0 0.0
        %890 = vmatprep.subr.mxu0 0.0
        %891 = vmatpush1.msra.mxu0 0.0
        %892 = vmatprep.subr.mxu0 0.0
        %893 = vmatpush1.msra.mxu0 0.0
        %894 = vmatprep.subr.mxu0 0.0
        %895 = vmatpush1.msra.mxu0 0.0
        %896 = vmatprep.subr.mxu0 0.0
        %897 = vmatpush1.msra.mxu0 0.0
        %898 = vmatprep.mubr.f32.mxu0 0.0
        %899 = vmatmul.mubr.f32.gmra.mrb[0].mxu0 %v832
        %v900 = vpop.f32.mrb[0].mxu0
        %v901 = vadd.f32 %v773, %v900
        %v902 = vpop.f32.mrb[0].mxu0
        %903 = vdwg.mxu0
        %904 = vmatprep.subr.mxu0 0.0
        %905 = vmatpush1.msra.mxu0 %v702
        %906 = vmatprep.subr.mxu0 0.0
        %907 = vmatpush1.msra.mxu0 %v703
        %908 = vmatprep.subr.mxu0 0.0
        %909 = vmatpush1.msra.mxu0 %v704
        %910 = vmatprep.subr.mxu0 0.0
        %911 = vmatpush1.msra.mxu0 %v705
        %912 = vmatprep.subr.mxu0 0.0
        %913 = vmatpush1.msra.mxu0 0.0
        %914 = vmatprep.subr.mxu0 0.0
        %915 = vmatpush1.msra.mxu0 0.0
        %916 = vmatprep.subr.mxu0 0.0
        %917 = vmatpush1.msra.mxu0 0.0
        %918 = vmatprep.subr.mxu0 0.0
        %919 = vmatpush1.msra.mxu0 0.0
        %920 = vmatprep.subr.mxu0 0.0
        %921 = vmatpush1.msra.mxu0 0.0
        %922 = vmatprep.subr.mxu0 0.0
        %923 = vmatpush1.msra.mxu0 0.0
        %924 = vmatprep.subr.mxu0 0.0
        %925 = vmatpush1.msra.mxu0 0.0
        %926 = vmatprep.subr.mxu0 0.0
        %927 = vmatpush1.msra.mxu0 0.0
        %928 = vmatprep.subr.mxu0 0.0
        %929 = vmatpush1.msra.mxu0 0.0
        %930 = vmatprep.subr.mxu0 0.0
        %931 = vmatpush1.msra.mxu0 0.0
        %932 = vmatprep.subr.mxu0 0.0
        %933 = vmatpush1.msra.mxu0 0.0
        %934 = vmatprep.subr.mxu0 0.0
        %935 = vmatpush1.msra.mxu0 0.0
        %936 = vmatprep.subr.mxu0 0.0
        %937 = vmatpush1.msra.mxu0 0.0
        %938 = vmatprep.subr.mxu0 0.0
        %939 = vmatpush1.msra.mxu0 0.0
        %940 = vmatprep.subr.mxu0 0.0
        %941 = vmatpush1.msra.mxu0 0.0
        %942 = vmatprep.subr.mxu0 0.0
        %943 = vmatpush1.msra.mxu0 0.0
        %944 = vmatprep.subr.mxu0 0.0
        %945 = vmatpush1.msra.mxu0 0.0
        %946 = vmatprep.subr.mxu0 0.0
        %947 = vmatpush1.msra.mxu0 0.0
        %948 = vmatprep.subr.mxu0 0.0
        %949 = vmatpush1.msra.mxu0 0.0
        %950 = vmatprep.subr.mxu0 0.0
        %951 = vmatpush1.msra.mxu0 0.0
        %952 = vmatprep.subr.mxu0 0.0
        %953 = vmatpush1.msra.mxu0 0.0
        %954 = vmatprep.subr.mxu0 0.0
        %955 = vmatpush1.msra.mxu0 0.0
        %956 = vmatprep.subr.mxu0 0.0
        %957 = vmatpush1.msra.mxu0 0.0
        %958 = vmatprep.subr.mxu0 0.0
        %959 = vmatpush1.msra.mxu0 0.0
        %960 = vmatprep.subr.mxu0 0.0
        %961 = vmatpush1.msra.mxu0 0.0
        %962 = vmatprep.subr.mxu0 0.0
        %963 = vmatpush1.msra.mxu0 0.0
        %964 = vmatprep.subr.mxu0 0.0
        %965 = vmatpush1.msra.mxu0 0.0
        %966 = vmatprep.subr.mxu0 0.0
        %967 = vmatpush1.msra.mxu0 0.0
        %968 = vmatprep.mubr.f32.mxu0 0.0
        %969 = vmatmul.mubr.f32.gmra.mrb[0].mxu0 %v832
        %v970 = vpop.f32.mrb[0].mxu0
        %v971 = vadd.f32 %v777, %v970
        %v972 = vpop.f32.mrb[0].mxu0
        %973 = vdwg.mxu0
        %974 = vmatprep.subr.mxu0 0.0
        %975 = vmatpush1.msra.mxu0 %v706
        %976 = vmatprep.subr.mxu0 0.0
        %977 = vmatpush1.msra.mxu0 %v707
        %978 = vmatprep.subr.mxu0 0.0
        %979 = vmatpush1.msra.mxu0 %v708
        %980 = vmatprep.subr.mxu0 0.0
        %981 = vmatpush1.msra.mxu0 %v709
        %982 = vmatprep.subr.mxu0 0.0
        %983 = vmatpush1.msra.mxu0 0.0
        %984 = vmatprep.subr.mxu0 0.0
        %985 = vmatpush1.msra.mxu0 0.0
        %986 = vmatprep.subr.mxu0 0.0
        %987 = vmatpush1.msra.mxu0 0.0
        %988 = vmatprep.subr.mxu0 0.0
        %989 = vmatpush1.msra.mxu0 0.0
        %990 = vmatprep.subr.mxu0 0.0
        %991 = vmatpush1.msra.mxu0 0.0
        %992 = vmatprep.subr.mxu0 0.0
        %993 = vmatpush1.msra.mxu0 0.0
        %994 = vmatprep.subr.mxu0 0.0
        %995 = vmatpush1.msra.mxu0 0.0
        %996 = vmatprep.subr.mxu0 0.0
        %997 = vmatpush1.msra.mxu0 0.0
        %998 = vmatprep.subr.mxu0 0.0
        %999 = vmatpush1.msra.mxu0 0.0
        %1000 = vmatprep.subr.mxu0 0.0
        %1001 = vmatpush1.msra.mxu0 0.0
        %1002 = vmatprep.subr.mxu0 0.0
        %1003 = vmatpush1.msra.mxu0 0.0
        %1004 = vmatprep.subr.mxu0 0.0
        %1005 = vmatpush1.msra.mxu0 0.0
        %1006 = vmatprep.subr.mxu0 0.0
        %1007 = vmatpush1.msra.mxu0 0.0
        %1008 = vmatprep.subr.mxu0 0.0
        %1009 = vmatpush1.msra.mxu0 0.0
        %1010 = vmatprep.subr.mxu0 0.0
        %1011 = vmatpush1.msra.mxu0 0.0
        %1012 = vmatprep.subr.mxu0 0.0
        %1013 = vmatpush1.msra.mxu0 0.0
        %1014 = vmatprep.subr.mxu0 0.0
        %1015 = vmatpush1.msra.mxu0 0.0
        %1016 = vmatprep.subr.mxu0 0.0
        %1017 = vmatpush1.msra.mxu0 0.0
        %1018 = vmatprep.subr.mxu0 0.0
        %1019 = vmatpush1.msra.mxu0 0.0
        %1020 = vmatprep.subr.mxu0 0.0
        %1021 = vmatpush1.msra.mxu0 0.0
        %1022 = vmatprep.subr.mxu0 0.0
        %1023 = vmatpush1.msra.mxu0 0.0
        %1024 = vmatprep.subr.mxu0 0.0
        %1025 = vmatpush1.msra.mxu0 0.0
        %1026 = vmatprep.subr.mxu0 0.0
        %1027 = vmatpush1.msra.mxu0 0.0
        %1028 = vmatprep.subr.mxu0 0.0
        %1029 = vmatpush1.msra.mxu0 0.0
        %1030 = vmatprep.subr.mxu0 0.0
        %1031 = vmatpush1.msra.mxu0 0.0
        %1032 = vmatprep.subr.mxu0 0.0
        %1033 = vmatpush1.msra.mxu0 0.0
        %1034 = vmatprep.subr.mxu0 0.0
        %1035 = vmatpush1.msra.mxu0 0.0
        %1036 = vmatprep.subr.mxu0 0.0
        %1037 = vmatpush1.msra.mxu0 0.0
        %1038 = vmatprep.mubr.f32.mxu0 0.0
        %1039 = vmatmul.mubr.f32.gmra.mrb[0].mxu0 %v832
        %v1040 = vpop.f32.mrb[0].mxu0
        %v1041 = vadd.f32 %v781, %v1040
        %v1042 = vpop.f32.mrb[0].mxu0
        %1043 = vdwg.mxu0
        %1044 = vmatprep.subr.mxu0 0.0
        %1045 = vmatpush1.msra.mxu0 %v710
        %1046 = vmatprep.subr.mxu0 0.0
        %1047 = vmatpush1.msra.mxu0 %v711
        %1048 = vmatprep.subr.mxu0 0.0
        %1049 = vmatpush1.msra.mxu0 %v712
        %1050 = vmatprep.subr.mxu0 0.0
        %1051 = vmatpush1.msra.mxu0 %v713
        %1052 = vmatprep.subr.mxu0 0.0
        %1053 = vmatpush1.msra.mxu0 0.0
        %1054 = vmatprep.subr.mxu0 0.0
        %1055 = vmatpush1.msra.mxu0 0.0
        %1056 = vmatprep.subr.mxu0 0.0
        %1057 = vmatpush1.msra.mxu0 0.0
        %1058 = vmatprep.subr.mxu0 0.0
        %1059 = vmatpush1.msra.mxu0 0.0
        %1060 = vmatprep.subr.mxu0 0.0
        %1061 = vmatpush1.msra.mxu0 0.0
        %1062 = vmatprep.subr.mxu0 0.0
        %1063 = vmatpush1.msra.mxu0 0.0
        %1064 = vmatprep.subr.mxu0 0.0
        %1065 = vmatpush1.msra.mxu0 0.0
        %1066 = vmatprep.subr.mxu0 0.0
        %1067 = vmatpush1.msra.mxu0 0.0
        %1068 = vmatprep.subr.mxu0 0.0
        %1069 = vmatpush1.msra.mxu0 0.0
        %1070 = vmatprep.subr.mxu0 0.0
        %1071 = vmatpush1.msra.mxu0 0.0
        %1072 = vmatprep.subr.mxu0 0.0
        %1073 = vmatpush1.msra.mxu0 0.0
        %1074 = vmatprep.subr.mxu0 0.0
        %1075 = vmatpush1.msra.mxu0 0.0
        %1076 = vmatprep.subr.mxu0 0.0
        %1077 = vmatpush1.msra.mxu0 0.0
        %1078 = vmatprep.subr.mxu0 0.0
        %1079 = vmatpush1.msra.mxu0 0.0
        %1080 = vmatprep.subr.mxu0 0.0
        %1081 = vmatpush1.msra.mxu0 0.0
        %1082 = vmatprep.subr.mxu0 0.0
        %1083 = vmatpush1.msra.mxu0 0.0
        %1084 = vmatprep.subr.mxu0 0.0
        %1085 = vmatpush1.msra.mxu0 0.0
        %1086 = vmatprep.subr.mxu0 0.0
        %1087 = vmatpush1.msra.mxu0 0.0
        %1088 = vmatprep.subr.mxu0 0.0
        %1089 = vmatpush1.msra.mxu0 0.0
        %1090 = vmatprep.subr.mxu0 0.0
        %1091 = vmatpush1.msra.mxu0 0.0
        %1092 = vmatprep.subr.mxu0 0.0
        %1093 = vmatpush1.msra.mxu0 0.0
        %1094 = vmatprep.subr.mxu0 0.0
        %1095 = vmatpush1.msra.mxu0 0.0
        %1096 = vmatprep.subr.mxu0 0.0
        %1097 = vmatpush1.msra.mxu0 0.0
        %1098 = vmatprep.subr.mxu0 0.0
        %1099 = vmatpush1.msra.mxu0 0.0
        %1100 = vmatprep.subr.mxu0 0.0
        %1101 = vmatpush1.msra.mxu0 0.0
        %1102 = vmatprep.subr.mxu0 0.0
        %1103 = vmatpush1.msra.mxu0 0.0
        %1104 = vmatprep.subr.mxu0 0.0
        %1105 = vmatpush1.msra.mxu0 0.0
        %1106 = vmatprep.subr.mxu0 0.0
        %1107 = vmatpush1.msra.mxu0 0.0
        %1108 = vmatprep.mubr.f32.mxu0 0.0
        %1109 = vmatmul.mubr.f32.gmra.mrb[0].mxu0 %v832
        %v1110 = vpop.f32.mrb[0].mxu0
        %v1111 = vadd.f32 %v785, %v1110
        %v1112 = vpop.f32.mrb[0].mxu0
        %1113 = vdwg.mxu0
        %1114 = vmatprep.subr.mxu0 0.0
        %1115 = vmatpush1.msra.mxu0 %v714
        %1116 = vmatprep.subr.mxu0 0.0
        %1117 = vmatpush1.msra.mxu0 %v715
        %1118 = vmatprep.subr.mxu0 0.0
        %1119 = vmatpush1.msra.mxu0 %v716
        %1120 = vmatprep.subr.mxu0 0.0
        %1121 = vmatpush1.msra.mxu0 %v717
        %1122 = vmatprep.subr.mxu0 0.0
        %1123 = vmatpush1.msra.mxu0 0.0
        %1124 = vmatprep.subr.mxu0 0.0
        %1125 = vmatpush1.msra.mxu0 0.0
        %1126 = vmatprep.subr.mxu0 0.0
        %1127 = vmatpush1.msra.mxu0 0.0
        %1128 = vmatprep.subr.mxu0 0.0
        %1129 = vmatpush1.msra.mxu0 0.0
        %1130 = vmatprep.subr.mxu0 0.0
        %1131 = vmatpush1.msra.mxu0 0.0
        %1132 = vmatprep.subr.mxu0 0.0
        %1133 = vmatpush1.msra.mxu0 0.0
        %1134 = vmatprep.subr.mxu0 0.0
        %1135 = vmatpush1.msra.mxu0 0.0
        %1136 = vmatprep.subr.mxu0 0.0
        %1137 = vmatpush1.msra.mxu0 0.0
        %1138 = vmatprep.subr.mxu0 0.0
        %1139 = vmatpush1.msra.mxu0 0.0
        %1140 = vmatprep.subr.mxu0 0.0
        %1141 = vmatpush1.msra.mxu0 0.0
        %1142 = vmatprep.subr.mxu0 0.0
        %1143 = vmatpush1.msra.mxu0 0.0
        %1144 = vmatprep.subr.mxu0 0.0
        %1145 = vmatpush1.msra.mxu0 0.0
        %1146 = vmatprep.subr.mxu0 0.0
        %1147 = vmatpush1.msra.mxu0 0.0
        %1148 = vmatprep.subr.mxu0 0.0
        %1149 = vmatpush1.msra.mxu0 0.0
        %1150 = vmatprep.subr.mxu0 0.0
        %1151 = vmatpush1.msra.mxu0 0.0
        %1152 = vmatprep.subr.mxu0 0.0
        %1153 = vmatpush1.msra.mxu0 0.0
        %1154 = vmatprep.subr.mxu0 0.0
        %1155 = vmatpush1.msra.mxu0 0.0
        %1156 = vmatprep.subr.mxu0 0.0
        %1157 = vmatpush1.msra.mxu0 0.0
        %1158 = vmatprep.subr.mxu0 0.0
        %1159 = vmatpush1.msra.mxu0 0.0
        %1160 = vmatprep.subr.mxu0 0.0
        %1161 = vmatpush1.msra.mxu0 0.0
        %1162 = vmatprep.subr.mxu0 0.0
        %1163 = vmatpush1.msra.mxu0 0.0
        %1164 = vmatprep.subr.mxu0 0.0
        %1165 = vmatpush1.msra.mxu0 0.0
        %1166 = vmatprep.subr.mxu0 0.0
        %1167 = vmatpush1.msra.mxu0 0.0
        %1168 = vmatprep.subr.mxu0 0.0
        %1169 = vmatpush1.msra.mxu0 0.0
        %1170 = vmatprep.subr.mxu0 0.0
        %1171 = vmatpush1.msra.mxu0 0.0
        %1172 = vmatprep.subr.mxu0 0.0
        %1173 = vmatpush1.msra.mxu0 0.0
        %1174 = vmatprep.subr.mxu0 0.0
        %1175 = vmatpush1.msra.mxu0 0.0
        %1176 = vmatprep.subr.mxu0 0.0
        %1177 = vmatpush1.msra.mxu0 0.0
        %1178 = vmatprep.mubr.f32.mxu0 0.0
        %1179 = vmatmul.mubr.f32.gmra.mrb[0].mxu0 %v832
        %v1180 = vpop.f32.mrb[0].mxu0
        %v1181 = vadd.f32 %v789, %v1180
        %v1182 = vpop.f32.mrb[0].mxu0
        %1183 = vdwg.mxu0
        %1184 = vmatprep.subr.mxu0 0.0
        %1185 = vmatpush1.msra.mxu0 %v718
        %1186 = vmatprep.subr.mxu0 0.0
        %1187 = vmatpush1.msra.mxu0 %v719
        %1188 = vmatprep.subr.mxu0 0.0
        %1189 = vmatpush1.msra.mxu0 %v720
        %1190 = vmatprep.subr.mxu0 0.0
        %1191 = vmatpush1.msra.mxu0 %v721
        %1192 = vmatprep.subr.mxu0 0.0
        %1193 = vmatpush1.msra.mxu0 0.0
        %1194 = vmatprep.subr.mxu0 0.0
        %1195 = vmatpush1.msra.mxu0 0.0
        %1196 = vmatprep.subr.mxu0 0.0
        %1197 = vmatpush1.msra.mxu0 0.0
        %1198 = vmatprep.subr.mxu0 0.0
        %1199 = vmatpush1.msra.mxu0 0.0
        %1200 = vmatprep.subr.mxu0 0.0
        %1201 = vmatpush1.msra.mxu0 0.0
        %1202 = vmatprep.subr.mxu0 0.0
        %1203 = vmatpush1.msra.mxu0 0.0
        %1204 = vmatprep.subr.mxu0 0.0
        %1205 = vmatpush1.msra.mxu0 0.0
        %1206 = vmatprep.subr.mxu0 0.0
        %1207 = vmatpush1.msra.mxu0 0.0
        %1208 = vmatprep.subr.mxu0 0.0
        %1209 = vmatpush1.msra.mxu0 0.0
        %1210 = vmatprep.subr.mxu0 0.0
        %1211 = vmatpush1.msra.mxu0 0.0
        %1212 = vmatprep.subr.mxu0 0.0
        %1213 = vmatpush1.msra.mxu0 0.0
        %1214 = vmatprep.subr.mxu0 0.0
        %1215 = vmatpush1.msra.mxu0 0.0
        %1216 = vmatprep.subr.mxu0 0.0
        %1217 = vmatpush1.msra.mxu0 0.0
        %1218 = vmatprep.subr.mxu0 0.0
        %1219 = vmatpush1.msra.mxu0 0.0
        %1220 = vmatprep.subr.mxu0 0.0
        %1221 = vmatpush1.msra.mxu0 0.0
        %1222 = vmatprep.subr.mxu0 0.0
        %1223 = vmatpush1.msra.mxu0 0.0
        %1224 = vmatprep.subr.mxu0 0.0
        %1225 = vmatpush1.msra.mxu0 0.0
        %1226 = vmatprep.subr.mxu0 0.0
        %1227 = vmatpush1.msra.mxu0 0.0
        %1228 = vmatprep.subr.mxu0 0.0
        %1229 = vmatpush1.msra.mxu0 0.0
        %1230 = vmatprep.subr.mxu0 0.0
        %1231 = vmatpush1.msra.mxu0 0.0
        %1232 = vmatprep.subr.mxu0 0.0
        %1233 = vmatpush1.msra.mxu0 0.0
        %1234 = vmatprep.subr.mxu0 0.0
        %1235 = vmatpush1.msra.mxu0 0.0
        %1236 = vmatprep.subr.mxu0 0.0
        %1237 = vmatpush1.msra.mxu0 0.0
        %1238 = vmatprep.subr.mxu0 0.0
        %1239 = vmatpush1.msra.mxu0 0.0
        %1240 = vmatprep.subr.mxu0 0.0
        %1241 = vmatpush1.msra.mxu0 0.0
        %1242 = vmatprep.subr.mxu0 0.0
        %1243 = vmatpush1.msra.mxu0 0.0
        %1244 = vmatprep.subr.mxu0 0.0
        %1245 = vmatpush1.msra.mxu0 0.0
        %1246 = vmatprep.subr.mxu0 0.0
        %1247 = vmatpush1.msra.mxu0 0.0
        %1248 = vmatprep.mubr.f32.mxu0 0.0
        %1249 = vmatmul.mubr.f32.gmra.mrb[0].mxu0 %v832
        %v1250 = vpop.f32.mrb[0].mxu0
        %v1251 = vadd.f32 %v793, %v1250
        %v1252 = vpop.f32.mrb[0].mxu0
        %1253 = vdwg.mxu0
        %1254 = vmatprep.subr.mxu0 0.0
        %1255 = vmatpush1.msra.mxu0 %v722
        %1256 = vmatprep.subr.mxu0 0.0
        %1257 = vmatpush1.msra.mxu0 %v723
        %1258 = vmatprep.subr.mxu0 0.0
        %1259 = vmatpush1.msra.mxu0 %v724
        %1260 = vmatprep.subr.mxu0 0.0
        %1261 = vmatpush1.msra.mxu0 %v725
        %1262 = vmatprep.subr.mxu0 0.0
        %1263 = vmatpush1.msra.mxu0 0.0
        %1264 = vmatprep.subr.mxu0 0.0
        %1265 = vmatpush1.msra.mxu0 0.0
        %1266 = vmatprep.subr.mxu0 0.0
        %1267 = vmatpush1.msra.mxu0 0.0
        %1268 = vmatprep.subr.mxu0 0.0
        %1269 = vmatpush1.msra.mxu0 0.0
        %1270 = vmatprep.subr.mxu0 0.0
        %1271 = vmatpush1.msra.mxu0 0.0
        %1272 = vmatprep.subr.mxu0 0.0
        %1273 = vmatpush1.msra.mxu0 0.0
        %1274 = vmatprep.subr.mxu0 0.0
        %1275 = vmatpush1.msra.mxu0 0.0
        %1276 = vmatprep.subr.mxu0 0.0
        %1277 = vmatpush1.msra.mxu0 0.0
        %1278 = vmatprep.subr.mxu0 0.0
        %1279 = vmatpush1.msra.mxu0 0.0
        %1280 = vmatprep.subr.mxu0 0.0
        %1281 = vmatpush1.msra.mxu0 0.0
        %1282 = vmatprep.subr.mxu0 0.0
        %1283 = vmatpush1.msra.mxu0 0.0
        %1284 = vmatprep.subr.mxu0 0.0
        %1285 = vmatpush1.msra.mxu0 0.0
        %1286 = vmatprep.subr.mxu0 0.0
        %1287 = vmatpush1.msra.mxu0 0.0
        %1288 = vmatprep.subr.mxu0 0.0
        %1289 = vmatpush1.msra.mxu0 0.0
        %1290 = vmatprep.subr.mxu0 0.0
        %1291 = vmatpush1.msra.mxu0 0.0
        %1292 = vmatprep.subr.mxu0 0.0
        %1293 = vmatpush1.msra.mxu0 0.0
        %1294 = vmatprep.subr.mxu0 0.0
        %1295 = vmatpush1.msra.mxu0 0.0
        %1296 = vmatprep.subr.mxu0 0.0
        %1297 = vmatpush1.msra.mxu0 0.0
        %1298 = vmatprep.subr.mxu0 0.0
        %1299 = vmatpush1.msra.mxu0 0.0
        %1300 = vmatprep.subr.mxu0 0.0
        %1301 = vmatpush1.msra.mxu0 0.0
        %1302 = vmatprep.subr.mxu0 0.0
        %1303 = vmatpush1.msra.mxu0 0.0
        %1304 = vmatprep.subr.mxu0 0.0
        %1305 = vmatpush1.msra.mxu0 0.0
        %1306 = vmatprep.subr.mxu0 0.0
        %1307 = vmatpush1.msra.mxu0 0.0
        %1308 = vmatprep.subr.mxu0 0.0
        %1309 = vmatpush1.msra.mxu0 0.0
        %1310 = vmatprep.subr.mxu0 0.0
        %1311 = vmatpush1.msra.mxu0 0.0
        %1312 = vmatprep.subr.mxu0 0.0
        %1313 = vmatpush1.msra.mxu0 0.0
        %1314 = vmatprep.subr.mxu0 0.0
        %1315 = vmatpush1.msra.mxu0 0.0
        %1316 = vmatprep.subr.mxu0 0.0
        %1317 = vmatpush1.msra.mxu0 0.0
        %1318 = vmatprep.mubr.f32.mxu0 0.0
        %1319 = vmatmul.mubr.f32.gmra.mrb[0].mxu0 %v832
        %v1320 = vpop.f32.mrb[0].mxu0
        %v1321 = vadd.f32 %v797, %v1320
        %v1322 = vpop.f32.mrb[0].mxu0
        %1323 = vdwg.mxu0
        %1324 = vmatprep.subr.mxu0 0.0
        %1325 = vmatpush1.msra.mxu0 %v726
        %1326 = vmatprep.subr.mxu0 0.0
        %1327 = vmatpush1.msra.mxu0 %v727
        %1328 = vmatprep.subr.mxu0 0.0
        %1329 = vmatpush1.msra.mxu0 %v728
        %1330 = vmatprep.subr.mxu0 0.0
        %1331 = vmatpush1.msra.mxu0 %v729
        %1332 = vmatprep.subr.mxu0 0.0
        %1333 = vmatpush1.msra.mxu0 0.0
        %1334 = vmatprep.subr.mxu0 0.0
        %1335 = vmatpush1.msra.mxu0 0.0
        %1336 = vmatprep.subr.mxu0 0.0
        %1337 = vmatpush1.msra.mxu0 0.0
        %1338 = vmatprep.subr.mxu0 0.0
        %1339 = vmatpush1.msra.mxu0 0.0
        %1340 = vmatprep.subr.mxu0 0.0
        %1341 = vmatpush1.msra.mxu0 0.0
        %1342 = vmatprep.subr.mxu0 0.0
        %1343 = vmatpush1.msra.mxu0 0.0
        %1344 = vmatprep.subr.mxu0 0.0
        %1345 = vmatpush1.msra.mxu0 0.0
        %1346 = vmatprep.subr.mxu0 0.0
        %1347 = vmatpush1.msra.mxu0 0.0
        %1348 = vmatprep.subr.mxu0 0.0
        %1349 = vmatpush1.msra.mxu0 0.0
        %1350 = vmatprep.subr.mxu0 0.0
        %1351 = vmatpush1.msra.mxu0 0.0
        %1352 = vmatprep.subr.mxu0 0.0
        %1353 = vmatpush1.msra.mxu0 0.0
        %1354 = vmatprep.subr.mxu0 0.0
        %1355 = vmatpush1.msra.mxu0 0.0
        %1356 = vmatprep.subr.mxu0 0.0
        %1357 = vmatpush1.msra.mxu0 0.0
        %1358 = vmatprep.subr.mxu0 0.0
        %1359 = vmatpush1.msra.mxu0 0.0
        %1360 = vmatprep.subr.mxu0 0.0
        %1361 = vmatpush1.msra.mxu0 0.0
        %1362 = vmatprep.subr.mxu0 0.0
        %1363 = vmatpush1.msra.mxu0 0.0
        %1364 = vmatprep.subr.mxu0 0.0
        %1365 = vmatpush1.msra.mxu0 0.0
        %1366 = vmatprep.subr.mxu0 0.0
        %1367 = vmatpush1.msra.mxu0 0.0
        %1368 = vmatprep.subr.mxu0 0.0
        %1369 = vmatpush1.msra.mxu0 0.0
        %1370 = vmatprep.subr.mxu0 0.0
        %1371 = vmatpush1.msra.mxu0 0.0
        %1372 = vmatprep.subr.mxu0 0.0
        %1373 = vmatpush1.msra.mxu0 0.0
        %1374 = vmatprep.subr.mxu0 0.0
        %1375 = vmatpush1.msra.mxu0 0.0
        %1376 = vmatprep.subr.mxu0 0.0
        %1377 = vmatpush1.msra.mxu0 0.0
        %1378 = vmatprep.subr.mxu0 0.0
        %1379 = vmatpush1.msra.mxu0 0.0
        %1380 = vmatprep.subr.mxu0 0.0
        %1381 = vmatpush1.msra.mxu0 0.0
        %1382 = vmatprep.subr.mxu0 0.0
        %1383 = vmatpush1.msra.mxu0 0.0
        %1384 = vmatprep.subr.mxu0 0.0
        %1385 = vmatpush1.msra.mxu0 0.0
        %1386 = vmatprep.subr.mxu0 0.0
        %1387 = vmatpush1.msra.mxu0 0.0
        %1388 = vmatprep.mubr.f32.mxu0 0.0
        %1389 = vmatmul.mubr.f32.gmra.mrb[0].mxu0 %v832
        %v1390 = vpop.f32.mrb[0].mxu0
        %v1391 = vadd.f32 %v801, %v1390
        %v1392 = vpop.f32.mrb[0].mxu0
        %1393 = vdwg.mxu0
        %1394 = vmatprep.subr.mxu0 0.0
        %1395 = vmatpush1.msra.mxu0 %v730
        %1396 = vmatprep.subr.mxu0 0.0
        %1397 = vmatpush1.msra.mxu0 %v731
        %1398 = vmatprep.subr.mxu0 0.0
        %1399 = vmatpush1.msra.mxu0 %v732
        %1400 = vmatprep.subr.mxu0 0.0
        %1401 = vmatpush1.msra.mxu0 %v733
        %1402 = vmatprep.subr.mxu0 0.0
        %1403 = vmatpush1.msra.mxu0 0.0
        %1404 = vmatprep.subr.mxu0 0.0
        %1405 = vmatpush1.msra.mxu0 0.0
        %1406 = vmatprep.subr.mxu0 0.0
        %1407 = vmatpush1.msra.mxu0 0.0
        %1408 = vmatprep.subr.mxu0 0.0
        %1409 = vmatpush1.msra.mxu0 0.0
        %1410 = vmatprep.subr.mxu0 0.0
        %1411 = vmatpush1.msra.mxu0 0.0
        %1412 = vmatprep.subr.mxu0 0.0
        %1413 = vmatpush1.msra.mxu0 0.0
        %1414 = vmatprep.subr.mxu0 0.0
        %1415 = vmatpush1.msra.mxu0 0.0
        %1416 = vmatprep.subr.mxu0 0.0
        %1417 = vmatpush1.msra.mxu0 0.0
        %1418 = vmatprep.subr.mxu0 0.0
        %1419 = vmatpush1.msra.mxu0 0.0
        %1420 = vmatprep.subr.mxu0 0.0
        %1421 = vmatpush1.msra.mxu0 0.0
        %1422 = vmatprep.subr.mxu0 0.0
        %1423 = vmatpush1.msra.mxu0 0.0
        %1424 = vmatprep.subr.mxu0 0.0
        %1425 = vmatpush1.msra.mxu0 0.0
        %1426 = vmatprep.subr.mxu0 0.0
        %1427 = vmatpush1.msra.mxu0 0.0
        %1428 = vmatprep.subr.mxu0 0.0
        %1429 = vmatpush1.msra.mxu0 0.0
        %1430 = vmatprep.subr.mxu0 0.0
        %1431 = vmatpush1.msra.mxu0 0.0
        %1432 = vmatprep.subr.mxu0 0.0
        %1433 = vmatpush1.msra.mxu0 0.0
        %1434 = vmatprep.subr.mxu0 0.0
        %1435 = vmatpush1.msra.mxu0 0.0
        %1436 = vmatprep.subr.mxu0 0.0
        %1437 = vmatpush1.msra.mxu0 0.0
        %1438 = vmatprep.subr.mxu0 0.0
        %1439 = vmatpush1.msra.mxu0 0.0
        %1440 = vmatprep.subr.mxu0 0.0
        %1441 = vmatpush1.msra.mxu0 0.0
        %1442 = vmatprep.subr.mxu0 0.0
        %1443 = vmatpush1.msra.mxu0 0.0
        %1444 = vmatprep.subr.mxu0 0.0
        %1445 = vmatpush1.msra.mxu0 0.0
        %1446 = vmatprep.subr.mxu0 0.0
        %1447 = vmatpush1.msra.mxu0 0.0
        %1448 = vmatprep.subr.mxu0 0.0
        %1449 = vmatpush1.msra.mxu0 0.0
        %1450 = vmatprep.subr.mxu0 0.0
        %1451 = vmatpush1.msra.mxu0 0.0
        %1452 = vmatprep.subr.mxu0 0.0
        %1453 = vmatpush1.msra.mxu0 0.0
        %1454 = vmatprep.subr.mxu0 0.0
        %1455 = vmatpush1.msra.mxu0 0.0
        %1456 = vmatprep.subr.mxu0 0.0
        %1457 = vmatpush1.msra.mxu0 0.0
        %1458 = vmatprep.mubr.f32.mxu0 0.0
        %1459 = vmatmul.mubr.f32.gmra.mrb[0].mxu0 %v832
        %v1460 = vpop.f32.mrb[0].mxu0
        %v1461 = vadd.f32 %v805, %v1460
        %v1462 = vpop.f32.mrb[0].mxu0
        %1463 = vdwg.mxu0
        %1464 = vmatprep.subr.mxu0 0.0
        %1465 = vmatpush1.msra.mxu0 %v734
        %1466 = vmatprep.subr.mxu0 0.0
        %1467 = vmatpush1.msra.mxu0 %v735
        %1468 = vmatprep.subr.mxu0 0.0
        %1469 = vmatpush1.msra.mxu0 %v736
        %1470 = vmatprep.subr.mxu0 0.0
        %1471 = vmatpush1.msra.mxu0 %v737
        %1472 = vmatprep.subr.mxu0 0.0
        %1473 = vmatpush1.msra.mxu0 0.0
        %1474 = vmatprep.subr.mxu0 0.0
        %1475 = vmatpush1.msra.mxu0 0.0
        %1476 = vmatprep.subr.mxu0 0.0
        %1477 = vmatpush1.msra.mxu0 0.0
        %1478 = vmatprep.subr.mxu0 0.0
        %1479 = vmatpush1.msra.mxu0 0.0
        %1480 = vmatprep.subr.mxu0 0.0
        %1481 = vmatpush1.msra.mxu0 0.0
        %1482 = vmatprep.subr.mxu0 0.0
        %1483 = vmatpush1.msra.mxu0 0.0
        %1484 = vmatprep.subr.mxu0 0.0
        %1485 = vmatpush1.msra.mxu0 0.0
        %1486 = vmatprep.subr.mxu0 0.0
        %1487 = vmatpush1.msra.mxu0 0.0
        %1488 = vmatprep.subr.mxu0 0.0
        %1489 = vmatpush1.msra.mxu0 0.0
        %1490 = vmatprep.subr.mxu0 0.0
        %1491 = vmatpush1.msra.mxu0 0.0
        %1492 = vmatprep.subr.mxu0 0.0
        %1493 = vmatpush1.msra.mxu0 0.0
        %1494 = vmatprep.subr.mxu0 0.0
        %1495 = vmatpush1.msra.mxu0 0.0
        %1496 = vmatprep.subr.mxu0 0.0
        %1497 = vmatpush1.msra.mxu0 0.0
        %1498 = vmatprep.subr.mxu0 0.0
        %1499 = vmatpush1.msra.mxu0 0.0
        %1500 = vmatprep.subr.mxu0 0.0
        %1501 = vmatpush1.msra.mxu0 0.0
        %1502 = vmatprep.subr.mxu0 0.0
        %1503 = vmatpush1.msra.mxu0 0.0
        %1504 = vmatprep.subr.mxu0 0.0
        %1505 = vmatpush1.msra.mxu0 0.0
        %1506 = vmatprep.subr.mxu0 0.0
        %1507 = vmatpush1.msra.mxu0 0.0
        %1508 = vmatprep.subr.mxu0 0.0
        %1509 = vmatpush1.msra.mxu0 0.0
        %1510 = vmatprep.subr.mxu0 0.0
        %1511 = vmatpush1.msra.mxu0 0.0
        %1512 = vmatprep.subr.mxu0 0.0
        %1513 = vmatpush1.msra.mxu0 0.0
        %1514 = vmatprep.subr.mxu0 0.0
        %1515 = vmatpush1.msra.mxu0 0.0
        %1516 = vmatprep.subr.mxu0 0.0
        %1517 = vmatpush1.msra.mxu0 0.0
        %1518 = vmatprep.subr.mxu0 0.0
        %1519 = vmatpush1.msra.mxu0 0.0
        %1520 = vmatprep.subr.mxu0 0.0
        %1521 = vmatpush1.msra.mxu0 0.0
        %1522 = vmatprep.subr.mxu0 0.0
        %1523 = vmatpush1.msra.mxu0 0.0
        %1524 = vmatprep.subr.mxu0 0.0
        %1525 = vmatpush1.msra.mxu0 0.0
        %1526 = vmatprep.subr.mxu0 0.0
        %1527 = vmatpush1.msra.mxu0 0.0
        %1528 = vmatprep.mubr.f32.mxu0 0.0
        %1529 = vmatmul.mubr.f32.gmra.mrb[0].mxu0 %v832
        %v1530 = vpop.f32.mrb[0].mxu0
        %v1531 = vadd.f32 %v809, %v1530
        %v1532 = vpop.f32.mrb[0].mxu0
        %1533 = vdwg.mxu0
        %1534 = vmatprep.subr.mxu0 0.0
        %1535 = vmatpush1.msra.mxu0 %v738
        %1536 = vmatprep.subr.mxu0 0.0
        %1537 = vmatpush1.msra.mxu0 %v739
        %1538 = vmatprep.subr.mxu0 0.0
        %1539 = vmatpush1.msra.mxu0 %v740
        %1540 = vmatprep.subr.mxu0 0.0
        %1541 = vmatpush1.msra.mxu0 %v741
        %1542 = vmatprep.subr.mxu0 0.0
        %1543 = vmatpush1.msra.mxu0 0.0
        %1544 = vmatprep.subr.mxu0 0.0
        %1545 = vmatpush1.msra.mxu0 0.0
        %1546 = vmatprep.subr.mxu0 0.0
        %1547 = vmatpush1.msra.mxu0 0.0
        %1548 = vmatprep.subr.mxu0 0.0
        %1549 = vmatpush1.msra.mxu0 0.0
        %1550 = vmatprep.subr.mxu0 0.0
        %1551 = vmatpush1.msra.mxu0 0.0
        %1552 = vmatprep.subr.mxu0 0.0
        %1553 = vmatpush1.msra.mxu0 0.0
        %1554 = vmatprep.subr.mxu0 0.0
        %1555 = vmatpush1.msra.mxu0 0.0
        %1556 = vmatprep.subr.mxu0 0.0
        %1557 = vmatpush1.msra.mxu0 0.0
        %1558 = vmatprep.subr.mxu0 0.0
        %1559 = vmatpush1.msra.mxu0 0.0
        %1560 = vmatprep.subr.mxu0 0.0
        %1561 = vmatpush1.msra.mxu0 0.0
        %1562 = vmatprep.subr.mxu0 0.0
        %1563 = vmatpush1.msra.mxu0 0.0
        %1564 = vmatprep.subr.mxu0 0.0
        %1565 = vmatpush1.msra.mxu0 0.0
        %1566 = vmatprep.subr.mxu0 0.0
        %1567 = vmatpush1.msra.mxu0 0.0
        %1568 = vmatprep.subr.mxu0 0.0
        %1569 = vmatpush1.msra.mxu0 0.0
        %1570 = vmatprep.subr.mxu0 0.0
        %1571 = vmatpush1.msra.mxu0 0.0
        %1572 = vmatprep.subr.mxu0 0.0
        %1573 = vmatpush1.msra.mxu0 0.0
        %1574 = vmatprep.subr.mxu0 0.0
        %1575 = vmatpush1.msra.mxu0 0.0
        %1576 = vmatprep.subr.mxu0 0.0
        %1577 = vmatpush1.msra.mxu0 0.0
        %1578 = vmatprep.subr.mxu0 0.0
        %1579 = vmatpush1.msra.mxu0 0.0
        %1580 = vmatprep.subr.mxu0 0.0
        %1581 = vmatpush1.msra.mxu0 0.0
        %1582 = vmatprep.subr.mxu0 0.0
        %1583 = vmatpush1.msra.mxu0 0.0
        %1584 = vmatprep.subr.mxu0 0.0
        %1585 = vmatpush1.msra.mxu0 0.0
        %1586 = vmatprep.subr.mxu0 0.0
        %1587 = vmatpush1.msra.mxu0 0.0
        %1588 = vmatprep.subr.mxu0 0.0
        %1589 = vmatpush1.msra.mxu0 0.0
        %1590 = vmatprep.subr.mxu0 0.0
        %1591 = vmatpush1.msra.mxu0 0.0
        %1592 = vmatprep.subr.mxu0 0.0
        %1593 = vmatpush1.msra.mxu0 0.0
        %1594 = vmatprep.subr.mxu0 0.0
        %1595 = vmatpush1.msra.mxu0 0.0
        %1596 = vmatprep.subr.mxu0 0.0
        %1597 = vmatpush1.msra.mxu0 0.0
        %1598 = vmatprep.mubr.f32.mxu0 0.0
        %1599 = vmatmul.mubr.f32.gmra.mrb[0].mxu0 %v832
        %v1600 = vpop.f32.mrb[0].mxu0
        %v1601 = vadd.f32 %v813, %v1600
        %v1602 = vpop.f32.mrb[0].mxu0
        %1603 = vdwg.mxu0
        %1604 = vmatprep.subr.mxu0 0.0
        %1605 = vmatpush1.msra.mxu0 %v742
        %1606 = vmatprep.subr.mxu0 0.0
        %1607 = vmatpush1.msra.mxu0 %v743
        %1608 = vmatprep.subr.mxu0 0.0
        %1609 = vmatpush1.msra.mxu0 %v744
        %1610 = vmatprep.subr.mxu0 0.0
        %1611 = vmatpush1.msra.mxu0 %v745
        %1612 = vmatprep.subr.mxu0 0.0
        %1613 = vmatpush1.msra.mxu0 0.0
        %1614 = vmatprep.subr.mxu0 0.0
        %1615 = vmatpush1.msra.mxu0 0.0
        %1616 = vmatprep.subr.mxu0 0.0
        %1617 = vmatpush1.msra.mxu0 0.0
        %1618 = vmatprep.subr.mxu0 0.0
        %1619 = vmatpush1.msra.mxu0 0.0
        %1620 = vmatprep.subr.mxu0 0.0
        %1621 = vmatpush1.msra.mxu0 0.0
        %1622 = vmatprep.subr.mxu0 0.0
        %1623 = vmatpush1.msra.mxu0 0.0
        %1624 = vmatprep.subr.mxu0 0.0
        %1625 = vmatpush1.msra.mxu0 0.0
        %1626 = vmatprep.subr.mxu0 0.0
        %1627 = vmatpush1.msra.mxu0 0.0
        %1628 = vmatprep.subr.mxu0 0.0
        %1629 = vmatpush1.msra.mxu0 0.0
        %1630 = vmatprep.subr.mxu0 0.0
        %1631 = vmatpush1.msra.mxu0 0.0
        %1632 = vmatprep.subr.mxu0 0.0
        %1633 = vmatpush1.msra.mxu0 0.0
        %1634 = vmatprep.subr.mxu0 0.0
        %1635 = vmatpush1.msra.mxu0 0.0
        %1636 = vmatprep.subr.mxu0 0.0
        %1637 = vmatpush1.msra.mxu0 0.0
        %1638 = vmatprep.subr.mxu0 0.0
        %1639 = vmatpush1.msra.mxu0 0.0
        %1640 = vmatprep.subr.mxu0 0.0
        %1641 = vmatpush1.msra.mxu0 0.0
        %1642 = vmatprep.subr.mxu0 0.0
        %1643 = vmatpush1.msra.mxu0 0.0
        %1644 = vmatprep.subr.mxu0 0.0
        %1645 = vmatpush1.msra.mxu0 0.0
        %1646 = vmatprep.subr.mxu0 0.0
        %1647 = vmatpush1.msra.mxu0 0.0
        %1648 = vmatprep.subr.mxu0 0.0
        %1649 = vmatpush1.msra.mxu0 0.0
        %1650 = vmatprep.subr.mxu0 0.0
        %1651 = vmatpush1.msra.mxu0 0.0
        %1652 = vmatprep.subr.mxu0 0.0
        %1653 = vmatpush1.msra.mxu0 0.0
        %1654 = vmatprep.subr.mxu0 0.0
        %1655 = vmatpush1.msra.mxu0 0.0
        %1656 = vmatprep.subr.mxu0 0.0
        %1657 = vmatpush1.msra.mxu0 0.0
        %1658 = vmatprep.subr.mxu0 0.0
        %1659 = vmatpush1.msra.mxu0 0.0
        %1660 = vmatprep.subr.mxu0 0.0
        %1661 = vmatpush1.msra.mxu0 0.0
        %1662 = vmatprep.subr.mxu0 0.0
        %1663 = vmatpush1.msra.mxu0 0.0
        %1664 = vmatprep.subr.mxu0 0.0
        %1665 = vmatpush1.msra.mxu0 0.0
        %1666 = vmatprep.subr.mxu0 0.0
        %1667 = vmatpush1.msra.mxu0 0.0
        %1668 = vmatprep.mubr.f32.mxu0 0.0
        %1669 = vmatmul.mubr.f32.gmra.mrb[0].mxu0 %v832
        %v1670 = vpop.f32.mrb[0].mxu0
        %v1671 = vadd.f32 %v817, %v1670
        %v1672 = vpop.f32.mrb[0].mxu0
        %1673 = vdwg.mxu0
        %v1674 = vld [vmem:[%s4] sm:$0xff]
        %v1675 = vld [vmem:[%s4 + $0x8] sm:$0xff]
        %v1676 = vld [vmem:[%s4 + $0x10] sm:$0xff]
        %v1677 = vld [vmem:[%s4 + $0x18] sm:$0xff]
        %v1678 = vld [vmem:[%s5] sm:$0x1]
        %vm1679 = vcmask 64512
        %v1681 = vsel %vm1679, %v901, 0
        %v1684 = vsel %vm1679, %v1181, 0
        %1686 = vmatprep.subr.mxu0 0.0
        %1687 = vmatpush1.xpose.msra.mxu0 %v1684
        %1688 = vmatprep.subr.mxu0 0.0
        %1689 = vmatpush1.xpose.msra.mxu0 0.0
        %1690 = vmatprep.subr.mxu0 0.0
        %1691 = vmatpush1.xpose.msra.mxu0 0.0
        %1692 = vmatprep.subr.mxu0 0.0
        %1693 = vmatpush1.xpose.msra.mxu0 0.0
        %1694 = vmatprep.subr.mxu0 0.0
        %1695 = vmatpush1.xpose.msra.mxu0 0.0
        %1696 = vmatprep.subr.mxu0 0.0
        %1697 = vmatpush1.xpose.msra.mxu0 0.0
        %1698 = vmatprep.subr.mxu0 0.0
        %1699 = vmatpush1.xpose.msra.mxu0 0.0
        %1700 = vmatprep.subr.mxu0 0.0
        %1701 = vmatpush1.xpose.msra.mxu0 0.0
        %1702 = vmatprep.subr.mxu0 0.0
        %1703 = vmatpush1.xpose.msra.mxu0 0.0
        %1704 = vmatprep.subr.mxu0 0.0
        %1705 = vmatpush1.xpose.msra.mxu0 0.0
        %1706 = vmatprep.subr.mxu0 0.0
        %1707 = vmatpush1.xpose.msra.mxu0 0.0
        %1708 = vmatprep.subr.mxu0 0.0
        %1709 = vmatpush1.xpose.msra.mxu0 0.0
        %1710 = vmatprep.subr.mxu0 0.0
        %1711 = vmatpush1.xpose.msra.mxu0 0.0
        %1712 = vmatprep.subr.mxu0 0.0
        %1713 = vmatpush1.xpose.msra.mxu0 0.0
        %1714 = vmatprep.subr.mxu0 0.0
        %1715 = vmatpush1.xpose.msra.mxu0 0.0
        %1716 = vmatprep.subr.mxu0 0.0
        %1717 = vmatpush1.xpose.msra.mxu0 0.0
        %1718 = vmatprep.subr.mxu0 0.0
        %1719 = vmatpush1.xpose.msra.mxu0 0.0
        %1720 = vmatprep.subr.mxu0 0.0
        %1721 = vmatpush1.xpose.msra.mxu0 0.0
        %1722 = vmatprep.subr.mxu0 0.0
        %1723 = vmatpush1.xpose.msra.mxu0 0.0
        %1724 = vmatprep.subr.mxu0 0.0
        %1725 = vmatpush1.xpose.msra.mxu0 0.0
        %1726 = vmatprep.subr.mxu0 0.0
        %1727 = vmatpush1.xpose.msra.mxu0 0.0
        %1728 = vmatprep.subr.mxu0 0.0
        %1729 = vmatpush1.xpose.msra.mxu0 0.0
        %1730 = vmatprep.subr.mxu0 0.0
        %1731 = vmatpush1.xpose.msra.mxu0 0.0
        %1732 = vmatprep.subr.mxu0 0.0
        %1733 = vmatpush1.xpose.msra.mxu0 0.0
        %1734 = vmatprep.subr.mxu0 0.0
        %1735 = vmatpush1.xpose.msra.mxu0 0.0
        %1736 = vmatprep.subr.mxu0 0.0
        %1737 = vmatpush1.xpose.msra.mxu0 0.0
        %1738 = vmatprep.subr.mxu0 0.0
        %1739 = vmatpush1.xpose.msra.mxu0 0.0
        %1740 = vmatprep.subr.mxu0 0.0
        %1741 = vmatpush1.xpose.msra.mxu0 0.0
        %1742 = vmatprep.subr.mxu0 0.0
        %1743 = vmatpush1.xpose.msra.mxu0 0.0
        %1744 = vmatprep.subr.mxu0 0.0
        %1745 = vmatpush1.xpose.msra.mxu0 0.0
        %1746 = vmatprep.subr.mxu0 0.0
        %1747 = vmatpush1.xpose.msra.mxu0 0.0
        %1748 = vmatprep.subr.mxu0 0.0
        %1749 = vmatpush1.xpose.msra.mxu0 0.0
        %1750 = vmatprep.mubr.f32.mxu0 0.0
        %1751 = vmatmul.mubr.f32.gmra.mrb[0].mxu0 %v1681
        %v1752 = vpop.f32.mrb[0].mxu0
        %v1753 = vadd.f32 0.0, %v1752
        %v1754 = vpop.f32.mrb[0].mxu0
        %1755 = vdwg.mxu0
        %v1757 = vsel %vm1679, %v971, 0
        %v1760 = vsel %vm1679, %v1251, 0
        %1762 = vmatprep.subr.mxu0 0.0
        %1763 = vmatpush1.xpose.msra.mxu0 %v1760
        %1764 = vmatprep.subr.mxu0 0.0
        %1765 = vmatpush1.xpose.msra.mxu0 0.0
        %1766 = vmatprep.subr.mxu0 0.0
        %1767 = vmatpush1.xpose.msra.mxu0 0.0
        %1768 = vmatprep.subr.mxu0 0.0
        %1769 = vmatpush1.xpose.msra.mxu0 0.0
        %1770 = vmatprep.subr.mxu0 0.0
        %1771 = vmatpush1.xpose.msra.mxu0 0.0
        %1772 = vmatprep.subr.mxu0 0.0
        %1773 = vmatpush1.xpose.msra.mxu0 0.0
        %1774 = vmatprep.subr.mxu0 0.0
        %1775 = vmatpush1.xpose.msra.mxu0 0.0
        %1776 = vmatprep.subr.mxu0 0.0
        %1777 = vmatpush1.xpose.msra.mxu0 0.0
        %1778 = vmatprep.subr.mxu0 0.0
        %1779 = vmatpush1.xpose.msra.mxu0 0.0
        %1780 = vmatprep.subr.mxu0 0.0
        %1781 = vmatpush1.xpose.msra.mxu0 0.0
        %1782 = vmatprep.subr.mxu0 0.0
        %1783 = vmatpush1.xpose.msra.mxu0 0.0
        %1784 = vmatprep.subr.mxu0 0.0
        %1785 = vmatpush1.xpose.msra.mxu0 0.0
        %1786 = vmatprep.subr.mxu0 0.0
        %1787 = vmatpush1.xpose.msra.mxu0 0.0
        %1788 = vmatprep.subr.mxu0 0.0
        %1789 = vmatpush1.xpose.msra.mxu0 0.0
        %1790 = vmatprep.subr.mxu0 0.0
        %1791 = vmatpush1.xpose.msra.mxu0 0.0
        %1792 = vmatprep.subr.mxu0 0.0
        %1793 = vmatpush1.xpose.msra.mxu0 0.0
        %1794 = vmatprep.subr.mxu0 0.0
        %1795 = vmatpush1.xpose.msra.mxu0 0.0
        %1796 = vmatprep.subr.mxu0 0.0
        %1797 = vmatpush1.xpose.msra.mxu0 0.0
        %1798 = vmatprep.subr.mxu0 0.0
        %1799 = vmatpush1.xpose.msra.mxu0 0.0
        %1800 = vmatprep.subr.mxu0 0.0
        %1801 = vmatpush1.xpose.msra.mxu0 0.0
        %1802 = vmatprep.subr.mxu0 0.0
        %1803 = vmatpush1.xpose.msra.mxu0 0.0
        %1804 = vmatprep.subr.mxu0 0.0
        %1805 = vmatpush1.xpose.msra.mxu0 0.0
        %1806 = vmatprep.subr.mxu0 0.0
        %1807 = vmatpush1.xpose.msra.mxu0 0.0
        %1808 = vmatprep.subr.mxu0 0.0
        %1809 = vmatpush1.xpose.msra.mxu0 0.0
        %1810 = vmatprep.subr.mxu0 0.0
        %1811 = vmatpush1.xpose.msra.mxu0 0.0
        %1812 = vmatprep.subr.mxu0 0.0
        %1813 = vmatpush1.xpose.msra.mxu0 0.0
        %1814 = vmatprep.subr.mxu0 0.0
        %1815 = vmatpush1.xpose.msra.mxu0 0.0
        %1816 = vmatprep.subr.mxu0 0.0
        %1817 = vmatpush1.xpose.msra.mxu0 0.0
        %1818 = vmatprep.subr.mxu0 0.0
        %1819 = vmatpush1.xpose.msra.mxu0 0.0
        %1820 = vmatprep.subr.mxu0 0.0
        %1821 = vmatpush1.xpose.msra.mxu0 0.0
        %1822 = vmatprep.subr.mxu0 0.0
        %1823 = vmatpush1.xpose.msra.mxu0 0.0
        %1824 = vmatprep.subr.mxu0 0.0
        %1825 = vmatpush1.xpose.msra.mxu0 0.0
        %1826 = vmatprep.mubr.f32.mxu0 0.0
        %1827 = vmatmul.mubr.f32.gmra.mrb[0].mxu0 %v1757
        %v1828 = vpop.f32.mrb[0].mxu0
        %v1829 = vadd.f32 0.0, %v1828
        %v1830 = vpop.f32.mrb[0].mxu0
        %1831 = vdwg.mxu0
        %v1833 = vsel %vm1679, %v1041, 0
        %v1836 = vsel %vm1679, %v1321, 0
        %1838 = vmatprep.subr.mxu0 0.0
        %1839 = vmatpush1.xpose.msra.mxu0 %v1836
        %1840 = vmatprep.subr.mxu0 0.0
        %1841 = vmatpush1.xpose.msra.mxu0 0.0
        %1842 = vmatprep.subr.mxu0 0.0
        %1843 = vmatpush1.xpose.msra.mxu0 0.0
        %1844 = vmatprep.subr.mxu0 0.0
        %1845 = vmatpush1.xpose.msra.mxu0 0.0
        %1846 = vmatprep.subr.mxu0 0.0
        %1847 = vmatpush1.xpose.msra.mxu0 0.0
        %1848 = vmatprep.subr.mxu0 0.0
        %1849 = vmatpush1.xpose.msra.mxu0 0.0
        %1850 = vmatprep.subr.mxu0 0.0
        %1851 = vmatpush1.xpose.msra.mxu0 0.0
        %1852 = vmatprep.subr.mxu0 0.0
        %1853 = vmatpush1.xpose.msra.mxu0 0.0
        %1854 = vmatprep.subr.mxu0 0.0
        %1855 = vmatpush1.xpose.msra.mxu0 0.0
        %1856 = vmatprep.subr.mxu0 0.0
        %1857 = vmatpush1.xpose.msra.mxu0 0.0
        %1858 = vmatprep.subr.mxu0 0.0
        %1859 = vmatpush1.xpose.msra.mxu0 0.0
        %1860 = vmatprep.subr.mxu0 0.0
        %1861 = vmatpush1.xpose.msra.mxu0 0.0
        %1862 = vmatprep.subr.mxu0 0.0
        %1863 = vmatpush1.xpose.msra.mxu0 0.0
        %1864 = vmatprep.subr.mxu0 0.0
        %1865 = vmatpush1.xpose.msra.mxu0 0.0
        %1866 = vmatprep.subr.mxu0 0.0
        %1867 = vmatpush1.xpose.msra.mxu0 0.0
        %1868 = vmatprep.subr.mxu0 0.0
        %1869 = vmatpush1.xpose.msra.mxu0 0.0
        %1870 = vmatprep.subr.mxu0 0.0
        %1871 = vmatpush1.xpose.msra.mxu0 0.0
        %1872 = vmatprep.subr.mxu0 0.0
        %1873 = vmatpush1.xpose.msra.mxu0 0.0
        %1874 = vmatprep.subr.mxu0 0.0
        %1875 = vmatpush1.xpose.msra.mxu0 0.0
        %1876 = vmatprep.subr.mxu0 0.0
        %1877 = vmatpush1.xpose.msra.mxu0 0.0
        %1878 = vmatprep.subr.mxu0 0.0
        %1879 = vmatpush1.xpose.msra.mxu0 0.0
        %1880 = vmatprep.subr.mxu0 0.0
        %1881 = vmatpush1.xpose.msra.mxu0 0.0
        %1882 = vmatprep.subr.mxu0 0.0
        %1883 = vmatpush1.xpose.msra.mxu0 0.0
        %1884 = vmatprep.subr.mxu0 0.0
        %1885 = vmatpush1.xpose.msra.mxu0 0.0
        %1886 = vmatprep.subr.mxu0 0.0
        %1887 = vmatpush1.xpose.msra.mxu0 0.0
        %1888 = vmatprep.subr.mxu0 0.0
        %1889 = vmatpush1.xpose.msra.mxu0 0.0
        %1890 = vmatprep.subr.mxu0 0.0
        %1891 = vmatpush1.xpose.msra.mxu0 0.0
        %1892 = vmatprep.subr.mxu0 0.0
        %1893 = vmatpush1.xpose.msra.mxu0 0.0
        %1894 = vmatprep.subr.mxu0 0.0
        %1895 = vmatpush1.xpose.msra.mxu0 0.0
        %1896 = vmatprep.subr.mxu0 0.0
        %1897 = vmatpush1.xpose.msra.mxu0 0.0
        %1898 = vmatprep.subr.mxu0 0.0
        %1899 = vmatpush1.xpose.msra.mxu0 0.0
        %1900 = vmatprep.subr.mxu0 0.0
        %1901 = vmatpush1.xpose.msra.mxu0 0.0
        %1902 = vmatprep.mubr.f32.mxu0 0.0
        %1903 = vmatmul.mubr.f32.gmra.mrb[0].mxu0 %v1833
        %v1904 = vpop.f32.mrb[0].mxu0
        %v1905 = vadd.f32 0.0, %v1904
        %v1906 = vpop.f32.mrb[0].mxu0
        %1907 = vdwg.mxu0
        %v1909 = vsel %vm1679, %v1111, 0
        %v1912 = vsel %vm1679, %v1391, 0
        %1914 = vmatprep.subr.mxu0 0.0
        %1915 = vmatpush1.xpose.msra.mxu0 %v1912
        %1916 = vmatprep.subr.mxu0 0.0
        %1917 = vmatpush1.xpose.msra.mxu0 0.0
        %1918 = vmatprep.subr.mxu0 0.0
        %1919 = vmatpush1.xpose.msra.mxu0 0.0
        %1920 = vmatprep.subr.mxu0 0.0
        %1921 = vmatpush1.xpose.msra.mxu0 0.0
        %1922 = vmatprep.subr.mxu0 0.0
        %1923 = vmatpush1.xpose.msra.mxu0 0.0
        %1924 = vmatprep.subr.mxu0 0.0
        %1925 = vmatpush1.xpose.msra.mxu0 0.0
        %1926 = vmatprep.subr.mxu0 0.0
        %1927 = vmatpush1.xpose.msra.mxu0 0.0
        %1928 = vmatprep.subr.mxu0 0.0
        %1929 = vmatpush1.xpose.msra.mxu0 0.0
        %1930 = vmatprep.subr.mxu0 0.0
        %1931 = vmatpush1.xpose.msra.mxu0 0.0
        %1932 = vmatprep.subr.mxu0 0.0
        %1933 = vmatpush1.xpose.msra.mxu0 0.0
        %1934 = vmatprep.subr.mxu0 0.0
        %1935 = vmatpush1.xpose.msra.mxu0 0.0
        %1936 = vmatprep.subr.mxu0 0.0
        %1937 = vmatpush1.xpose.msra.mxu0 0.0
        %1938 = vmatprep.subr.mxu0 0.0
        %1939 = vmatpush1.xpose.msra.mxu0 0.0
        %1940 = vmatprep.subr.mxu0 0.0
        %1941 = vmatpush1.xpose.msra.mxu0 0.0
        %1942 = vmatprep.subr.mxu0 0.0
        %1943 = vmatpush1.xpose.msra.mxu0 0.0
        %1944 = vmatprep.subr.mxu0 0.0
        %1945 = vmatpush1.xpose.msra.mxu0 0.0
        %1946 = vmatprep.subr.mxu0 0.0
        %1947 = vmatpush1.xpose.msra.mxu0 0.0
        %1948 = vmatprep.subr.mxu0 0.0
        %1949 = vmatpush1.xpose.msra.mxu0 0.0
        %1950 = vmatprep.subr.mxu0 0.0
        %1951 = vmatpush1.xpose.msra.mxu0 0.0
        %1952 = vmatprep.subr.mxu0 0.0
        %1953 = vmatpush1.xpose.msra.mxu0 0.0
        %1954 = vmatprep.subr.mxu0 0.0
        %1955 = vmatpush1.xpose.msra.mxu0 0.0
        %1956 = vmatprep.subr.mxu0 0.0
        %1957 = vmatpush1.xpose.msra.mxu0 0.0
        %1958 = vmatprep.subr.mxu0 0.0
        %1959 = vmatpush1.xpose.msra.mxu0 0.0
        %1960 = vmatprep.subr.mxu0 0.0
        %1961 = vmatpush1.xpose.msra.mxu0 0.0
        %1962 = vmatprep.subr.mxu0 0.0
        %1963 = vmatpush1.xpose.msra.mxu0 0.0
        %1964 = vmatprep.subr.mxu0 0.0
        %1965 = vmatpush1.xpose.msra.mxu0 0.0
        %1966 = vmatprep.subr.mxu0 0.0
        %1967 = vmatpush1.xpose.msra.mxu0 0.0
        %1968 = vmatprep.subr.mxu0 0.0
        %1969 = vmatpush1.xpose.msra.mxu0 0.0
        %1970 = vmatprep.subr.mxu0 0.0
        %1971 = vmatpush1.xpose.msra.mxu0 0.0
        %1972 = vmatprep.subr.mxu0 0.0
        %1973 = vmatpush1.xpose.msra.mxu0 0.0
        %1974 = vmatprep.subr.mxu0 0.0
        %1975 = vmatpush1.xpose.msra.mxu0 0.0
        %1976 = vmatprep.subr.mxu0 0.0
        %1977 = vmatpush1.xpose.msra.mxu0 0.0
        %1978 = vmatprep.mubr.f32.mxu0 0.0
        %1979 = vmatmul.mubr.f32.gmra.mrb[0].mxu0 %v1909
        %v1980 = vpop.f32.mrb[0].mxu0
        %v1981 = vadd.f32 0.0, %v1980
        %v1982 = vpop.f32.mrb[0].mxu0
        %1983 = vdwg.mxu0
        %v1984 = vsel %vm1679, %v1753, -inf
        %1985 = vmax.xlane.f32.xlu0 %v1984
        %v1986 = vpop.xlane.xlu0 %1985
        %v1987 = vsel %vm1679, %v1829, -inf
        %1988 = vmax.xlane.f32.xlu0 %v1987
        %v1989 = vpop.xlane.xlu0 %1988
        %v1990 = vsel %vm1679, %v1905, -inf
        %1991 = vmax.xlane.f32.xlu0 %v1990
        %v1992 = vpop.xlane.xlu0 %1991
        %v1993 = vsel %vm1679, %v1981, -inf
        %1994 = vmax.xlane.f32.xlu0 %v1993
        %v1995 = vpop.xlane.xlu0 %1994
        %v1996 = vsub.f32 %v1753, %v1986
        %v1997 = vsub.f32 %v1829, %v1989
        %v1998 = vsub.f32 %v1905, %v1992
        %v1999 = vsub.f32 %v1981, %v1995
        %v2000 = vmul.f32 %v1996, 1.442695
        %v2001 = vpow.pop %v2000
        %v2002 = vmul.f32 %v1997, 1.442695
        %v2003 = vpow.pop %v2002
        %v2004 = vmul.f32 %v1998, 1.442695
        %v2005 = vpow.pop %v2004
        %v2006 = vmul.f32 %v1999, 1.442695
        %v2007 = vpow.pop %v2006
        %v2008 = vsel %vm1679, %v2001, 0.0
        %2009 = vadd.xlane.f32.xlu0 %v2008
        %v2010 = vpop.xlane.xlu0 %2009
        %v2011 = vsel %vm1679, %v2003, 0.0
        %2012 = vadd.xlane.f32.xlu0 %v2011
        %v2013 = vpop.xlane.xlu0 %2012
        %v2014 = vsel %vm1679, %v2005, 0.0
        %2015 = vadd.xlane.f32.xlu0 %v2014
        %v2016 = vpop.xlane.xlu0 %2015
        %v2017 = vsel %vm1679, %v2007, 0.0
        %2018 = vadd.xlane.f32.xlu0 %v2017
        %v2019 = vpop.xlane.xlu0 %2018
        %v2020 = vrcp.pop %v2010
        %v2021 = vrcp.pop %v2013
        %v2022 = vrcp.pop %v2016
        %v2023 = vrcp.pop %v2019
        %v2024 = vmul.f32 %v2001, %v2020
        %v2025 = vmul.f32 %v2003, %v2021
        %v2026 = vmul.f32 %v2005, %v2022
        %v2027 = vmul.f32 %v2007, %v2023
        %v2029 = vsel %vm1679, %v2024, 0
        %2031 = vmatprep.subr.mxu0 0.0
        %2032 = vmatpush1.msra.mxu0 %v1461
        %2033 = vmatprep.subr.mxu0 0.0
        %2034 = vmatpush1.msra.mxu0 0.0
        %2035 = vmatprep.subr.mxu0 0.0
        %2036 = vmatpush1.msra.mxu0 0.0
        %2037 = vmatprep.subr.mxu0 0.0
        %2038 = vmatpush1.msra.mxu0 0.0
        %2039 = vmatprep.subr.mxu0 0.0
        %2040 = vmatpush1.msra.mxu0 0.0
        %2041 = vmatprep.subr.mxu0 0.0
        %2042 = vmatpush1.msra.mxu0 0.0
        %2043 = vmatprep.subr.mxu0 0.0
        %2044 = vmatpush1.msra.mxu0 0.0
        %2045 = vmatprep.subr.mxu0 0.0
        %2046 = vmatpush1.msra.mxu0 0.0
        %2047 = vmatprep.subr.mxu0 0.0
        %2048 = vmatpush1.msra.mxu0 0.0
        %2049 = vmatprep.subr.mxu0 0.0
        %2050 = vmatpush1.msra.mxu0 0.0
        %2051 = vmatprep.subr.mxu0 0.0
        %2052 = vmatpush1.msra.mxu0 0.0
        %2053 = vmatprep.subr.mxu0 0.0
        %2054 = vmatpush1.msra.mxu0 0.0
        %2055 = vmatprep.subr.mxu0 0.0
        %2056 = vmatpush1.msra.mxu0 0.0
        %2057 = vmatprep.subr.mxu0 0.0
        %2058 = vmatpush1.msra.mxu0 0.0
        %2059 = vmatprep.subr.mxu0 0.0
        %2060 = vmatpush1.msra.mxu0 0.0
        %2061 = vmatprep.subr.mxu0 0.0
        %2062 = vmatpush1.msra.mxu0 0.0
        %2063 = vmatprep.subr.mxu0 0.0
        %2064 = vmatpush1.msra.mxu0 0.0
        %2065 = vmatprep.subr.mxu0 0.0
        %2066 = vmatpush1.msra.mxu0 0.0
        %2067 = vmatprep.subr.mxu0 0.0
        %2068 = vmatpush1.msra.mxu0 0.0
        %2069 = vmatprep.subr.mxu0 0.0
        %2070 = vmatpush1.msra.mxu0 0.0
        %2071 = vmatprep.subr.mxu0 0.0
        %2072 = vmatpush1.msra.mxu0 0.0
        %2073 = vmatprep.subr.mxu0 0.0
        %2074 = vmatpush1.msra.mxu0 0.0
        %2075 = vmatprep.subr.mxu0 0.0
        %2076 = vmatpush1.msra.mxu0 0.0
        %2077 = vmatprep.subr.mxu0 0.0
        %2078 = vmatpush1.msra.mxu0 0.0
        %2079 = vmatprep.subr.mxu0 0.0
        %2080 = vmatpush1.msra.mxu0 0.0
        %2081 = vmatprep.subr.mxu0 0.0
        %2082 = vmatpush1.msra.mxu0 0.0
        %2083 = vmatprep.subr.mxu0 0.0
        %2084 = vmatpush1.msra.mxu0 0.0
        %2085 = vmatprep.subr.mxu0 0.0
        %2086 = vmatpush1.msra.mxu0 0.0
        %2087 = vmatprep.subr.mxu0 0.0
        %2088 = vmatpush1.msra.mxu0 0.0
        %2089 = vmatprep.subr.mxu0 0.0
        %2090 = vmatpush1.msra.mxu0 0.0
        %2091 = vmatprep.subr.mxu0 0.0
        %2092 = vmatpush1.msra.mxu0 0.0
        %2093 = vmatprep.subr.mxu0 0.0
        %2094 = vmatpush1.msra.mxu0 0.0
        %2095 = vmatprep.mubr.f32.mxu0 0.0
        %2096 = vmatmul.mubr.f32.gmra.mrb[0].mxu0 %v2029
        %v2097 = vpop.f32.mrb[0].mxu0
        %v2098 = vadd.f32 0.0, %v2097
        %v2099 = vpop.f32.mrb[0].mxu0
        %2100 = vdwg.mxu0
        %v2102 = vsel %vm1679, %v2025, 0
        %2104 = vmatprep.subr.mxu0 0.0
        %2105 = vmatpush1.msra.mxu0 %v1531
        %2106 = vmatprep.subr.mxu0 0.0
        %2107 = vmatpush1.msra.mxu0 0.0
        %2108 = vmatprep.subr.mxu0 0.0
        %2109 = vmatpush1.msra.mxu0 0.0
        %2110 = vmatprep.subr.mxu0 0.0
        %2111 = vmatpush1.msra.mxu0 0.0
        %2112 = vmatprep.subr.mxu0 0.0
        %2113 = vmatpush1.msra.mxu0 0.0
        %2114 = vmatprep.subr.mxu0 0.0
        %2115 = vmatpush1.msra.mxu0 0.0
        %2116 = vmatprep.subr.mxu0 0.0
        %2117 = vmatpush1.msra.mxu0 0.0
        %2118 = vmatprep.subr.mxu0 0.0
        %2119 = vmatpush1.msra.mxu0 0.0
        %2120 = vmatprep.subr.mxu0 0.0
        %2121 = vmatpush1.msra.mxu0 0.0
        %2122 = vmatprep.subr.mxu0 0.0
        %2123 = vmatpush1.msra.mxu0 0.0
        %2124 = vmatprep.subr.mxu0 0.0
        %2125 = vmatpush1.msra.mxu0 0.0
        %2126 = vmatprep.subr.mxu0 0.0
        %2127 = vmatpush1.msra.mxu0 0.0
        %2128 = vmatprep.subr.mxu0 0.0
        %2129 = vmatpush1.msra.mxu0 0.0
        %2130 = vmatprep.subr.mxu0 0.0
        %2131 = vmatpush1.msra.mxu0 0.0
        %2132 = vmatprep.subr.mxu0 0.0
        %2133 = vmatpush1.msra.mxu0 0.0
        %2134 = vmatprep.subr.mxu0 0.0
        %2135 = vmatpush1.msra.mxu0 0.0
        %2136 = vmatprep.subr.mxu0 0.0
        %2137 = vmatpush1.msra.mxu0 0.0
        %2138 = vmatprep.subr.mxu0 0.0
        %2139 = vmatpush1.msra.mxu0 0.0
        %2140 = vmatprep.subr.mxu0 0.0
        %2141 = vmatpush1.msra.mxu0 0.0
        %2142 = vmatprep.subr.mxu0 0.0
        %2143 = vmatpush1.msra.mxu0 0.0
        %2144 = vmatprep.subr.mxu0 0.0
        %2145 = vmatpush1.msra.mxu0 0.0
        %2146 = vmatprep.subr.mxu0 0.0
        %2147 = vmatpush1.msra.mxu0 0.0
        %2148 = vmatprep.subr.mxu0 0.0
        %2149 = vmatpush1.msra.mxu0 0.0
        %2150 = vmatprep.subr.mxu0 0.0
        %2151 = vmatpush1.msra.mxu0 0.0
        %2152 = vmatprep.subr.mxu0 0.0
        %2153 = vmatpush1.msra.mxu0 0.0
        %2154 = vmatprep.subr.mxu0 0.0
        %2155 = vmatpush1.msra.mxu0 0.0
        %2156 = vmatprep.subr.mxu0 0.0
        %2157 = vmatpush1.msra.mxu0 0.0
        %2158 = vmatprep.subr.mxu0 0.0
        %2159 = vmatpush1.msra.mxu0 0.0
        %2160 = vmatprep.subr.mxu0 0.0
        %2161 = vmatpush1.msra.mxu0 0.0
        %2162 = vmatprep.subr.mxu0 0.0
        %2163 = vmatpush1.msra.mxu0 0.0
        %2164 = vmatprep.subr.mxu0 0.0
        %2165 = vmatpush1.msra.mxu0 0.0
        %2166 = vmatprep.subr.mxu0 0.0
        %2167 = vmatpush1.msra.mxu0 0.0
        %2168 = vmatprep.mubr.f32.mxu0 0.0
        %2169 = vmatmul.mubr.f32.gmra.mrb[0].mxu0 %v2102
        %v2170 = vpop.f32.mrb[0].mxu0
        %v2171 = vadd.f32 0.0, %v2170
        %v2172 = vpop.f32.mrb[0].mxu0
        %2173 = vdwg.mxu0
        %v2175 = vsel %vm1679, %v2026, 0
        %2177 = vmatprep.subr.mxu0 0.0
        %2178 = vmatpush1.msra.mxu0 %v1601
        %2179 = vmatprep.subr.mxu0 0.0
        %2180 = vmatpush1.msra.mxu0 0.0
        %2181 = vmatprep.subr.mxu0 0.0
        %2182 = vmatpush1.msra.mxu0 0.0
        %2183 = vmatprep.subr.mxu0 0.0
        %2184 = vmatpush1.msra.mxu0 0.0
        %2185 = vmatprep.subr.mxu0 0.0
        %2186 = vmatpush1.msra.mxu0 0.0
        %2187 = vmatprep.subr.mxu0 0.0
        %2188 = vmatpush1.msra.mxu0 0.0
        %2189 = vmatprep.subr.mxu0 0.0
        %2190 = vmatpush1.msra.mxu0 0.0
        %2191 = vmatprep.subr.mxu0 0.0
        %2192 = vmatpush1.msra.mxu0 0.0
        %2193 = vmatprep.subr.mxu0 0.0
        %2194 = vmatpush1.msra.mxu0 0.0
        %2195 = vmatprep.subr.mxu0 0.0
        %2196 = vmatpush1.msra.mxu0 0.0
        %2197 = vmatprep.subr.mxu0 0.0
        %2198 = vmatpush1.msra.mxu0 0.0
        %2199 = vmatprep.subr.mxu0 0.0
        %2200 = vmatpush1.msra.mxu0 0.0
        %2201 = vmatprep.subr.mxu0 0.0
        %2202 = vmatpush1.msra.mxu0 0.0
        %2203 = vmatprep.subr.mxu0 0.0
        %2204 = vmatpush1.msra.mxu0 0.0
        %2205 = vmatprep.subr.mxu0 0.0
        %2206 = vmatpush1.msra.mxu0 0.0
        %2207 = vmatprep.subr.mxu0 0.0
        %2208 = vmatpush1.msra.mxu0 0.0
        %2209 = vmatprep.subr.mxu0 0.0
        %2210 = vmatpush1.msra.mxu0 0.0
        %2211 = vmatprep.subr.mxu0 0.0
        %2212 = vmatpush1.msra.mxu0 0.0
        %2213 = vmatprep.subr.mxu0 0.0
        %2214 = vmatpush1.msra.mxu0 0.0
        %2215 = vmatprep.subr.mxu0 0.0
        %2216 = vmatpush1.msra.mxu0 0.0
        %2217 = vmatprep.subr.mxu0 0.0
        %2218 = vmatpush1.msra.mxu0 0.0
        %2219 = vmatprep.subr.mxu0 0.0
        %2220 = vmatpush1.msra.mxu0 0.0
        %2221 = vmatprep.subr.mxu0 0.0
        %2222 = vmatpush1.msra.mxu0 0.0
        %2223 = vmatprep.subr.mxu0 0.0
        %2224 = vmatpush1.msra.mxu0 0.0
        %2225 = vmatprep.subr.mxu0 0.0
        %2226 = vmatpush1.msra.mxu0 0.0
        %2227 = vmatprep.subr.mxu0 0.0
        %2228 = vmatpush1.msra.mxu0 0.0
        %2229 = vmatprep.subr.mxu0 0.0
        %2230 = vmatpush1.msra.mxu0 0.0
        %2231 = vmatprep.subr.mxu0 0.0
        %2232 = vmatpush1.msra.mxu0 0.0
        %2233 = vmatprep.subr.mxu0 0.0
        %2234 = vmatpush1.msra.mxu0 0.0
        %2235 = vmatprep.subr.mxu0 0.0
        %2236 = vmatpush1.msra.mxu0 0.0
        %2237 = vmatprep.subr.mxu0 0.0
        %2238 = vmatpush1.msra.mxu0 0.0
        %2239 = vmatprep.subr.mxu0 0.0
        %2240 = vmatpush1.msra.mxu0 0.0
        %2241 = vmatprep.mubr.f32.mxu0 0.0
        %2242 = vmatmul.mubr.f32.gmra.mrb[0].mxu0 %v2175
        %v2243 = vpop.f32.mrb[0].mxu0
        %v2244 = vadd.f32 0.0, %v2243
        %v2245 = vpop.f32.mrb[0].mxu0
        %2246 = vdwg.mxu0
        %v2248 = vsel %vm1679, %v2027, 0
        %2250 = vmatprep.subr.mxu0 0.0
        %2251 = vmatpush1.msra.mxu0 %v1671
        %2252 = vmatprep.subr.mxu0 0.0
        %2253 = vmatpush1.msra.mxu0 0.0
        %2254 = vmatprep.subr.mxu0 0.0
        %2255 = vmatpush1.msra.mxu0 0.0
        %2256 = vmatprep.subr.mxu0 0.0
        %2257 = vmatpush1.msra.mxu0 0.0
        %2258 = vmatprep.subr.mxu0 0.0
        %2259 = vmatpush1.msra.mxu0 0.0
        %2260 = vmatprep.subr.mxu0 0.0
        %2261 = vmatpush1.msra.mxu0 0.0
        %2262 = vmatprep.subr.mxu0 0.0
        %2263 = vmatpush1.msra.mxu0 0.0
        %2264 = vmatprep.subr.mxu0 0.0
        %2265 = vmatpush1.msra.mxu0 0.0
        %2266 = vmatprep.subr.mxu0 0.0
        %2267 = vmatpush1.msra.mxu0 0.0
        %2268 = vmatprep.subr.mxu0 0.0
        %2269 = vmatpush1.msra.mxu0 0.0
        %2270 = vmatprep.subr.mxu0 0.0
        %2271 = vmatpush1.msra.mxu0 0.0
        %2272 = vmatprep.subr.mxu0 0.0
        %2273 = vmatpush1.msra.mxu0 0.0
        %2274 = vmatprep.subr.mxu0 0.0
        %2275 = vmatpush1.msra.mxu0 0.0
        %2276 = vmatprep.subr.mxu0 0.0
        %2277 = vmatpush1.msra.mxu0 0.0
        %2278 = vmatprep.subr.mxu0 0.0
        %2279 = vmatpush1.msra.mxu0 0.0
        %2280 = vmatprep.subr.mxu0 0.0
        %2281 = vmatpush1.msra.mxu0 0.0
        %2282 = vmatprep.subr.mxu0 0.0
        %2283 = vmatpush1.msra.mxu0 0.0
        %2284 = vmatprep.subr.mxu0 0.0
        %2285 = vmatpush1.msra.mxu0 0.0
        %2286 = vmatprep.subr.mxu0 0.0
        %2287 = vmatpush1.msra.mxu0 0.0
        %2288 = vmatprep.subr.mxu0 0.0
        %2289 = vmatpush1.msra.mxu0 0.0
        %2290 = vmatprep.subr.mxu0 0.0
        %2291 = vmatpush1.msra.mxu0 0.0
        %2292 = vmatprep.subr.mxu0 0.0
        %2293 = vmatpush1.msra.mxu0 0.0
        %2294 = vmatprep.subr.mxu0 0.0
        %2295 = vmatpush1.msra.mxu0 0.0
        %2296 = vmatprep.subr.mxu0 0.0
        %2297 = vmatpush1.msra.mxu0 0.0
        %2298 = vmatprep.subr.mxu0 0.0
        %2299 = vmatpush1.msra.mxu0 0.0
        %2300 = vmatprep.subr.mxu0 0.0
        %2301 = vmatpush1.msra.mxu0 0.0
        %2302 = vmatprep.subr.mxu0 0.0
        %2303 = vmatpush1.msra.mxu0 0.0
        %2304 = vmatprep.subr.mxu0 0.0
        %2305 = vmatpush1.msra.mxu0 0.0
        %2306 = vmatprep.subr.mxu0 0.0
        %2307 = vmatpush1.msra.mxu0 0.0
        %2308 = vmatprep.subr.mxu0 0.0
        %2309 = vmatpush1.msra.mxu0 0.0
        %2310 = vmatprep.subr.mxu0 0.0
        %2311 = vmatpush1.msra.mxu0 0.0
        %2312 = vmatprep.subr.mxu0 0.0
        %2313 = vmatpush1.msra.mxu0 0.0
        %2314 = vmatprep.mubr.f32.mxu0 0.0
        %2315 = vmatmul.mubr.f32.gmra.mrb[0].mxu0 %v2248
        %v2316 = vpop.f32.mrb[0].mxu0
        %v2317 = vadd.f32 0.0, %v2316
        %v2318 = vpop.f32.mrb[0].mxu0
        %2319 = vdwg.mxu0
        %v2321 = vsel %vm1679, %v2098, 0
        %2323 = vmatprep.subr.mxu0 0.0
        %2324 = vmatpush1.msra.mxu0 %v1674
        %2325 = vmatprep.subr.mxu0 0.0
        %2326 = vmatpush1.msra.mxu0 0.0
        %2327 = vmatprep.subr.mxu0 0.0
        %2328 = vmatpush1.msra.mxu0 0.0
        %2329 = vmatprep.subr.mxu0 0.0
        %2330 = vmatpush1.msra.mxu0 0.0
        %2331 = vmatprep.subr.mxu0 0.0
        %2332 = vmatpush1.msra.mxu0 0.0
        %2333 = vmatprep.subr.mxu0 0.0
        %2334 = vmatpush1.msra.mxu0 0.0
        %2335 = vmatprep.subr.mxu0 0.0
        %2336 = vmatpush1.msra.mxu0 0.0
        %2337 = vmatprep.subr.mxu0 0.0
        %2338 = vmatpush1.msra.mxu0 0.0
        %2339 = vmatprep.subr.mxu0 0.0
        %2340 = vmatpush1.msra.mxu0 0.0
        %2341 = vmatprep.subr.mxu0 0.0
        %2342 = vmatpush1.msra.mxu0 0.0
        %2343 = vmatprep.subr.mxu0 0.0
        %2344 = vmatpush1.msra.mxu0 0.0
        %2345 = vmatprep.subr.mxu0 0.0
        %2346 = vmatpush1.msra.mxu0 0.0
        %2347 = vmatprep.subr.mxu0 0.0
        %2348 = vmatpush1.msra.mxu0 0.0
        %2349 = vmatprep.subr.mxu0 0.0
        %2350 = vmatpush1.msra.mxu0 0.0
        %2351 = vmatprep.subr.mxu0 0.0
        %2352 = vmatpush1.msra.mxu0 0.0
        %2353 = vmatprep.subr.mxu0 0.0
        %2354 = vmatpush1.msra.mxu0 0.0
        %2355 = vmatprep.subr.mxu0 0.0
        %2356 = vmatpush1.msra.mxu0 0.0
        %2357 = vmatprep.subr.mxu0 0.0
        %2358 = vmatpush1.msra.mxu0 0.0
        %2359 = vmatprep.subr.mxu0 0.0
        %2360 = vmatpush1.msra.mxu0 0.0
        %2361 = vmatprep.subr.mxu0 0.0
        %2362 = vmatpush1.msra.mxu0 0.0
        %2363 = vmatprep.subr.mxu0 0.0
        %2364 = vmatpush1.msra.mxu0 0.0
        %2365 = vmatprep.subr.mxu0 0.0
        %2366 = vmatpush1.msra.mxu0 0.0
        %2367 = vmatprep.subr.mxu0 0.0
        %2368 = vmatpush1.msra.mxu0 0.0
        %2369 = vmatprep.subr.mxu0 0.0
        %2370 = vmatpush1.msra.mxu0 0.0
        %2371 = vmatprep.subr.mxu0 0.0
        %2372 = vmatpush1.msra.mxu0 0.0
        %2373 = vmatprep.subr.mxu0 0.0
        %2374 = vmatpush1.msra.mxu0 0.0
        %2375 = vmatprep.subr.mxu0 0.0
        %2376 = vmatpush1.msra.mxu0 0.0
        %2377 = vmatprep.subr.mxu0 0.0
        %2378 = vmatpush1.msra.mxu0 0.0
        %2379 = vmatprep.subr.mxu0 0.0
        %2380 = vmatpush1.msra.mxu0 0.0
        %2381 = vmatprep.subr.mxu0 0.0
        %2382 = vmatpush1.msra.mxu0 0.0
        %2383 = vmatprep.subr.mxu0 0.0
        %2384 = vmatpush1.msra.mxu0 0.0
        %2385 = vmatprep.subr.mxu0 0.0
        %2386 = vmatpush1.msra.mxu0 0.0
        %2387 = vmatprep.mubr.f32.mxu0 0.0
        %2388 = vmatmul.mubr.f32.gmra.mrb[0].mxu0 %v2321
        %v2389 = vpop.f32.mrb[0].mxu0
        %v2390 = vadd.f32 0.0, %v2389
        %v2391 = vpop.f32.mrb[0].mxu0
        %2392 = vdwg.mxu0
        %v2394 = vsel %vm1679, %v2171, 0
        %2396 = vmatprep.subr.mxu0 0.0
        %2397 = vmatpush1.msra.mxu0 %v1675
        %2398 = vmatprep.subr.mxu0 0.0
        %2399 = vmatpush1.msra.mxu0 0.0
        %2400 = vmatprep.subr.mxu0 0.0
        %2401 = vmatpush1.msra.mxu0 0.0
        %2402 = vmatprep.subr.mxu0 0.0
        %2403 = vmatpush1.msra.mxu0 0.0
        %2404 = vmatprep.subr.mxu0 0.0
        %2405 = vmatpush1.msra.mxu0 0.0
        %2406 = vmatprep.subr.mxu0 0.0
        %2407 = vmatpush1.msra.mxu0 0.0
        %2408 = vmatprep.subr.mxu0 0.0
        %2409 = vmatpush1.msra.mxu0 0.0
        %2410 = vmatprep.subr.mxu0 0.0
        %2411 = vmatpush1.msra.mxu0 0.0
        %2412 = vmatprep.subr.mxu0 0.0
        %2413 = vmatpush1.msra.mxu0 0.0
        %2414 = vmatprep.subr.mxu0 0.0
        %2415 = vmatpush1.msra.mxu0 0.0
        %2416 = vmatprep.subr.mxu0 0.0
        %2417 = vmatpush1.msra.mxu0 0.0
        %2418 = vmatprep.subr.mxu0 0.0
        %2419 = vmatpush1.msra.mxu0 0.0
        %2420 = vmatprep.subr.mxu0 0.0
        %2421 = vmatpush1.msra.mxu0 0.0
        %2422 = vmatprep.subr.mxu0 0.0
        %2423 = vmatpush1.msra.mxu0 0.0
        %2424 = vmatprep.subr.mxu0 0.0
        %2425 = vmatpush1.msra.mxu0 0.0
        %2426 = vmatprep.subr.mxu0 0.0
        %2427 = vmatpush1.msra.mxu0 0.0
        %2428 = vmatprep.subr.mxu0 0.0
        %2429 = vmatpush1.msra.mxu0 0.0
        %2430 = vmatprep.subr.mxu0 0.0
        %2431 = vmatpush1.msra.mxu0 0.0
        %2432 = vmatprep.subr.mxu0 0.0
        %2433 = vmatpush1.msra.mxu0 0.0
        %2434 = vmatprep.subr.mxu0 0.0
        %2435 = vmatpush1.msra.mxu0 0.0
        %2436 = vmatprep.subr.mxu0 0.0
        %2437 = vmatpush1.msra.mxu0 0.0
        %2438 = vmatprep.subr.mxu0 0.0
        %2439 = vmatpush1.msra.mxu0 0.0
        %2440 = vmatprep.subr.mxu0 0.0
        %2441 = vmatpush1.msra.mxu0 0.0
        %2442 = vmatprep.subr.mxu0 0.0
        %2443 = vmatpush1.msra.mxu0 0.0
        %2444 = vmatprep.subr.mxu0 0.0
        %2445 = vmatpush1.msra.mxu0 0.0
        %2446 = vmatprep.subr.mxu0 0.0
        %2447 = vmatpush1.msra.mxu0 0.0
        %2448 = vmatprep.subr.mxu0 0.0
        %2449 = vmatpush1.msra.mxu0 0.0
        %2450 = vmatprep.subr.mxu0 0.0
        %2451 = vmatpush1.msra.mxu0 0.0
        %2452 = vmatprep.subr.mxu0 0.0
        %2453 = vmatpush1.msra.mxu0 0.0
        %2454 = vmatprep.subr.mxu0 0.0
        %2455 = vmatpush1.msra.mxu0 0.0
        %2456 = vmatprep.subr.mxu0 0.0
        %2457 = vmatpush1.msra.mxu0 0.0
        %2458 = vmatprep.subr.mxu0 0.0
        %2459 = vmatpush1.msra.mxu0 0.0
        %2460 = vmatprep.mubr.f32.mxu0 0.0
        %2461 = vmatmul.mubr.f32.gmra.mrb[0].mxu0 %v2394
        %v2462 = vpop.f32.mrb[0].mxu0
        %v2463 = vadd.f32 0.0, %v2462
        %v2464 = vpop.f32.mrb[0].mxu0
        %2465 = vdwg.mxu0
        %v2467 = vsel %vm1679, %v2244, 0
        %2469 = vmatprep.subr.mxu0 0.0
        %2470 = vmatpush1.msra.mxu0 %v1676
        %2471 = vmatprep.subr.mxu0 0.0
        %2472 = vmatpush1.msra.mxu0 0.0
        %2473 = vmatprep.subr.mxu0 0.0
        %2474 = vmatpush1.msra.mxu0 0.0
        %2475 = vmatprep.subr.mxu0 0.0
        %2476 = vmatpush1.msra.mxu0 0.0
        %2477 = vmatprep.subr.mxu0 0.0
        %2478 = vmatpush1.msra.mxu0 0.0
        %2479 = vmatprep.subr.mxu0 0.0
        %2480 = vmatpush1.msra.mxu0 0.0
        %2481 = vmatprep.subr.mxu0 0.0
        %2482 = vmatpush1.msra.mxu0 0.0
        %2483 = vmatprep.subr.mxu0 0.0
        %2484 = vmatpush1.msra.mxu0 0.0
        %2485 = vmatprep.subr.mxu0 0.0
        %2486 = vmatpush1.msra.mxu0 0.0
        %2487 = vmatprep.subr.mxu0 0.0
        %2488 = vmatpush1.msra.mxu0 0.0
        %2489 = vmatprep.subr.mxu0 0.0
        %2490 = vmatpush1.msra.mxu0 0.0
        %2491 = vmatprep.subr.mxu0 0.0
        %2492 = vmatpush1.msra.mxu0 0.0
        %2493 = vmatprep.subr.mxu0 0.0
        %2494 = vmatpush1.msra.mxu0 0.0
        %2495 = vmatprep.subr.mxu0 0.0
        %2496 = vmatpush1.msra.mxu0 0.0
        %2497 = vmatprep.subr.mxu0 0.0
        %2498 = vmatpush1.msra.mxu0 0.0
        %2499 = vmatprep.subr.mxu0 0.0
        %2500 = vmatpush1.msra.mxu0 0.0
        %2501 = vmatprep.subr.mxu0 0.0
        %2502 = vmatpush1.msra.mxu0 0.0
        %2503 = vmatprep.subr.mxu0 0.0
        %2504 = vmatpush1.msra.mxu0 0.0
        %2505 = vmatprep.subr.mxu0 0.0
        %2506 = vmatpush1.msra.mxu0 0.0
        %2507 = vmatprep.subr.mxu0 0.0
        %2508 = vmatpush1.msra.mxu0 0.0
        %2509 = vmatprep.subr.mxu0 0.0
        %2510 = vmatpush1.msra.mxu0 0.0
        %2511 = vmatprep.subr.mxu0 0.0
        %2512 = vmatpush1.msra.mxu0 0.0
        %2513 = vmatprep.subr.mxu0 0.0
        %2514 = vmatpush1.msra.mxu0 0.0
        %2515 = vmatprep.subr.mxu0 0.0
        %2516 = vmatpush1.msra.mxu0 0.0
        %2517 = vmatprep.subr.mxu0 0.0
        %2518 = vmatpush1.msra.mxu0 0.0
        %2519 = vmatprep.subr.mxu0 0.0
        %2520 = vmatpush1.msra.mxu0 0.0
        %2521 = vmatprep.subr.mxu0 0.0
        %2522 = vmatpush1.msra.mxu0 0.0
        %2523 = vmatprep.subr.mxu0 0.0
        %2524 = vmatpush1.msra.mxu0 0.0
        %2525 = vmatprep.subr.mxu0 0.0
        %2526 = vmatpush1.msra.mxu0 0.0
        %2527 = vmatprep.subr.mxu0 0.0
        %2528 = vmatpush1.msra.mxu0 0.0
        %2529 = vmatprep.subr.mxu0 0.0
        %2530 = vmatpush1.msra.mxu0 0.0
        %2531 = vmatprep.subr.mxu0 0.0
        %2532 = vmatpush1.msra.mxu0 0.0
        %2533 = vmatprep.mubr.f32.mxu0 0.0
        %2534 = vmatmul.mubr.f32.gmra.mrb[0].mxu0 %v2467
        %v2535 = vpop.f32.mrb[0].mxu0
        %v2536 = vadd.f32 0.0, %v2535
        %v2537 = vpop.f32.mrb[0].mxu0
        %2538 = vdwg.mxu0
        %v2540 = vsel %vm1679, %v2317, 0
        %2542 = vmatprep.subr.mxu0 0.0
        %2543 = vmatpush1.msra.mxu0 %v1677
        %2544 = vmatprep.subr.mxu0 0.0
        %2545 = vmatpush1.msra.mxu0 0.0
        %2546 = vmatprep.subr.mxu0 0.0
        %2547 = vmatpush1.msra.mxu0 0.0
        %2548 = vmatprep.subr.mxu0 0.0
        %2549 = vmatpush1.msra.mxu0 0.0
        %2550 = vmatprep.subr.mxu0 0.0
        %2551 = vmatpush1.msra.mxu0 0.0
        %2552 = vmatprep.subr.mxu0 0.0
        %2553 = vmatpush1.msra.mxu0 0.0
        %2554 = vmatprep.subr.mxu0 0.0
        %2555 = vmatpush1.msra.mxu0 0.0
        %2556 = vmatprep.subr.mxu0 0.0
        %2557 = vmatpush1.msra.mxu0 0.0
        %2558 = vmatprep.subr.mxu0 0.0
        %2559 = vmatpush1.msra.mxu0 0.0
        %2560 = vmatprep.subr.mxu0 0.0
        %2561 = vmatpush1.msra.mxu0 0.0
        %2562 = vmatprep.subr.mxu0 0.0
        %2563 = vmatpush1.msra.mxu0 0.0
        %2564 = vmatprep.subr.mxu0 0.0
        %2565 = vmatpush1.msra.mxu0 0.0
        %2566 = vmatprep.subr.mxu0 0.0
        %2567 = vmatpush1.msra.mxu0 0.0
        %2568 = vmatprep.subr.mxu0 0.0
        %2569 = vmatpush1.msra.mxu0 0.0
        %2570 = vmatprep.subr.mxu0 0.0
        %2571 = vmatpush1.msra.mxu0 0.0
        %2572 = vmatprep.subr.mxu0 0.0
        %2573 = vmatpush1.msra.mxu0 0.0
        %2574 = vmatprep.subr.mxu0 0.0
        %2575 = vmatpush1.msra.mxu0 0.0
        %2576 = vmatprep.subr.mxu0 0.0
        %2577 = vmatpush1.msra.mxu0 0.0
        %2578 = vmatprep.subr.mxu0 0.0
        %2579 = vmatpush1.msra.mxu0 0.0
        %2580 = vmatprep.subr.mxu0 0.0
        %2581 = vmatpush1.msra.mxu0 0.0
        %2582 = vmatprep.subr.mxu0 0.0
        %2583 = vmatpush1.msra.mxu0 0.0
        %2584 = vmatprep.subr.mxu0 0.0
        %2585 = vmatpush1.msra.mxu0 0.0
        %2586 = vmatprep.subr.mxu0 0.0
        %2587 = vmatpush1.msra.mxu0 0.0
        %2588 = vmatprep.subr.mxu0 0.0
        %2589 = vmatpush1.msra.mxu0 0.0
        %2590 = vmatprep.subr.mxu0 0.0
        %2591 = vmatpush1.msra.mxu0 0.0
        %2592 = vmatprep.subr.mxu0 0.0
        %2593 = vmatpush1.msra.mxu0 0.0
        %2594 = vmatprep.subr.mxu0 0.0
        %2595 = vmatpush1.msra.mxu0 0.0
        %2596 = vmatprep.subr.mxu0 0.0
        %2597 = vmatpush1.msra.mxu0 0.0
        %2598 = vmatprep.subr.mxu0 0.0
        %2599 = vmatpush1.msra.mxu0 0.0
        %2600 = vmatprep.subr.mxu0 0.0
        %2601 = vmatpush1.msra.mxu0 0.0
        %2602 = vmatprep.subr.mxu0 0.0
        %2603 = vmatpush1.msra.mxu0 0.0
        %2604 = vmatprep.subr.mxu0 0.0
        %2605 = vmatpush1.msra.mxu0 0.0
        %2606 = vmatprep.mubr.f32.mxu0 0.0
        %2607 = vmatmul.mubr.f32.gmra.mrb[0].mxu0 %v2540
        %v2608 = vpop.f32.mrb[0].mxu0
        %v2609 = vadd.f32 0.0, %v2608
        %v2610 = vpop.f32.mrb[0].mxu0
        %2611 = vdwg.mxu0
        %v2612 = vsel %vm830, %v2390, 0.0
        %v2613 = vsel %vm830, %v2463, 0.0
        %v2614 = vadd.f32 %v2612, %v2613
        %v2615 = vsel %vm830, %v2536, 0.0
        %v2616 = vadd.f32 %v2614, %v2615
        %v2617 = vsel %vm830, %v2609, 0.0
        %v2618 = vadd.f32 %v2616, %v2617
        %v2620 = vlaneseq
        %v2621 = vshrl.u32 %v2620, 7
        %v2622 = vsub.s32 0, %v2621
        %v2623 = vrot.slane %v1678, %v2622
        %v2625 = vadd.f32 %v2618, %v2623
        %v2626 = vadd.f32 %v696, %v2625
        %v2627 = vld [vmem:[%s6] sm:$0x1]
        %v2628 = vld [vmem:[%s7] sm:$0x1]
        %v2629 = vsel %vm830, %v2626, 0.0
        %2630 = vadd.xlane.f32.xlu0 %v2629
        %v2631 = vpop.xlane.xlu0 %2630
        %v2632 = vrcp.pop 32.0
        %v2633 = vmul.f32 %v2631, %v2632
        %v2634 = vsub.f32 %v2626, %v2633
        %v2635 = vmul.f32 %v2634, %v2634
        %v2636 = vsel %vm830, %v2635, 0.0
        %2637 = vadd.xlane.f32.xlu0 %v2636
        %v2638 = vpop.xlane.xlu0 %2637
        %v2639 = vmul.f32 %v2638, %v2632
        %v2640 = vadd.f32 %v2639, 1e-05
        %v2641 = vrsqrt.pop %v2640
        %v2642 = vmul.f32 %v2634, %v2641
        %v2644 = vlaneseq
        %v2645 = vshrl.u32 %v2644, 7
        %v2646 = vsub.s32 0, %v2645
        %v2647 = vrot.slane %v2627, %v2646
        %v2649 = vmul.f32 %v2642, %v2647
        %v2651 = vlaneseq
        %v2652 = vshrl.u32 %v2651, 7
        %v2653 = vsub.s32 0, %v2652
        %v2654 = vrot.slane %v2628, %v2653
        %v2656 = vadd.f32 %v2649, %v2654
        %v2657 = vld [vmem:[%s8] sm:$0xff]
        %v2658 = vld [vmem:[%s8 + $0x8] sm:$0xff]
        %v2659 = vld [vmem:[%s8 + $0x10] sm:$0xff]
        %v2660 = vld [vmem:[%s8 + $0x18] sm:$0xff]
        %v2661 = vld [vmem:[%s8 + $0x20] sm:$0xff]
        %v2662 = vld [vmem:[%s8 + $0x28] sm:$0xff]
        %v2663 = vld [vmem:[%s8 + $0x30] sm:$0xff]
        %v2664 = vld [vmem:[%s8 + $0x38] sm:$0xff]
        %v2665 = vld [vmem:[%s8 + $0x40] sm:$0xff]
        %v2666 = vld [vmem:[%s8 + $0x48] sm:$0xff]
        %v2667 = vld [vmem:[%s8 + $0x50] sm:$0xff]
        %v2668 = vld [vmem:[%s8 + $0x58] sm:$0xff]
        %v2669 = vld [vmem:[%s8 + $0x60] sm:$0xff]
        %v2670 = vld [vmem:[%s8 + $0x68] sm:$0xff]
        %v2671 = vld [vmem:[%s8 + $0x70] sm:$0xff]
        %v2672 = vld [vmem:[%s8 + $0x78] sm:$0xff]
        %v2673 = vld [vmem:[%s9] sm:$0x1]
        %v2674 = vld [vmem:[%s9 + $0x1] sm:$0x1]
        %v2675 = vld [vmem:[%s9 + $0x2] sm:$0x1]
        %v2676 = vld [vmem:[%s9 + $0x3] sm:$0x1]
        %v2681 = vlaneseq
        %v2682 = vshrl.u32 %v2681, 7
        %v2683 = vsub.s32 0, %v2682
        %v2684 = vrot.slane %v2673, %v2683
        %v2685 = vlaneseq
        %v2686 = vshrl.u32 %v2685, 7
        %v2687 = vsub.s32 0, %v2686
        %v2688 = vrot.slane %v2674, %v2687
        %v2689 = vlaneseq
        %v2690 = vshrl.u32 %v2689, 7
        %v2691 = vsub.s32 0, %v2690
        %v2692 = vrot.slane %v2675, %v2691
        %v2693 = vlaneseq
        %v2694 = vshrl.u32 %v2693, 7
        %v2695 = vsub.s32 0, %v2694
        %v2696 = vrot.slane %v2676, %v2695
        %v2702 = vsel %vm830, %v2656, 0
        %2704 = vmatprep.subr.mxu0 0.0
        %2705 = vmatpush1.msra.mxu0 %v2657
        %2706 = vmatprep.subr.mxu0 0.0
        %2707 = vmatpush1.msra.mxu0 %v2658
        %2708 = vmatprep.subr.mxu0 0.0
        %2709 = vmatpush1.msra.mxu0 %v2659
        %2710 = vmatprep.subr.mxu0 0.0
        %2711 = vmatpush1.msra.mxu0 %v2660
        %2712 = vmatprep.subr.mxu0 0.0
        %2713 = vmatpush1.msra.mxu0 0.0
        %2714 = vmatprep.subr.mxu0 0.0
        %2715 = vmatpush1.msra.mxu0 0.0
        %2716 = vmatprep.subr.mxu0 0.0
        %2717 = vmatpush1.msra.mxu0 0.0
        %2718 = vmatprep.subr.mxu0 0.0
        %2719 = vmatpush1.msra.mxu0 0.0
        %2720 = vmatprep.subr.mxu0 0.0
        %2721 = vmatpush1.msra.mxu0 0.0
        %2722 = vmatprep.subr.mxu0 0.0
        %2723 = vmatpush1.msra.mxu0 0.0
        %2724 = vmatprep.subr.mxu0 0.0
        %2725 = vmatpush1.msra.mxu0 0.0
        %2726 = vmatprep.subr.mxu0 0.0
        %2727 = vmatpush1.msra.mxu0 0.0
        %2728 = vmatprep.subr.mxu0 0.0
        %2729 = vmatpush1.msra.mxu0 0.0
        %2730 = vmatprep.subr.mxu0 0.0
        %2731 = vmatpush1.msra.mxu0 0.0
        %2732 = vmatprep.subr.mxu0 0.0
        %2733 = vmatpush1.msra.mxu0 0.0
        %2734 = vmatprep.subr.mxu0 0.0
        %2735 = vmatpush1.msra.mxu0 0.0
        %2736 = vmatprep.subr.mxu0 0.0
        %2737 = vmatpush1.msra.mxu0 0.0
        %2738 = vmatprep.subr.mxu0 0.0
        %2739 = vmatpush1.msra.mxu0 0.0
        %2740 = vmatprep.subr.mxu0 0.0
        %2741 = vmatpush1.msra.mxu0 0.0
        %2742 = vmatprep.subr.mxu0 0.0
        %2743 = vmatpush1.msra.mxu0 0.0
        %2744 = vmatprep.subr.mxu0 0.0
        %2745 = vmatpush1.msra.mxu0 0.0
        %2746 = vmatprep.subr.mxu0 0.0
        %2747 = vmatpush1.msra.mxu0 0.0
        %2748 = vmatprep.subr.mxu0 0.0
        %2749 = vmatpush1.msra.mxu0 0.0
        %2750 = vmatprep.subr.mxu0 0.0
        %2751 = vmatpush1.msra.mxu0 0.0
        %2752 = vmatprep.subr.mxu0 0.0
        %2753 = vmatpush1.msra.mxu0 0.0
        %2754 = vmatprep.subr.mxu0 0.0
        %2755 = vmatpush1.msra.mxu0 0.0
        %2756 = vmatprep.subr.mxu0 0.0
        %2757 = vmatpush1.msra.mxu0 0.0
        %2758 = vmatprep.subr.mxu0 0.0
        %2759 = vmatpush1.msra.mxu0 0.0
        %2760 = vmatprep.subr.mxu0 0.0
        %2761 = vmatpush1.msra.mxu0 0.0
        %2762 = vmatprep.subr.mxu0 0.0
        %2763 = vmatpush1.msra.mxu0 0.0
        %2764 = vmatprep.subr.mxu0 0.0
        %2765 = vmatpush1.msra.mxu0 0.0
        %2766 = vmatprep.subr.mxu0 0.0
        %2767 = vmatpush1.msra.mxu0 0.0
        %2768 = vmatprep.mubr.f32.mxu0 0.0
        %2769 = vmatmul.mubr.f32.gmra.mrb[0].mxu0 %v2702
        %v2770 = vpop.f32.mrb[0].mxu0
        %v2771 = vadd.f32 %v2684, %v2770
        %v2772 = vpop.f32.mrb[0].mxu0
        %2773 = vdwg.mxu0
        %2774 = vmatprep.subr.mxu0 0.0
        %2775 = vmatpush1.msra.mxu0 %v2661
        %2776 = vmatprep.subr.mxu0 0.0
        %2777 = vmatpush1.msra.mxu0 %v2662
        %2778 = vmatprep.subr.mxu0 0.0
        %2779 = vmatpush1.msra.mxu0 %v2663
        %2780 = vmatprep.subr.mxu0 0.0
        %2781 = vmatpush1.msra.mxu0 %v2664
        %2782 = vmatprep.subr.mxu0 0.0
        %2783 = vmatpush1.msra.mxu0 0.0
        %2784 = vmatprep.subr.mxu0 0.0
        %2785 = vmatpush1.msra.mxu0 0.0
        %2786 = vmatprep.subr.mxu0 0.0
        %2787 = vmatpush1.msra.mxu0 0.0
        %2788 = vmatprep.subr.mxu0 0.0
        %2789 = vmatpush1.msra.mxu0 0.0
        %2790 = vmatprep.subr.mxu0 0.0
        %2791 = vmatpush1.msra.mxu0 0.0
        %2792 = vmatprep.subr.mxu0 0.0
        %2793 = vmatpush1.msra.mxu0 0.0
        %2794 = vmatprep.subr.mxu0 0.0
        %2795 = vmatpush1.msra.mxu0 0.0
        %2796 = vmatprep.subr.mxu0 0.0
        %2797 = vmatpush1.msra.mxu0 0.0
        %2798 = vmatprep.subr.mxu0 0.0
        %2799 = vmatpush1.msra.mxu0 0.0
        %2800 = vmatprep.subr.mxu0 0.0
        %2801 = vmatpush1.msra.mxu0 0.0
        %2802 = vmatprep.subr.mxu0 0.0
        %2803 = vmatpush1.msra.mxu0 0.0
        %2804 = vmatprep.subr.mxu0 0.0
        %2805 = vmatpush1.msra.mxu0 0.0
        %2806 = vmatprep.subr.mxu0 0.0
        %2807 = vmatpush1.msra.mxu0 0.0
        %2808 = vmatprep.subr.mxu0 0.0
        %2809 = vmatpush1.msra.mxu0 0.0
        %2810 = vmatprep.subr.mxu0 0.0
        %2811 = vmatpush1.msra.mxu0 0.0
        %2812 = vmatprep.subr.mxu0 0.0
        %2813 = vmatpush1.msra.mxu0 0.0
        %2814 = vmatprep.subr.mxu0 0.0
        %2815 = vmatpush1.msra.mxu0 0.0
        %2816 = vmatprep.subr.mxu0 0.0
        %2817 = vmatpush1.msra.mxu0 0.0
        %2818 = vmatprep.subr.mxu0 0.0
        %2819 = vmatpush1.msra.mxu0 0.0
        %2820 = vmatprep.subr.mxu0 0.0
        %2821 = vmatpush1.msra.mxu0 0.0
        %2822 = vmatprep.subr.mxu0 0.0
        %2823 = vmatpush1.msra.mxu0 0.0
        %2824 = vmatprep.subr.mxu0 0.0
        %2825 = vmatpush1.msra.mxu0 0.0
        %2826 = vmatprep.subr.mxu0 0.0
        %2827 = vmatpush1.msra.mxu0 0.0
        %2828 = vmatprep.subr.mxu0 0.0
        %2829 = vmatpush1.msra.mxu0 0.0
        %2830 = vmatprep.subr.mxu0 0.0
        %2831 = vmatpush1.msra.mxu0 0.0
        %2832 = vmatprep.subr.mxu0 0.0
        %2833 = vmatpush1.msra.mxu0 0.0
        %2834 = vmatprep.subr.mxu0 0.0
        %2835 = vmatpush1.msra.mxu0 0.0
        %2836 = vmatprep.subr.mxu0 0.0
        %2837 = vmatpush1.msra.mxu0 0.0
        %2838 = vmatprep.mubr.f32.mxu0 0.0
        %2839 = vmatmul.mubr.f32.gmra.mrb[0].mxu0 %v2702
        %v2840 = vpop.f32.mrb[0].mxu0
        %v2841 = vadd.f32 %v2688, %v2840
        %v2842 = vpop.f32.mrb[0].mxu0
        %2843 = vdwg.mxu0
        %2844 = vmatprep.subr.mxu0 0.0
        %2845 = vmatpush1.msra.mxu0 %v2665
        %2846 = vmatprep.subr.mxu0 0.0
        %2847 = vmatpush1.msra.mxu0 %v2666
        %2848 = vmatprep.subr.mxu0 0.0
        %2849 = vmatpush1.msra.mxu0 %v2667
        %2850 = vmatprep.subr.mxu0 0.0
        %2851 = vmatpush1.msra.mxu0 %v2668
        %2852 = vmatprep.subr.mxu0 0.0
        %2853 = vmatpush1.msra.mxu0 0.0
        %2854 = vmatprep.subr.mxu0 0.0
        %2855 = vmatpush1.msra.mxu0 0.0
        %2856 = vmatprep.subr.mxu0 0.0
        %2857 = vmatpush1.msra.mxu0 0.0
        %2858 = vmatprep.subr.mxu0 0.0
        %2859 = vmatpush1.msra.mxu0 0.0
        %2860 = vmatprep.subr.mxu0 0.0
        %2861 = vmatpush1.msra.mxu0 0.0
        %2862 = vmatprep.subr.mxu0 0.0
        %2863 = vmatpush1.msra.mxu0 0.0
        %2864 = vmatprep.subr.mxu0 0.0
        %2865 = vmatpush1.msra.mxu0 0.0
        %2866 = vmatprep.subr.mxu0 0.0
        %2867 = vmatpush1.msra.mxu0 0.0
        %2868 = vmatprep.subr.mxu0 0.0
        %2869 = vmatpush1.msra.mxu0 0.0
        %2870 = vmatprep.subr.mxu0 0.0
        %2871 = vmatpush1.msra.mxu0 0.0
        %2872 = vmatprep.subr.mxu0 0.0
        %2873 = vmatpush1.msra.mxu0 0.0
        %2874 = vmatprep.subr.mxu0 0.0
        %2875 = vmatpush1.msra.mxu0 0.0
        %2876 = vmatprep.subr.mxu0 0.0
        %2877 = vmatpush1.msra.mxu0 0.0
        %2878 = vmatprep.subr.mxu0 0.0
        %2879 = vmatpush1.msra.mxu0 0.0
        %2880 = vmatprep.subr.mxu0 0.0
        %2881 = vmatpush1.msra.mxu0 0.0
        %2882 = vmatprep.subr.mxu0 0.0
        %2883 = vmatpush1.msra.mxu0 0.0
        %2884 = vmatprep.subr.mxu0 0.0
        %2885 = vmatpush1.msra.mxu0 0.0
        %2886 = vmatprep.subr.mxu0 0.0
        %2887 = vmatpush1.msra.mxu0 0.0
        %2888 = vmatprep.subr.mxu0 0.0
        %2889 = vmatpush1.msra.mxu0 0.0
        %2890 = vmatprep.subr.mxu0 0.0
        %2891 = vmatpush1.msra.mxu0 0.0
        %2892 = vmatprep.subr.mxu0 0.0
        %2893 = vmatpush1.msra.mxu0 0.0
        %2894 = vmatprep.subr.mxu0 0.0
        %2895 = vmatpush1.msra.mxu0 0.0
        %2896 = vmatprep.subr.mxu0 0.0
        %2897 = vmatpush1.msra.mxu0 0.0
        %2898 = vmatprep.subr.mxu0 0.0
        %2899 = vmatpush1.msra.mxu0 0.0
        %2900 = vmatprep.subr.mxu0 0.0
        %2901 = vmatpush1.msra.mxu0 0.0
        %2902 = vmatprep.subr.mxu0 0.0
        %2903 = vmatpush1.msra.mxu0 0.0
        %2904 = vmatprep.subr.mxu0 0.0
        %2905 = vmatpush1.msra.mxu0 0.0
        %2906 = vmatprep.subr.mxu0 0.0
        %2907 = vmatpush1.msra.mxu0 0.0
        %2908 = vmatprep.mubr.f32.mxu0 0.0
        %2909 = vmatmul.mubr.f32.gmra.mrb[0].mxu0 %v2702
        %v2910 = vpop.f32.mrb[0].mxu0
        %v2911 = vadd.f32 %v2692, %v2910
        %v2912 = vpop.f32.mrb[0].mxu0
        %2913 = vdwg.mxu0
        %2914 = vmatprep.subr.mxu0 0.0
        %2915 = vmatpush1.msra.mxu0 %v2669
        %2916 = vmatprep.subr.mxu0 0.0
        %2917 = vmatpush1.msra.mxu0 %v2670
        %2918 = vmatprep.subr.mxu0 0.0
        %2919 = vmatpush1.msra.mxu0 %v2671
        %2920 = vmatprep.subr.mxu0 0.0
        %2921 = vmatpush1.msra.mxu0 %v2672
        %2922 = vmatprep.subr.mxu0 0.0
        %2923 = vmatpush1.msra.mxu0 0.0
        %2924 = vmatprep.subr.mxu0 0.0
        %2925 = vmatpush1.msra.mxu0 0.0
        %2926 = vmatprep.subr.mxu0 0.0
        %2927 = vmatpush1.msra.mxu0 0.0
        %2928 = vmatprep.subr.mxu0 0.0
        %2929 = vmatpush1.msra.mxu0 0.0
        %2930 = vmatprep.subr.mxu0 0.0
        %2931 = vmatpush1.msra.mxu0 0.0
        %2932 = vmatprep.subr.mxu0 0.0
        %2933 = vmatpush1.msra.mxu0 0.0
        %2934 = vmatprep.subr.mxu0 0.0
        %2935 = vmatpush1.msra.mxu0 0.0
        %2936 = vmatprep.subr.mxu0 0.0
        %2937 = vmatpush1.msra.mxu0 0.0
        %2938 = vmatprep.subr.mxu0 0.0
        %2939 = vmatpush1.msra.mxu0 0.0
        %2940 = vmatprep.subr.mxu0 0.0
        %2941 = vmatpush1.msra.mxu0 0.0
        %2942 = vmatprep.subr.mxu0 0.0
        %2943 = vmatpush1.msra.mxu0 0.0
        %2944 = vmatprep.subr.mxu0 0.0
        %2945 = vmatpush1.msra.mxu0 0.0
        %2946 = vmatprep.subr.mxu0 0.0
        %2947 = vmatpush1.msra.mxu0 0.0
        %2948 = vmatprep.subr.mxu0 0.0
        %2949 = vmatpush1.msra.mxu0 0.0
        %2950 = vmatprep.subr.mxu0 0.0
        %2951 = vmatpush1.msra.mxu0 0.0
        %2952 = vmatprep.subr.mxu0 0.0
        %2953 = vmatpush1.msra.mxu0 0.0
        %2954 = vmatprep.subr.mxu0 0.0
        %2955 = vmatpush1.msra.mxu0 0.0
        %2956 = vmatprep.subr.mxu0 0.0
        %2957 = vmatpush1.msra.mxu0 0.0
        %2958 = vmatprep.subr.mxu0 0.0
        %2959 = vmatpush1.msra.mxu0 0.0
        %2960 = vmatprep.subr.mxu0 0.0
        %2961 = vmatpush1.msra.mxu0 0.0
        %2962 = vmatprep.subr.mxu0 0.0
        %2963 = vmatpush1.msra.mxu0 0.0
        %2964 = vmatprep.subr.mxu0 0.0
        %2965 = vmatpush1.msra.mxu0 0.0
        %2966 = vmatprep.subr.mxu0 0.0
        %2967 = vmatpush1.msra.mxu0 0.0
        %2968 = vmatprep.subr.mxu0 0.0
        %2969 = vmatpush1.msra.mxu0 0.0
        %2970 = vmatprep.subr.mxu0 0.0
        %2971 = vmatpush1.msra.mxu0 0.0
        %2972 = vmatprep.subr.mxu0 0.0
        %2973 = vmatpush1.msra.mxu0 0.0
        %2974 = vmatprep.subr.mxu0 0.0
        %2975 = vmatpush1.msra.mxu0 0.0
        %2976 = vmatprep.subr.mxu0 0.0
        %2977 = vmatpush1.msra.mxu0 0.0
        %2978 = vmatprep.mubr.f32.mxu0 0.0
        %2979 = vmatmul.mubr.f32.gmra.mrb[0].mxu0 %v2702
        %v2980 = vpop.f32.mrb[0].mxu0
        %v2981 = vadd.f32 %v2696, %v2980
        %v2982 = vpop.f32.mrb[0].mxu0
        %2983 = vdwg.mxu0
        %v2984 = vld [vmem:[%s10] sm:$0xff]
        %v2985 = vld [vmem:[%s10 + $0x8] sm:$0xff]
        %v2986 = vld [vmem:[%s10 + $0x10] sm:$0xff]
        %v2987 = vld [vmem:[%s10 + $0x18] sm:$0xff]
        %v2988 = vld [vmem:[%s10 + $0x20] sm:$0xff]
        %v2989 = vld [vmem:[%s10 + $0x28] sm:$0xff]
        %v2990 = vld [vmem:[%s10 + $0x30] sm:$0xff]
        %v2991 = vld [vmem:[%s10 + $0x38] sm:$0xff]
        %v2992 = vld [vmem:[%s10 + $0x40] sm:$0xff]
        %v2993 = vld [vmem:[%s10 + $0x48] sm:$0xff]
        %v2994 = vld [vmem:[%s10 + $0x50] sm:$0xff]
        %v2995 = vld [vmem:[%s10 + $0x58] sm:$0xff]
        %v2996 = vld [vmem:[%s10 + $0x60] sm:$0xff]
        %v2997 = vld [vmem:[%s10 + $0x68] sm:$0xff]
        %v2998 = vld [vmem:[%s10 + $0x70] sm:$0xff]
        %v2999 = vld [vmem:[%s10 + $0x78] sm:$0xff]
        %v3000 = vld [vmem:[%s10 + $0x80] sm:$0xff]
        %v3001 = vld [vmem:[%s10 + $0x88] sm:$0xff]
        %v3002 = vld [vmem:[%s10 + $0x90] sm:$0xff]
        %v3003 = vld [vmem:[%s10 + $0x98] sm:$0xff]
        %v3004 = vld [vmem:[%s10 + $0xa0] sm:$0xff]
        %v3005 = vld [vmem:[%s10 + $0xa8] sm:$0xff]
        %v3006 = vld [vmem:[%s10 + $0xb0] sm:$0xff]
        %v3007 = vld [vmem:[%s10 + $0xb8] sm:$0xff]
        %v3008 = vld [vmem:[%s10 + $0xc0] sm:$0xff]
        %v3009 = vld [vmem:[%s10 + $0xc8] sm:$0xff]
        %v3010 = vld [vmem:[%s10 + $0xd0] sm:$0xff]
        %v3011 = vld [vmem:[%s10 + $0xd8] sm:$0xff]
        %v3012 = vld [vmem:[%s10 + $0xe0] sm:$0xff]
        %v3013 = vld [vmem:[%s10 + $0xe8] sm:$0xff]
        %v3014 = vld [vmem:[%s10 + $0xf0] sm:$0xff]
        %v3015 = vld [vmem:[%s10 + $0xf8] sm:$0xff]
        %v3016 = vld [vmem:[%s11] sm:$0x1]
        %v3017 = vld [vmem:[%s11 + $0x1] sm:$0x1]
        %v3018 = vld [vmem:[%s11 + $0x2] sm:$0x1]
        %v3019 = vld [vmem:[%s11 + $0x3] sm:$0x1]
        %v3020 = vld [vmem:[%s11 + $0x4] sm:$0x1]
        %v3021 = vld [vmem:[%s11 + $0x5] sm:$0x1]
        %v3022 = vld [vmem:[%s11 + $0x6] sm:$0x1]
        %v3023 = vld [vmem:[%s11 + $0x7] sm:$0x1]
        %v3032 = vlaneseq
        %v3033 = vshrl.u32 %v3032, 7
        %v3034 = vsub.s32 0, %v3033
        %v3035 = vrot.slane %v3016, %v3034
        %v3036 = vlaneseq
        %v3037 = vshrl.u32 %v3036, 7
        %v3038 = vsub.s32 0, %v3037
        %v3039 = vrot.slane %v3017, %v3038
        %v3040 = vlaneseq
        %v3041 = vshrl.u32 %v3040, 7
        %v3042 = vsub.s32 0, %v3041
        %v3043 = vrot.slane %v3018, %v3042
        %v3044 = vlaneseq
        %v3045 = vshrl.u32 %v3044, 7
        %v3046 = vsub.s32 0, %v3045
        %v3047 = vrot.slane %v3019, %v3046
        %v3048 = vlaneseq
        %v3049 = vshrl.u32 %v3048, 7
        %v3050 = vsub.s32 0, %v3049
        %v3051 = vrot.slane %v3020, %v3050
        %v3052 = vlaneseq
        %v3053 = vshrl.u32 %v3052, 7
        %v3054 = vsub.s32 0, %v3053
        %v3055 = vrot.slane %v3021, %v3054
        %v3056 = vlaneseq
        %v3057 = vshrl.u32 %v3056, 7
        %v3058 = vsub.s32 0, %v3057
        %v3059 = vrot.slane %v3022, %v3058
        %v3060 = vlaneseq
        %v3061 = vshrl.u32 %v3060, 7
        %v3062 = vsub.s32 0, %v3061
        %v3063 = vrot.slane %v3023, %v3062
        %v3073 = vsel %vm830, %v697, 0
        %3075 = vmatprep.subr.mxu0 0.0
        %3076 = vmatpush1.msra.mxu0 %v2984
        %3077 = vmatprep.subr.mxu0 0.0
        %3078 = vmatpush1.msra.mxu0 %v2985
        %3079 = vmatprep.subr.mxu0 0.0
        %3080 = vmatpush1.msra.mxu0 %v2986
        %3081 = vmatprep.subr.mxu0 0.0
        %3082 = vmatpush1.msra.mxu0 %v2987
        %3083 = vmatprep.subr.mxu0 0.0
        %3084 = vmatpush1.msra.mxu0 0.0
        %3085 = vmatprep.subr.mxu0 0.0
        %3086 = vmatpush1.msra.mxu0 0.0
        %3087 = vmatprep.subr.mxu0 0.0
        %3088 = vmatpush1.msra.mxu0 0.0
        %3089 = vmatprep.subr.mxu0 0.0
        %3090 = vmatpush1.msra.mxu0 0.0
        %3091 = vmatprep.subr.mxu0 0.0
        %3092 = vmatpush1.msra.mxu0 0.0
        %3093 = vmatprep.subr.mxu0 0.0
        %3094 = vmatpush1.msra.mxu0 0.0
        %3095 = vmatprep.subr.mxu0 0.0
        %3096 = vmatpush1.msra.mxu0 0.0
        %3097 = vmatprep.subr.mxu0 0.0
        %3098 = vmatpush1.msra.mxu0 0.0
        %3099 = vmatprep.subr.mxu0 0.0
        %3100 = vmatpush1.msra.mxu0 0.0
        %3101 = vmatprep.subr.mxu0 0.0
        %3102 = vmatpush1.msra.mxu0 0.0
        %3103 = vmatprep.subr.mxu0 0.0
        %3104 = vmatpush1.msra.mxu0 0.0
        %3105 = vmatprep.subr.mxu0 0.0
        %3106 = vmatpush1.msra.mxu0 0.0
        %3107 = vmatprep.subr.mxu0 0.0
        %3108 = vmatpush1.msra.mxu0 0.0
        %3109 = vmatprep.subr.mxu0 0.0
        %3110 = vmatpush1.msra.mxu0 0.0
        %3111 = vmatprep.subr.mxu0 0.0
        %3112 = vmatpush1.msra.mxu0 0.0
        %3113 = vmatprep.subr.mxu0 0.0
        %3114 = vmatpush1.msra.mxu0 0.0
        %3115 = vmatprep.subr.mxu0 0.0
        %3116 = vmatpush1.msra.mxu0 0.0
        %3117 = vmatprep.subr.mxu0 0.0
        %3118 = vmatpush1.msra.mxu0 0.0
        %3119 = vmatprep.subr.mxu0 0.0
        %3120 = vmatpush1.msra.mxu0 0.0
        %3121 = vmatprep.subr.mxu0 0.0
        %3122 = vmatpush1.msra.mxu0 0.0
        %3123 = vmatprep.subr.mxu0 0.0
        %3124 = vmatpush1.msra.mxu0 0.0
        %3125 = vmatprep.subr.mxu0 0.0
        %3126 = vmatpush1.msra.mxu0 0.0
        %3127 = vmatprep.subr.mxu0 0.0
        %3128 = vmatpush1.msra.mxu0 0.0
        %3129 = vmatprep.subr.mxu0 0.0
        %3130 = vmatpush1.msra.mxu0 0.0
        %3131 = vmatprep.subr.mxu0 0.0
        %3132 = vmatpush1.msra.mxu0 0.0
        %3133 = vmatprep.subr.mxu0 0.0
        %3134 = vmatpush1.msra.mxu0 0.0
        %3135 = vmatprep.subr.mxu0 0.0
        %3136 = vmatpush1.msra.mxu0 0.0
        %3137 = vmatprep.subr.mxu0 0.0
        %3138 = vmatpush1.msra.mxu0 0.0
        %3139 = vmatprep.mubr.f32.mxu0 0.0
        %3140 = vmatmul.mubr.f32.gmra.mrb[0].mxu0 %v3073
        %v3141 = vpop.f32.mrb[0].mxu0
        %v3142 = vadd.f32 %v3035, %v3141
        %v3143 = vpop.f32.mrb[0].mxu0
        %3144 = vdwg.mxu0
        %3145 = vmatprep.subr.mxu0 0.0
        %3146 = vmatpush1.msra.mxu0 %v2988
        %3147 = vmatprep.subr.mxu0 0.0
        %3148 = vmatpush1.msra.mxu0 %v2989
        %3149 = vmatprep.subr.mxu0 0.0
        %3150 = vmatpush1.msra.mxu0 %v2990
        %3151 = vmatprep.subr.mxu0 0.0
        %3152 = vmatpush1.msra.mxu0 %v2991
        %3153 = vmatprep.subr.mxu0 0.0
        %3154 = vmatpush1.msra.mxu0 0.0
        %3155 = vmatprep.subr.mxu0 0.0
        %3156 = vmatpush1.msra.mxu0 0.0
        %3157 = vmatprep.subr.mxu0 0.0
        %3158 = vmatpush1.msra.mxu0 0.0
        %3159 = vmatprep.subr.mxu0 0.0
        %3160 = vmatpush1.msra.mxu0 0.0
        %3161 = vmatprep.subr.mxu0 0.0
        %3162 = vmatpush1.msra.mxu0 0.0
        %3163 = vmatprep.subr.mxu0 0.0
        %3164 = vmatpush1.msra.mxu0 0.0
        %3165 = vmatprep.subr.mxu0 0.0
        %3166 = vmatpush1.msra.mxu0 0.0
        %3167 = vmatprep.subr.mxu0 0.0
        %3168 = vmatpush1.msra.mxu0 0.0
        %3169 = vmatprep.subr.mxu0 0.0
        %3170 = vmatpush1.msra.mxu0 0.0
        %3171 = vmatprep.subr.mxu0 0.0
        %3172 = vmatpush1.msra.mxu0 0.0
        %3173 = vmatprep.subr.mxu0 0.0
        %3174 = vmatpush1.msra.mxu0 0.0
        %3175 = vmatprep.subr.mxu0 0.0
        %3176 = vmatpush1.msra.mxu0 0.0
        %3177 = vmatprep.subr.mxu0 0.0
        %3178 = vmatpush1.msra.mxu0 0.0
        %3179 = vmatprep.subr.mxu0 0.0
        %3180 = vmatpush1.msra.mxu0 0.0
        %3181 = vmatprep.subr.mxu0 0.0
        %3182 = vmatpush1.msra.mxu0 0.0
        %3183 = vmatprep.subr.mxu0 0.0
        %3184 = vmatpush1.msra.mxu0 0.0
        %3185 = vmatprep.subr.mxu0 0.0
        %3186 = vmatpush1.msra.mxu0 0.0
        %3187 = vmatprep.subr.mxu0 0.0
        %3188 = vmatpush1.msra.mxu0 0.0
        %3189 = vmatprep.subr.mxu0 0.0
        %3190 = vmatpush1.msra.mxu0 0.0
        %3191 = vmatprep.subr.mxu0 0.0
        %3192 = vmatpush1.msra.mxu0 0.0
        %3193 = vmatprep.subr.mxu0 0.0
        %3194 = vmatpush1.msra.mxu0 0.0
        %3195 = vmatprep.subr.mxu0 0.0
        %3196 = vmatpush1.msra.mxu0 0.0
        %3197 = vmatprep.subr.mxu0 0.0
        %3198 = vmatpush1.msra.mxu0 0.0
        %3199 = vmatprep.subr.mxu0 0.0
        %3200 = vmatpush1.msra.mxu0 0.0
        %3201 = vmatprep.subr.mxu0 0.0
        %3202 = vmatpush1.msra.mxu0 0.0
        %3203 = vmatprep.subr.mxu0 0.0
        %3204 = vmatpush1.msra.mxu0 0.0
        %3205 = vmatprep.subr.mxu0 0.0
        %3206 = vmatpush1.msra.mxu0 0.0
        %3207 = vmatprep.subr.mxu0 0.0
        %3208 = vmatpush1.msra.mxu0 0.0
        %3209 = vmatprep.mubr.f32.mxu0 0.0
        %3210 = vmatmul.mubr.f32.gmra.mrb[0].mxu0 %v3073
        %v3211 = vpop.f32.mrb[0].mxu0
        %v3212 = vadd.f32 %v3039, %v3211
        %v3213 = vpop.f32.mrb[0].mxu0
        %3214 = vdwg.mxu0
        %3215 = vmatprep.subr.mxu0 0.0
        %3216 = vmatpush1.msra.mxu0 %v2992
        %3217 = vmatprep.subr.mxu0 0.0
        %3218 = vmatpush1.msra.mxu0 %v2993
        %3219 = vmatprep.subr.mxu0 0.0
        %3220 = vmatpush1.msra.mxu0 %v2994
        %3221 = vmatprep.subr.mxu0 0.0
        %3222 = vmatpush1.msra.mxu0 %v2995
        %3223 = vmatprep.subr.mxu0 0.0
        %3224 = vmatpush1.msra.mxu0 0.0
        %3225 = vmatprep.subr.mxu0 0.0
        %3226 = vmatpush1.msra.mxu0 0.0
        %3227 = vmatprep.subr.mxu0 0.0
        %3228 = vmatpush1.msra.mxu0 0.0
        %3229 = vmatprep.subr.mxu0 0.0
        %3230 = vmatpush1.msra.mxu0 0.0
        %3231 = vmatprep.subr.mxu0 0.0
        %3232 = vmatpush1.msra.mxu0 0.0
        %3233 = vmatprep.subr.mxu0 0.0
        %3234 = vmatpush1.msra.mxu0 0.0
        %3235 = vmatprep.subr.mxu0 0.0
        %3236 = vmatpush1.msra.mxu0 0.0
        %3237 = vmatprep.subr.mxu0 0.0
        %3238 = vmatpush1.msra.mxu0 0.0
        %3239 = vmatprep.subr.mxu0 0.0
        %3240 = vmatpush1.msra.mxu0 0.0
        %3241 = vmatprep.subr.mxu0 0.0
        %3242 = vmatpush1.msra.mxu0 0.0
        %3243 = vmatprep.subr.mxu0 0.0
        %3244 = vmatpush1.msra.mxu0 0.0
        %3245 = vmatprep.subr.mxu0 0.0
        %3246 = vmatpush1.msra.mxu0 0.0
        %3247 = vmatprep.subr.mxu0 0.0
        %3248 = vmatpush1.msra.mxu0 0.0
        %3249 = vmatprep.subr.mxu0 0.0
        %3250 = vmatpush1.msra.mxu0 0.0
        %3251 = vmatprep.subr.mxu0 0.0
        %3252 = vmatpush1.msra.mxu0 0.0
        %3253 = vmatprep.subr.mxu0 0.0
        %3254 = vmatpush1.msra.mxu0 0.0
        %3255 = vmatprep.subr.mxu0 0.0
        %3256 = vmatpush1.msra.mxu0 0.0
        %3257 = vmatprep.subr.mxu0 0.0
        %3258 = vmatpush1.msra.mxu0 0.0
        %3259 = vmatprep.subr.mxu0 0.0
        %3260 = vmatpush1.msra.mxu0 0.0
        %3261 = vmatprep.subr.mxu0 0.0
        %3262 = vmatpush1.msra.mxu0 0.0
        %3263 = vmatprep.subr.mxu0 0.0
        %3264 = vmatpush1.msra.mxu0 0.0
        %3265 = vmatprep.subr.mxu0 0.0
        %3266 = vmatpush1.msra.mxu0 0.0
        %3267 = vmatprep.subr.mxu0 0.0
        %3268 = vmatpush1.msra.mxu0 0.0
        %3269 = vmatprep.subr.mxu0 0.0
        %3270 = vmatpush1.msra.mxu0 0.0
        %3271 = vmatprep.subr.mxu0 0.0
        %3272 = vmatpush1.msra.mxu0 0.0
        %3273 = vmatprep.subr.mxu0 0.0
        %3274 = vmatpush1.msra.mxu0 0.0
        %3275 = vmatprep.subr.mxu0 0.0
        %3276 = vmatpush1.msra.mxu0 0.0
        %3277 = vmatprep.subr.mxu0 0.0
        %3278 = vmatpush1.msra.mxu0 0.0
        %3279 = vmatprep.mubr.f32.mxu0 0.0
        %3280 = vmatmul.mubr.f32.gmra.mrb[0].mxu0 %v3073
        %v3281 = vpop.f32.mrb[0].mxu0
        %v3282 = vadd.f32 %v3043, %v3281
        %v3283 = vpop.f32.mrb[0].mxu0
        %3284 = vdwg.mxu0
        %3285 = vmatprep.subr.mxu0 0.0
        %3286 = vmatpush1.msra.mxu0 %v2996
        %3287 = vmatprep.subr.mxu0 0.0
        %3288 = vmatpush1.msra.mxu0 %v2997
        %3289 = vmatprep.subr.mxu0 0.0
        %3290 = vmatpush1.msra.mxu0 %v2998
        %3291 = vmatprep.subr.mxu0 0.0
        %3292 = vmatpush1.msra.mxu0 %v2999
        %3293 = vmatprep.subr.mxu0 0.0
        %3294 = vmatpush1.msra.mxu0 0.0
        %3295 = vmatprep.subr.mxu0 0.0
        %3296 = vmatpush1.msra.mxu0 0.0
        %3297 = vmatprep.subr.mxu0 0.0
        %3298 = vmatpush1.msra.mxu0 0.0
        %3299 = vmatprep.subr.mxu0 0.0
        %3300 = vmatpush1.msra.mxu0 0.0
        %3301 = vmatprep.subr.mxu0 0.0
        %3302 = vmatpush1.msra.mxu0 0.0
        %3303 = vmatprep.subr.mxu0 0.0
        %3304 = vmatpush1.msra.mxu0 0.0
        %3305 = vmatprep.subr.mxu0 0.0
        %3306 = vmatpush1.msra.mxu0 0.0
        %3307 = vmatprep.subr.mxu0 0.0
        %3308 = vmatpush1.msra.mxu0 0.0
        %3309 = vmatprep.subr.mxu0 0.0
        %3310 = vmatpush1.msra.mxu0 0.0
        %3311 = vmatprep.subr.mxu0 0.0
        %3312 = vmatpush1.msra.mxu0 0.0
        %3313 = vmatprep.subr.mxu0 0.0
        %3314 = vmatpush1.msra.mxu0 0.0
        %3315 = vmatprep.subr.mxu0 0.0
        %3316 = vmatpush1.msra.mxu0 0.0
        %3317 = vmatprep.subr.mxu0 0.0
        %3318 = vmatpush1.msra.mxu0 0.0
        %3319 = vmatprep.subr.mxu0 0.0
        %3320 = vmatpush1.msra.mxu0 0.0
        %3321 = vmatprep.subr.mxu0 0.0
        %3322 = vmatpush1.msra.mxu0 0.0
        %3323 = vmatprep.subr.mxu0 0.0
        %3324 = vmatpush1.msra.mxu0 0.0
        %3325 = vmatprep.subr.mxu0 0.0
        %3326 = vmatpush1.msra.mxu0 0.0
        %3327 = vmatprep.subr.mxu0 0.0
        %3328 = vmatpush1.msra.mxu0 0.0
        %3329 = vmatprep.subr.mxu0 0.0
        %3330 = vmatpush1.msra.mxu0 0.0
        %3331 = vmatprep.subr.mxu0 0.0
        %3332 = vmatpush1.msra.mxu0 0.0
        %3333 = vmatprep.subr.mxu0 0.0
        %3334 = vmatpush1.msra.mxu0 0.0
        %3335 = vmatprep.subr.mxu0 0.0
        %3336 = vmatpush1.msra.mxu0 0.0
        %3337 = vmatprep.subr.mxu0 0.0
        %3338 = vmatpush1.msra.mxu0 0.0
        %3339 = vmatprep.subr.mxu0 0.0
        %3340 = vmatpush1.msra.mxu0 0.0
        %3341 = vmatprep.subr.mxu0 0.0
        %3342 = vmatpush1.msra.mxu0 0.0
        %3343 = vmatprep.subr.mxu0 0.0
        %3344 = vmatpush1.msra.mxu0 0.0
        %3345 = vmatprep.subr.mxu0 0.0
        %3346 = vmatpush1.msra.mxu0 0.0
        %3347 = vmatprep.subr.mxu0 0.0
        %3348 = vmatpush1.msra.mxu0 0.0
        %3349 = vmatprep.mubr.f32.mxu0 0.0
        %3350 = vmatmul.mubr.f32.gmra.mrb[0].mxu0 %v3073
        %v3351 = vpop.f32.mrb[0].mxu0
        %v3352 = vadd.f32 %v3047, %v3351
        %v3353 = vpop.f32.mrb[0].mxu0
        %3354 = vdwg.mxu0
        %3355 = vmatprep.subr.mxu0 0.0
        %3356 = vmatpush1.msra.mxu0 %v3000
        %3357 = vmatprep.subr.mxu0 0.0
        %3358 = vmatpush1.msra.mxu0 %v3001
        %3359 = vmatprep.subr.mxu0 0.0
        %3360 = vmatpush1.msra.mxu0 %v3002
        %3361 = vmatprep.subr.mxu0 0.0
        %3362 = vmatpush1.msra.mxu0 %v3003
        %3363 = vmatprep.subr.mxu0 0.0
        %3364 = vmatpush1.msra.mxu0 0.0
        %3365 = vmatprep.subr.mxu0 0.0
        %3366 = vmatpush1.msra.mxu0 0.0
        %3367 = vmatprep.subr.mxu0 0.0
        %3368 = vmatpush1.msra.mxu0 0.0
        %3369 = vmatprep.subr.mxu0 0.0
        %3370 = vmatpush1.msra.mxu0 0.0
        %3371 = vmatprep.subr.mxu0 0.0
        %3372 = vmatpush1.msra.mxu0 0.0
        %3373 = vmatprep.subr.mxu0 0.0
        %3374 = vmatpush1.msra.mxu0 0.0
        %3375 = vmatprep.subr.mxu0 0.0
        %3376 = vmatpush1.msra.mxu0 0.0
        %3377 = vmatprep.subr.mxu0 0.0
        %3378 = vmatpush1.msra.mxu0 0.0
        %3379 = vmatprep.subr.mxu0 0.0
        %3380 = vmatpush1.msra.mxu0 0.0
        %3381 = vmatprep.subr.mxu0 0.0
        %3382 = vmatpush1.msra.mxu0 0.0
        %3383 = vmatprep.subr.mxu0 0.0
        %3384 = vmatpush1.msra.mxu0 0.0
        %3385 = vmatprep.subr.mxu0 0.0
        %3386 = vmatpush1.msra.mxu0 0.0
        %3387 = vmatprep.subr.mxu0 0.0
        %3388 = vmatpush1.msra.mxu0 0.0
        %3389 = vmatprep.subr.mxu0 0.0
        %3390 = vmatpush1.msra.mxu0 0.0
        %3391 = vmatprep.subr.mxu0 0.0
        %3392 = vmatpush1.msra.mxu0 0.0
        %3393 = vmatprep.subr.mxu0 0.0
        %3394 = vmatpush1.msra.mxu0 0.0
        %3395 = vmatprep.subr.mxu0 0.0
        %3396 = vmatpush1.msra.mxu0 0.0
        %3397 = vmatprep.subr.mxu0 0.0
        %3398 = vmatpush1.msra.mxu0 0.0
        %3399 = vmatprep.subr.mxu0 0.0
        %3400 = vmatpush1.msra.mxu0 0.0
        %3401 = vmatprep.subr.mxu0 0.0
        %3402 = vmatpush1.msra.mxu0 0.0
        %3403 = vmatprep.subr.mxu0 0.0
        %3404 = vmatpush1.msra.mxu0 0.0
        %3405 = vmatprep.subr.mxu0 0.0
        %3406 = vmatpush1.msra.mxu0 0.0
        %3407 = vmatprep.subr.mxu0 0.0
        %3408 = vmatpush1.msra.mxu0 0.0
        %3409 = vmatprep.subr.mxu0 0.0
        %3410 = vmatpush1.msra.mxu0 0.0
        %3411 = vmatprep.subr.mxu0 0.0
        %3412 = vmatpush1.msra.mxu0 0.0
        %3413 = vmatprep.subr.mxu0 0.0
        %3414 = vmatpush1.msra.mxu0 0.0
        %3415 = vmatprep.subr.mxu0 0.0
        %3416 = vmatpush1.msra.mxu0 0.0
        %3417 = vmatprep.subr.mxu0 0.0
        %3418 = vmatpush1.msra.mxu0 0.0
        %3419 = vmatprep.mubr.f32.mxu0 0.0
        %3420 = vmatmul.mubr.f32.gmra.mrb[0].mxu0 %v3073
        %v3421 = vpop.f32.mrb[0].mxu0
        %v3422 = vadd.f32 %v3051, %v3421
        %v3423 = vpop.f32.mrb[0].mxu0
        %3424 = vdwg.mxu0
        %3425 = vmatprep.subr.mxu0 0.0
        %3426 = vmatpush1.msra.mxu0 %v3004
        %3427 = vmatprep.subr.mxu0 0.0
        %3428 = vmatpush1.msra.mxu0 %v3005
        %3429 = vmatprep.subr.mxu0 0.0
        %3430 = vmatpush1.msra.mxu0 %v3006
        %3431 = vmatprep.subr.mxu0 0.0
        %3432 = vmatpush1.msra.mxu0 %v3007
        %3433 = vmatprep.subr.mxu0 0.0
        %3434 = vmatpush1.msra.mxu0 0.0
        %3435 = vmatprep.subr.mxu0 0.0
        %3436 = vmatpush1.msra.mxu0 0.0
        %3437 = vmatprep.subr.mxu0 0.0
        %3438 = vmatpush1.msra.mxu0 0.0
        %3439 = vmatprep.subr.mxu0 0.0
        %3440 = vmatpush1.msra.mxu0 0.0
        %3441 = vmatprep.subr.mxu0 0.0
        %3442 = vmatpush1.msra.mxu0 0.0
        %3443 = vmatprep.subr.mxu0 0.0
        %3444 = vmatpush1.msra.mxu0 0.0
        %3445 = vmatprep.subr.mxu0 0.0
        %3446 = vmatpush1.msra.mxu0 0.0
        %3447 = vmatprep.subr.mxu0 0.0
        %3448 = vmatpush1.msra.mxu0 0.0
        %3449 = vmatprep.subr.mxu0 0.0
        %3450 = vmatpush1.msra.mxu0 0.0
        %3451 = vmatprep.subr.mxu0 0.0
        %3452 = vmatpush1.msra.mxu0 0.0
        %3453 = vmatprep.subr.mxu0 0.0
        %3454 = vmatpush1.msra.mxu0 0.0
        %3455 = vmatprep.subr.mxu0 0.0
        %3456 = vmatpush1.msra.mxu0 0.0
        %3457 = vmatprep.subr.mxu0 0.0
        %3458 = vmatpush1.msra.mxu0 0.0
        %3459 = vmatprep.subr.mxu0 0.0
        %3460 = vmatpush1.msra.mxu0 0.0
        %3461 = vmatprep.subr.mxu0 0.0
        %3462 = vmatpush1.msra.mxu0 0.0
        %3463 = vmatprep.subr.mxu0 0.0
        %3464 = vmatpush1.msra.mxu0 0.0
        %3465 = vmatprep.subr.mxu0 0.0
        %3466 = vmatpush1.msra.mxu0 0.0
        %3467 = vmatprep.subr.mxu0 0.0
        %3468 = vmatpush1.msra.mxu0 0.0
        %3469 = vmatprep.subr.mxu0 0.0
        %3470 = vmatpush1.msra.mxu0 0.0
        %3471 = vmatprep.subr.mxu0 0.0
        %3472 = vmatpush1.msra.mxu0 0.0
        %3473 = vmatprep.subr.mxu0 0.0
        %3474 = vmatpush1.msra.mxu0 0.0
        %3475 = vmatprep.subr.mxu0 0.0
        %3476 = vmatpush1.msra.mxu0 0.0
        %3477 = vmatprep.subr.mxu0 0.0
        %3478 = vmatpush1.msra.mxu0 0.0
        %3479 = vmatprep.subr.mxu0 0.0
        %3480 = vmatpush1.msra.mxu0 0.0
        %3481 = vmatprep.subr.mxu0 0.0
        %3482 = vmatpush1.msra.mxu0 0.0
        %3483 = vmatprep.subr.mxu0 0.0
        %3484 = vmatpush1.msra.mxu0 0.0
        %3485 = vmatprep.subr.mxu0 0.0
        %3486 = vmatpush1.msra.mxu0 0.0
        %3487 = vmatprep.subr.mxu0 0.0
        %3488 = vmatpush1.msra.mxu0 0.0
        %3489 = vmatprep.mubr.f32.mxu0 0.0
        %3490 = vmatmul.mubr.f32.gmra.mrb[0].mxu0 %v3073
        %v3491 = vpop.f32.mrb[0].mxu0
        %v3492 = vadd.f32 %v3055, %v3491
        %v3493 = vpop.f32.mrb[0].mxu0
        %3494 = vdwg.mxu0
        %3495 = vmatprep.subr.mxu0 0.0
        %3496 = vmatpush1.msra.mxu0 %v3008
        %3497 = vmatprep.subr.mxu0 0.0
        %3498 = vmatpush1.msra.mxu0 %v3009
        %3499 = vmatprep.subr.mxu0 0.0
        %3500 = vmatpush1.msra.mxu0 %v3010
        %3501 = vmatprep.subr.mxu0 0.0
        %3502 = vmatpush1.msra.mxu0 %v3011
        %3503 = vmatprep.subr.mxu0 0.0
        %3504 = vmatpush1.msra.mxu0 0.0
        %3505 = vmatprep.subr.mxu0 0.0
        %3506 = vmatpush1.msra.mxu0 0.0
        %3507 = vmatprep.subr.mxu0 0.0
        %3508 = vmatpush1.msra.mxu0 0.0
        %3509 = vmatprep.subr.mxu0 0.0
        %3510 = vmatpush1.msra.mxu0 0.0
        %3511 = vmatprep.subr.mxu0 0.0
        %3512 = vmatpush1.msra.mxu0 0.0
        %3513 = vmatprep.subr.mxu0 0.0
        %3514 = vmatpush1.msra.mxu0 0.0
        %3515 = vmatprep.subr.mxu0 0.0
        %3516 = vmatpush1.msra.mxu0 0.0
        %3517 = vmatprep.subr.mxu0 0.0
        %3518 = vmatpush1.msra.mxu0 0.0
        %3519 = vmatprep.subr.mxu0 0.0
        %3520 = vmatpush1.msra.mxu0 0.0
        %3521 = vmatprep.subr.mxu0 0.0
        %3522 = vmatpush1.msra.mxu0 0.0
        %3523 = vmatprep.subr.mxu0 0.0
        %3524 = vmatpush1.msra.mxu0 0.0
        %3525 = vmatprep.subr.mxu0 0.0
        %3526 = vmatpush1.msra.mxu0 0.0
        %3527 = vmatprep.subr.mxu0 0.0
        %3528 = vmatpush1.msra.mxu0 0.0
        %3529 = vmatprep.subr.mxu0 0.0
        %3530 = vmatpush1.msra.mxu0 0.0
        %3531 = vmatprep.subr.mxu0 0.0
        %3532 = vmatpush1.msra.mxu0 0.0
        %3533 = vmatprep.subr.mxu0 0.0
        %3534 = vmatpush1.msra.mxu0 0.0
        %3535 = vmatprep.subr.mxu0 0.0
        %3536 = vmatpush1.msra.mxu0 0.0
        %3537 = vmatprep.subr.mxu0 0.0
        %3538 = vmatpush1.msra.mxu0 0.0
        %3539 = vmatprep.subr.mxu0 0.0
        %3540 = vmatpush1.msra.mxu0 0.0
        %3541 = vmatprep.subr.mxu0 0.0
        %3542 = vmatpush1.msra.mxu0 0.0
        %3543 = vmatprep.subr.mxu0 0.0
        %3544 = vmatpush1.msra.mxu0 0.0
        %3545 = vmatprep.subr.mxu0 0.0
        %3546 = vmatpush1.msra.mxu0 0.0
        %3547 = vmatprep.subr.mxu0 0.0
        %3548 = vmatpush1.msra.mxu0 0.0
        %3549 = vmatprep.subr.mxu0 0.0
        %3550 = vmatpush1.msra.mxu0 0.0
        %3551 = vmatprep.subr.mxu0 0.0
        %3552 = vmatpush1.msra.mxu0 0.0
        %3553 = vmatprep.subr.mxu0 0.0
        %3554 = vmatpush1.msra.mxu0 0.0
        %3555 = vmatprep.subr.mxu0 0.0
        %3556 = vmatpush1.msra.mxu0 0.0
        %3557 = vmatprep.subr.mxu0 0.0
        %3558 = vmatpush1.msra.mxu0 0.0
        %3559 = vmatprep.mubr.f32.mxu0 0.0
        %3560 = vmatmul.mubr.f32.gmra.mrb[0].mxu0 %v3073
        %v3561 = vpop.f32.mrb[0].mxu0
        %v3562 = vadd.f32 %v3059, %v3561
        %v3563 = vpop.f32.mrb[0].mxu0
        %3564 = vdwg.mxu0
        %3565 = vmatprep.subr.mxu0 0.0
        %3566 = vmatpush1.msra.mxu0 %v3012
        %3567 = vmatprep.subr.mxu0 0.0
        %3568 = vmatpush1.msra.mxu0 %v3013
        %3569 = vmatprep.subr.mxu0 0.0
        %3570 = vmatpush1.msra.mxu0 %v3014
        %3571 = vmatprep.subr.mxu0 0.0
        %3572 = vmatpush1.msra.mxu0 %v3015
        %3573 = vmatprep.subr.mxu0 0.0
        %3574 = vmatpush1.msra.mxu0 0.0
        %3575 = vmatprep.subr.mxu0 0.0
        %3576 = vmatpush1.msra.mxu0 0.0
        %3577 = vmatprep.subr.mxu0 0.0
        %3578 = vmatpush1.msra.mxu0 0.0
        %3579 = vmatprep.subr.mxu0 0.0
        %3580 = vmatpush1.msra.mxu0 0.0
        %3581 = vmatprep.subr.mxu0 0.0
        %3582 = vmatpush1.msra.mxu0 0.0
        %3583 = vmatprep.subr.mxu0 0.0
        %3584 = vmatpush1.msra.mxu0 0.0
        %3585 = vmatprep.subr.mxu0 0.0
        %3586 = vmatpush1.msra.mxu0 0.0
        %3587 = vmatprep.subr.mxu0 0.0
        %3588 = vmatpush1.msra.mxu0 0.0
        %3589 = vmatprep.subr.mxu0 0.0
        %3590 = vmatpush1.msra.mxu0 0.0
        %3591 = vmatprep.subr.mxu0 0.0
        %3592 = vmatpush1.msra.mxu0 0.0
        %3593 = vmatprep.subr.mxu0 0.0
        %3594 = vmatpush1.msra.mxu0 0.0
        %3595 = vmatprep.subr.mxu0 0.0
        %3596 = vmatpush1.msra.mxu0 0.0
        %3597 = vmatprep.subr.mxu0 0.0
        %3598 = vmatpush1.msra.mxu0 0.0
        %3599 = vmatprep.subr.mxu0 0.0
        %3600 = vmatpush1.msra.mxu0 0.0
        %3601 = vmatprep.subr.mxu0 0.0
        %3602 = vmatpush1.msra.mxu0 0.0
        %3603 = vmatprep.subr.mxu0 0.0
        %3604 = vmatpush1.msra.mxu0 0.0
        %3605 = vmatprep.subr.mxu0 0.0
        %3606 = vmatpush1.msra.mxu0 0.0
        %3607 = vmatprep.subr.mxu0 0.0
        %3608 = vmatpush1.msra.mxu0 0.0
        %3609 = vmatprep.subr.mxu0 0.0
        %3610 = vmatpush1.msra.mxu0 0.0
        %3611 = vmatprep.subr.mxu0 0.0
        %3612 = vmatpush1.msra.mxu0 0.0
        %3613 = vmatprep.subr.mxu0 0.0
        %3614 = vmatpush1.msra.mxu0 0.0
        %3615 = vmatprep.subr.mxu0 0.0
        %3616 = vmatpush1.msra.mxu0 0.0
        %3617 = vmatprep.subr.mxu0 0.0
        %3618 = vmatpush1.msra.mxu0 0.0
        %3619 = vmatprep.subr.mxu0 0.0
        %3620 = vmatpush1.msra.mxu0 0.0
        %3621 = vmatprep.subr.mxu0 0.0
        %3622 = vmatpush1.msra.mxu0 0.0
        %3623 = vmatprep.subr.mxu0 0.0
        %3624 = vmatpush1.msra.mxu0 0.0
        %3625 = vmatprep.subr.mxu0 0.0
        %3626 = vmatpush1.msra.mxu0 0.0
        %3627 = vmatprep.subr.mxu0 0.0
        %3628 = vmatpush1.msra.mxu0 0.0
        %3629 = vmatprep.mubr.f32.mxu0 0.0
        %3630 = vmatmul.mubr.f32.gmra.mrb[0].mxu0 %v3073
        %v3631 = vpop.f32.mrb[0].mxu0
        %v3632 = vadd.f32 %v3063, %v3631
        %v3633 = vpop.f32.mrb[0].mxu0
        %3634 = vdwg.mxu0
        %v3635 = vld [vmem:[%s12] sm:$0xff]
        %v3636 = vld [vmem:[%s12 + $0x8] sm:$0xff]
        %v3637 = vld [vmem:[%s12 + $0x10] sm:$0xff]
        %v3638 = vld [vmem:[%s12 + $0x18] sm:$0xff]
        %v3639 = vld [vmem:[%s13] sm:$0x1]
        %v3641 = vsel %vm1679, %v2771, 0
        %v3644 = vsel %vm1679, %v3142, 0
        %3646 = vmatprep.subr.mxu0 0.0
        %3647 = vmatpush1.xpose.msra.mxu0 %v3644
        %3648 = vmatprep.subr.mxu0 0.0
        %3649 = vmatpush1.xpose.msra.mxu0 0.0
        %3650 = vmatprep.subr.mxu0 0.0
        %3651 = vmatpush1.xpose.msra.mxu0 0.0
        %3652 = vmatprep.subr.mxu0 0.0
        %3653 = vmatpush1.xpose.msra.mxu0 0.0
        %3654 = vmatprep.subr.mxu0 0.0
        %3655 = vmatpush1.xpose.msra.mxu0 0.0
        %3656 = vmatprep.subr.mxu0 0.0
        %3657 = vmatpush1.xpose.msra.mxu0 0.0
        %3658 = vmatprep.subr.mxu0 0.0
        %3659 = vmatpush1.xpose.msra.mxu0 0.0
        %3660 = vmatprep.subr.mxu0 0.0
        %3661 = vmatpush1.xpose.msra.mxu0 0.0
        %3662 = vmatprep.subr.mxu0 0.0
        %3663 = vmatpush1.xpose.msra.mxu0 0.0
        %3664 = vmatprep.subr.mxu0 0.0
        %3665 = vmatpush1.xpose.msra.mxu0 0.0
        %3666 = vmatprep.subr.mxu0 0.0
        %3667 = vmatpush1.xpose.msra.mxu0 0.0
        %3668 = vmatprep.subr.mxu0 0.0
        %3669 = vmatpush1.xpose.msra.mxu0 0.0
        %3670 = vmatprep.subr.mxu0 0.0
        %3671 = vmatpush1.xpose.msra.mxu0 0.0
        %3672 = vmatprep.subr.mxu0 0.0
        %3673 = vmatpush1.xpose.msra.mxu0 0.0
        %3674 = vmatprep.subr.mxu0 0.0
        %3675 = vmatpush1.xpose.msra.mxu0 0.0
        %3676 = vmatprep.subr.mxu0 0.0
        %3677 = vmatpush1.xpose.msra.mxu0 0.0
        %3678 = vmatprep.subr.mxu0 0.0
        %3679 = vmatpush1.xpose.msra.mxu0 0.0
        %3680 = vmatprep.subr.mxu0 0.0
        %3681 = vmatpush1.xpose.msra.mxu0 0.0
        %3682 = vmatprep.subr.mxu0 0.0
        %3683 = vmatpush1.xpose.msra.mxu0 0.0
        %3684 = vmatprep.subr.mxu0 0.0
        %3685 = vmatpush1.xpose.msra.mxu0 0.0
        %3686 = vmatprep.subr.mxu0 0.0
        %3687 = vmatpush1.xpose.msra.mxu0 0.0
        %3688 = vmatprep.subr.mxu0 0.0
        %3689 = vmatpush1.xpose.msra.mxu0 0.0
        %3690 = vmatprep.subr.mxu0 0.0
        %3691 = vmatpush1.xpose.msra.mxu0 0.0
        %3692 = vmatprep.subr.mxu0 0.0
        %3693 = vmatpush1.xpose.msra.mxu0 0.0
        %3694 = vmatprep.subr.mxu0 0.0
        %3695 = vmatpush1.xpose.msra.mxu0 0.0
        %3696 = vmatprep.subr.mxu0 0.0
        %3697 = vmatpush1.xpose.msra.mxu0 0.0
        %3698 = vmatprep.subr.mxu0 0.0
        %3699 = vmatpush1.xpose.msra.mxu0 0.0
        %3700 = vmatprep.subr.mxu0 0.0
        %3701 = vmatpush1.xpose.msra.mxu0 0.0
        %3702 = vmatprep.subr.mxu0 0.0
        %3703 = vmatpush1.xpose.msra.mxu0 0.0
        %3704 = vmatprep.subr.mxu0 0.0
        %3705 = vmatpush1.xpose.msra.mxu0 0.0
        %3706 = vmatprep.subr.mxu0 0.0
        %3707 = vmatpush1.xpose.msra.mxu0 0.0
        %3708 = vmatprep.subr.mxu0 0.0
        %3709 = vmatpush1.xpose.msra.mxu0 0.0
        %3710 = vmatprep.mubr.f32.mxu0 0.0
        %3711 = vmatmul.mubr.f32.gmra.mrb[0].mxu0 %v3641
        %v3712 = vpop.f32.mrb[0].mxu0
        %v3713 = vadd.f32 0.0, %v3712
        %v3714 = vpop.f32.mrb[0].mxu0
        %3715 = vdwg.mxu0
        %v3717 = vsel %vm1679, %v2841, 0
        %v3720 = vsel %vm1679, %v3212, 0
        %3722 = vmatprep.subr.mxu0 0.0
        %3723 = vmatpush1.xpose.msra.mxu0 %v3720
        %3724 = vmatprep.subr.mxu0 0.0
        %3725 = vmatpush1.xpose.msra.mxu0 0.0
        %3726 = vmatprep.subr.mxu0 0.0
        %3727 = vmatpush1.xpose.msra.mxu0 0.0
        %3728 = vmatprep.subr.mxu0 0.0
        %3729 = vmatpush1.xpose.msra.mxu0 0.0
        %3730 = vmatprep.subr.mxu0 0.0
        %3731 = vmatpush1.xpose.msra.mxu0 0.0
        %3732 = vmatprep.subr.mxu0 0.0
        %3733 = vmatpush1.xpose.msra.mxu0 0.0
        %3734 = vmatprep.subr.mxu0 0.0
        %3735 = vmatpush1.xpose.msra.mxu0 0.0
        %3736 = vmatprep.subr.mxu0 0.0
        %3737 = vmatpush1.xpose.msra.mxu0 0.0
        %3738 = vmatprep.subr.mxu0 0.0
        %3739 = vmatpush1.xpose.msra.mxu0 0.0
        %3740 = vmatprep.subr.mxu0 0.0
        %3741 = vmatpush1.xpose.msra.mxu0 0.0
        %3742 = vmatprep.subr.mxu0 0.0
        %3743 = vmatpush1.xpose.msra.mxu0 0.0
        %3744 = vmatprep.subr.mxu0 0.0
        %3745 = vmatpush1.xpose.msra.mxu0 0.0
        %3746 = vmatprep.subr.mxu0 0.0
        %3747 = vmatpush1.xpose.msra.mxu0 0.0
        %3748 = vmatprep.subr.mxu0 0.0
        %3749 = vmatpush1.xpose.msra.mxu0 0.0
        %3750 = vmatprep.subr.mxu0 0.0
        %3751 = vmatpush1.xpose.msra.mxu0 0.0
        %3752 = vmatprep.subr.mxu0 0.0
        %3753 = vmatpush1.xpose.msra.mxu0 0.0
        %3754 = vmatprep.subr.mxu0 0.0
        %3755 = vmatpush1.xpose.msra.mxu0 0.0
        %3756 = vmatprep.subr.mxu0 0.0
        %3757 = vmatpush1.xpose.msra.mxu0 0.0
        %3758 = vmatprep.subr.mxu0 0.0
        %3759 = vmatpush1.xpose.msra.mxu0 0.0
        %3760 = vmatprep.subr.mxu0 0.0
        %3761 = vmatpush1.xpose.msra.mxu0 0.0
        %3762 = vmatprep.subr.mxu0 0.0
        %3763 = vmatpush1.xpose.msra.mxu0 0.0
        %3764 = vmatprep.subr.mxu0 0.0
        %3765 = vmatpush1.xpose.msra.mxu0 0.0
        %3766 = vmatprep.subr.mxu0 0.0
        %3767 = vmatpush1.xpose.msra.mxu0 0.0
        %3768 = vmatprep.subr.mxu0 0.0
        %3769 = vmatpush1.xpose.msra.mxu0 0.0
        %3770 = vmatprep.subr.mxu0 0.0
        %3771 = vmatpush1.xpose.msra.mxu0 0.0
        %3772 = vmatprep.subr.mxu0 0.0
        %3773 = vmatpush1.xpose.msra.mxu0 0.0
        %3774 = vmatprep.subr.mxu0 0.0
        %3775 = vmatpush1.xpose.msra.mxu0 0.0
        %3776 = vmatprep.subr.mxu0 0.0
        %3777 = vmatpush1.xpose.msra.mxu0 0.0
        %3778 = vmatprep.subr.mxu0 0.0
        %3779 = vmatpush1.xpose.msra.mxu0 0.0
        %3780 = vmatprep.subr.mxu0 0.0
        %3781 = vmatpush1.xpose.msra.mxu0 0.0
        %3782 = vmatprep.subr.mxu0 0.0
        %3783 = vmatpush1.xpose.msra.mxu0 0.0
        %3784 = vmatprep.subr.mxu0 0.0
        %3785 = vmatpush1.xpose.msra.mxu0 0.0
        %3786 = vmatprep.mubr.f32.mxu0 0.0
        %3787 = vmatmul.mubr.f32.gmra.mrb[0].mxu0 %v3717
        %v3788 = vpop.f32.mrb[0].mxu0
        %v3789 = vadd.f32 0.0, %v3788
        %v3790 = vpop.f32.mrb[0].mxu0
        %3791 = vdwg.mxu0
        %v3793 = vsel %vm1679, %v2911, 0
        %v3796 = vsel %vm1679, %v3282, 0
        %3798 = vmatprep.subr.mxu0 0.0
        %3799 = vmatpush1.xpose.msra.mxu0 %v3796
        %3800 = vmatprep.subr.mxu0 0.0
        %3801 = vmatpush1.xpose.msra.mxu0 0.0
        %3802 = vmatprep.subr.mxu0 0.0
        %3803 = vmatpush1.xpose.msra.mxu0 0.0
        %3804 = vmatprep.subr.mxu0 0.0
        %3805 = vmatpush1.xpose.msra.mxu0 0.0
        %3806 = vmatprep.subr.mxu0 0.0
        %3807 = vmatpush1.xpose.msra.mxu0 0.0
        %3808 = vmatprep.subr.mxu0 0.0
        %3809 = vmatpush1.xpose.msra.mxu0 0.0
        %3810 = vmatprep.subr.mxu0 0.0
        %3811 = vmatpush1.xpose.msra.mxu0 0.0
        %3812 = vmatprep.subr.mxu0 0.0
        %3813 = vmatpush1.xpose.msra.mxu0 0.0
        %3814 = vmatprep.subr.mxu0 0.0
        %3815 = vmatpush1.xpose.msra.mxu0 0.0
        %3816 = vmatprep.subr.mxu0 0.0
        %3817 = vmatpush1.xpose.msra.mxu0 0.0
        %3818 = vmatprep.subr.mxu0 0.0
        %3819 = vmatpush1.xpose.msra.mxu0 0.0
        %3820 = vmatprep.subr.mxu0 0.0
        %3821 = vmatpush1.xpose.msra.mxu0 0.0
        %3822 = vmatprep.subr.mxu0 0.0
        %3823 = vmatpush1.xpose.msra.mxu0 0.0
        %3824 = vmatprep.subr.mxu0 0.0
        %3825 = vmatpush1.xpose.msra.mxu0 0.0
        %3826 = vmatprep.subr.mxu0 0.0
        %3827 = vmatpush1.xpose.msra.mxu0 0.0
        %3828 = vmatprep.subr.mxu0 0.0
        %3829 = vmatpush1.xpose.msra.mxu0 0.0
        %3830 = vmatprep.subr.mxu0 0.0
        %3831 = vmatpush1.xpose.msra.mxu0 0.0
        %3832 = vmatprep.subr.mxu0 0.0
        %3833 = vmatpush1.xpose.msra.mxu0 0.0
        %3834 = vmatprep.subr.mxu0 0.0
        %3835 = vmatpush1.xpose.msra.mxu0 0.0
        %3836 = vmatprep.subr.mxu0 0.0
        %3837 = vmatpush1.xpose.msra.mxu0 0.0
        %3838 = vmatprep.subr.mxu0 0.0
        %3839 = vmatpush1.xpose.msra.mxu0 0.0
        %3840 = vmatprep.subr.mxu0 0.0
        %3841 = vmatpush1.xpose.msra.mxu0 0.0
        %3842 = vmatprep.subr.mxu0 0.0
        %3843 = vmatpush1.xpose.msra.mxu0 0.0
        %3844 = vmatprep.subr.mxu0 0.0
        %3845 = vmatpush1.xpose.msra.mxu0 0.0
        %3846 = vmatprep.subr.mxu0 0.0
        %3847 = vmatpush1.xpose.msra.mxu0 0.0
        %3848 = vmatprep.subr.mxu0 0.0
        %3849 = vmatpush1.xpose.msra.mxu0 0.0
        %3850 = vmatprep.subr.mxu0 0.0
        %3851 = vmatpush1.xpose.msra.mxu0 0.0
        %3852 = vmatprep.subr.mxu0 0.0
        %3853 = vmatpush1.xpose.msra.mxu0 0.0
        %3854 = vmatprep.subr.mxu0 0.0
        %3855 = vmatpush1.xpose.msra.mxu0 0.0
        %3856 = vmatprep.subr.mxu0 0.0
        %3857 = vmatpush1.xpose.msra.mxu0 0.0
        %3858 = vmatprep.subr.mxu0 0.0
        %3859 = vmatpush1.xpose.msra.mxu0 0.0
        %3860 = vmatprep.subr.mxu0 0.0
        %3861 = vmatpush1.xpose.msra.mxu0 0.0
        %3862 = vmatprep.mubr.f32.mxu0 0.0
        %3863 = vmatmul.mubr.f32.gmra.mrb[0].mxu0 %v3793
        %v3864 = vpop.f32.mrb[0].mxu0
        %v3865 = vadd.f32 0.0, %v3864
        %v3866 = vpop.f32.mrb[0].mxu0
        %3867 = vdwg.mxu0
        %v3869 = vsel %vm1679, %v2981, 0
        %v3872 = vsel %vm1679, %v3352, 0
        %3874 = vmatprep.subr.mxu0 0.0
        %3875 = vmatpush1.xpose.msra.mxu0 %v3872
        %3876 = vmatprep.subr.mxu0 0.0
        %3877 = vmatpush1.xpose.msra.mxu0 0.0
        %3878 = vmatprep.subr.mxu0 0.0
        %3879 = vmatpush1.xpose.msra.mxu0 0.0
        %3880 = vmatprep.subr.mxu0 0.0
        %3881 = vmatpush1.xpose.msra.mxu0 0.0
        %3882 = vmatprep.subr.mxu0 0.0
        %3883 = vmatpush1.xpose.msra.mxu0 0.0
        %3884 = vmatprep.subr.mxu0 0.0
        %3885 = vmatpush1.xpose.msra.mxu0 0.0
        %3886 = vmatprep.subr.mxu0 0.0
        %3887 = vmatpush1.xpose.msra.mxu0 0.0
        %3888 = vmatprep.subr.mxu0 0.0
        %3889 = vmatpush1.xpose.msra.mxu0 0.0
        %3890 = vmatprep.subr.mxu0 0.0
        %3891 = vmatpush1.xpose.msra.mxu0 0.0
        %3892 = vmatprep.subr.mxu0 0.0
        %3893 = vmatpush1.xpose.msra.mxu0 0.0
        %3894 = vmatprep.subr.mxu0 0.0
        %3895 = vmatpush1.xpose.msra.mxu0 0.0
        %3896 = vmatprep.subr.mxu0 0.0
        %3897 = vmatpush1.xpose.msra.mxu0 0.0
        %3898 = vmatprep.subr.mxu0 0.0
        %3899 = vmatpush1.xpose.msra.mxu0 0.0
        %3900 = vmatprep.subr.mxu0 0.0
        %3901 = vmatpush1.xpose.msra.mxu0 0.0
        %3902 = vmatprep.subr.mxu0 0.0
        %3903 = vmatpush1.xpose.msra.mxu0 0.0
        %3904 = vmatprep.subr.mxu0 0.0
        %3905 = vmatpush1.xpose.msra.mxu0 0.0
        %3906 = vmatprep.subr.mxu0 0.0
        %3907 = vmatpush1.xpose.msra.mxu0 0.0
        %3908 = vmatprep.subr.mxu0 0.0
        %3909 = vmatpush1.xpose.msra.mxu0 0.0
        %3910 = vmatprep.subr.mxu0 0.0
        %3911 = vmatpush1.xpose.msra.mxu0 0.0
        %3912 = vmatprep.subr.mxu0 0.0
        %3913 = vmatpush1.xpose.msra.mxu0 0.0
        %3914 = vmatprep.subr.mxu0 0.0
        %3915 = vmatpush1.xpose.msra.mxu0 0.0
        %3916 = vmatprep.subr.mxu0 0.0
        %3917 = vmatpush1.xpose.msra.mxu0 0.0
        %3918 = vmatprep.subr.mxu0 0.0
        %3919 = vmatpush1.xpose.msra.mxu0 0.0
        %3920 = vmatprep.subr.mxu0 0.0
        %3921 = vmatpush1.xpose.msra.mxu0 0.0
        %3922 = vmatprep.subr.mxu0 0.0
        %3923 = vmatpush1.xpose.msra.mxu0 0.0
        %3924 = vmatprep.subr.mxu0 0.0
        %3925 = vmatpush1.xpose.msra.mxu0 0.0
        %3926 = vmatprep.subr.mxu0 0.0
        %3927 = vmatpush1.xpose.msra.mxu0 0.0
        %3928 = vmatprep.subr.mxu0 0.0
        %3929 = vmatpush1.xpose.msra.mxu0 0.0
        %3930 = vmatprep.subr.mxu0 0.0
        %3931 = vmatpush1.xpose.msra.mxu0 0.0
        %3932 = vmatprep.subr.mxu0 0.0
        %3933 = vmatpush1.xpose.msra.mxu0 0.0
        %3934 = vmatprep.subr.mxu0 0.0
        %3935 = vmatpush1.xpose.msra.mxu0 0.0
        %3936 = vmatprep.subr.mxu0 0.0
        %3937 = vmatpush1.xpose.msra.mxu0 0.0
        %3938 = vmatprep.mubr.f32.mxu0 0.0
        %3939 = vmatmul.mubr.f32.gmra.mrb[0].mxu0 %v3869
        %v3940 = vpop.f32.mrb[0].mxu0
        %v3941 = vadd.f32 0.0, %v3940
        %v3942 = vpop.f32.mrb[0].mxu0
        %3943 = vdwg.mxu0
        %v3944 = vsel %vm1679, %v3713, -inf
        %3945 = vmax.xlane.f32.xlu0 %v3944
        %v3946 = vpop.xlane.xlu0 %3945
        %v3947 = vsel %vm1679, %v3789, -inf
        %3948 = vmax.xlane.f32.xlu0 %v3947
        %v3949 = vpop.xlane.xlu0 %3948
        %v3950 = vsel %vm1679, %v3865, -inf
        %3951 = vmax.xlane.f32.xlu0 %v3950
        %v3952 = vpop.xlane.xlu0 %3951
        %v3953 = vsel %vm1679, %v3941, -inf
        %3954 = vmax.xlane.f32.xlu0 %v3953
        %v3955 = vpop.xlane.xlu0 %3954
        %v3956 = vsub.f32 %v3713, %v3946
        %v3957 = vsub.f32 %v3789, %v3949
        %v3958 = vsub.f32 %v3865, %v3952
        %v3959 = vsub.f32 %v3941, %v3955
        %v3960 = vmul.f32 %v3956, 1.442695
        %v3961 = vpow.pop %v3960
        %v3962 = vmul.f32 %v3957, 1.442695
        %v3963 = vpow.pop %v3962
        %v3964 = vmul.f32 %v3958, 1.442695
        %v3965 = vpow.pop %v3964
        %v3966 = vmul.f32 %v3959, 1.442695
        %v3967 = vpow.pop %v3966
        %v3968 = vsel %vm1679, %v3961, 0.0
        %3969 = vadd.xlane.f32.xlu0 %v3968
        %v3970 = vpop.xlane.xlu0 %3969
        %v3971 = vsel %vm1679, %v3963, 0.0
        %3972 = vadd.xlane.f32.xlu0 %v3971
        %v3973 = vpop.xlane.xlu0 %3972
        %v3974 = vsel %vm1679, %v3965, 0.0
        %3975 = vadd.xlane.f32.xlu0 %v3974
        %v3976 = vpop.xlane.xlu0 %3975
        %v3977 = vsel %vm1679, %v3967, 0.0
        %3978 = vadd.xlane.f32.xlu0 %v3977
        %v3979 = vpop.xlane.xlu0 %3978
        %v3980 = vrcp.pop %v3970
        %v3981 = vrcp.pop %v3973
        %v3982 = vrcp.pop %v3976
        %v3983 = vrcp.pop %v3979
        %v3984 = vmul.f32 %v3961, %v3980
        %v3985 = vmul.f32 %v3963, %v3981
        %v3986 = vmul.f32 %v3965, %v3982
        %v3987 = vmul.f32 %v3967, %v3983
        %v3989 = vsel %vm1679, %v3984, 0
        %3991 = vmatprep.subr.mxu0 0.0
        %3992 = vmatpush1.msra.mxu0 %v3422
        %3993 = vmatprep.subr.mxu0 0.0
        %3994 = vmatpush1.msra.mxu0 0.0
        %3995 = vmatprep.subr.mxu0 0.0
        %3996 = vmatpush1.msra.mxu0 0.0
        %3997 = vmatprep.subr.mxu0 0.0
        %3998 = vmatpush1.msra.mxu0 0.0
        %3999 = vmatprep.subr.mxu0 0.0
        %4000 = vmatpush1.msra.mxu0 0.0
        %4001 = vmatprep.subr.mxu0 0.0
        %4002 = vmatpush1.msra.mxu0 0.0
        %4003 = vmatprep.subr.mxu0 0.0
        %4004 = vmatpush1.msra.mxu0 0.0
        %4005 = vmatprep.subr.mxu0 0.0
        %4006 = vmatpush1.msra.mxu0 0.0
        %4007 = vmatprep.subr.mxu0 0.0
        %4008 = vmatpush1.msra.mxu0 0.0
        %4009 = vmatprep.subr.mxu0 0.0
        %4010 = vmatpush1.msra.mxu0 0.0
        %4011 = vmatprep.subr.mxu0 0.0
        %4012 = vmatpush1.msra.mxu0 0.0
        %4013 = vmatprep.subr.mxu0 0.0
        %4014 = vmatpush1.msra.mxu0 0.0
        %4015 = vmatprep.subr.mxu0 0.0
        %4016 = vmatpush1.msra.mxu0 0.0
        %4017 = vmatprep.subr.mxu0 0.0
        %4018 = vmatpush1.msra.mxu0 0.0
        %4019 = vmatprep.subr.mxu0 0.0
        %4020 = vmatpush1.msra.mxu0 0.0
        %4021 = vmatprep.subr.mxu0 0.0
        %4022 = vmatpush1.msra.mxu0 0.0
        %4023 = vmatprep.subr.mxu0 0.0
        %4024 = vmatpush1.msra.mxu0 0.0
        %4025 = vmatprep.subr.mxu0 0.0
        %4026 = vmatpush1.msra.mxu0 0.0
        %4027 = vmatprep.subr.mxu0 0.0
        %4028 = vmatpush1.msra.mxu0 0.0
        %4029 = vmatprep.subr.mxu0 0.0
        %4030 = vmatpush1.msra.mxu0 0.0
        %4031 = vmatprep.subr.mxu0 0.0
        %4032 = vmatpush1.msra.mxu0 0.0
        %4033 = vmatprep.subr.mxu0 0.0
        %4034 = vmatpush1.msra.mxu0 0.0
        %4035 = vmatprep.subr.mxu0 0.0
        %4036 = vmatpush1.msra.mxu0 0.0
        %4037 = vmatprep.subr.mxu0 0.0
        %4038 = vmatpush1.msra.mxu0 0.0
        %4039 = vmatprep.subr.mxu0 0.0
        %4040 = vmatpush1.msra.mxu0 0.0
        %4041 = vmatprep.subr.mxu0 0.0
        %4042 = vmatpush1.msra.mxu0 0.0
        %4043 = vmatprep.subr.mxu0 0.0
        %4044 = vmatpush1.msra.mxu0 0.0
        %4045 = vmatprep.subr.mxu0 0.0
        %4046 = vmatpush1.msra.mxu0 0.0
        %4047 = vmatprep.subr.mxu0 0.0
        %4048 = vmatpush1.msra.mxu0 0.0
        %4049 = vmatprep.subr.mxu0 0.0
        %4050 = vmatpush1.msra.mxu0 0.0
        %4051 = vmatprep.subr.mxu0 0.0
        %4052 = vmatpush1.msra.mxu0 0.0
        %4053 = vmatprep.subr.mxu0 0.0
        %4054 = vmatpush1.msra.mxu0 0.0
        %4055 = vmatprep.mubr.f32.mxu0 0.0
        %4056 = vmatmul.mubr.f32.gmra.mrb[0].mxu0 %v3989
        %v4057 = vpop.f32.mrb[0].mxu0
        %v4058 = vadd.f32 0.0, %v4057
        %v4059 = vpop.f32.mrb[0].mxu0
        %4060 = vdwg.mxu0
        %v4062 = vsel %vm1679, %v3985, 0
        %4064 = vmatprep.subr.mxu0 0.0
        %4065 = vmatpush1.msra.mxu0 %v3492
        %4066 = vmatprep.subr.mxu0 0.0
        %4067 = vmatpush1.msra.mxu0 0.0
        %4068 = vmatprep.subr.mxu0 0.0
        %4069 = vmatpush1.msra.mxu0 0.0
        %4070 = vmatprep.subr.mxu0 0.0
        %4071 = vmatpush1.msra.mxu0 0.0
        %4072 = vmatprep.subr.mxu0 0.0
        %4073 = vmatpush1.msra.mxu0 0.0
        %4074 = vmatprep.subr.mxu0 0.0
        %4075 = vmatpush1.msra.mxu0 0.0
        %4076 = vmatprep.subr.mxu0 0.0
        %4077 = vmatpush1.msra.mxu0 0.0
        %4078 = vmatprep.subr.mxu0 0.0
        %4079 = vmatpush1.msra.mxu0 0.0
        %4080 = vmatprep.subr.mxu0 0.0
        %4081 = vmatpush1.msra.mxu0 0.0
        %4082 = vmatprep.subr.mxu0 0.0
        %4083 = vmatpush1.msra.mxu0 0.0
        %4084 = vmatprep.subr.mxu0 0.0
        %4085 = vmatpush1.msra.mxu0 0.0
        %4086 = vmatprep.subr.mxu0 0.0
        %4087 = vmatpush1.msra.mxu0 0.0
        %4088 = vmatprep.subr.mxu0 0.0
        %4089 = vmatpush1.msra.mxu0 0.0
        %4090 = vmatprep.subr.mxu0 0.0
        %4091 = vmatpush1.msra.mxu0 0.0
        %4092 = vmatprep.subr.mxu0 0.0
        %4093 = vmatpush1.msra.mxu0 0.0
        %4094 = vmatprep.subr.mxu0 0.0
        %4095 = vmatpush1.msra.mxu0 0.0
        %4096 = vmatprep.subr.mxu0 0.0
        %4097 = vmatpush1.msra.mxu0 0.0
        %4098 = vmatprep.subr.mxu0 0.0
        %4099 = vmatpush1.msra.mxu0 0.0
        %4100 = vmatprep.subr.mxu0 0.0
        %4101 = vmatpush1.msra.mxu0 0.0
        %4102 = vmatprep.subr.mxu0 0.0
        %4103 = vmatpush1.msra.mxu0 0.0
        %4104 = vmatprep.subr.mxu0 0.0
        %4105 = vmatpush1.msra.mxu0 0.0
        %4106 = vmatprep.subr.mxu0 0.0
        %4107 = vmatpush1.msra.mxu0 0.0
        %4108 = vmatprep.subr.mxu0 0.0
        %4109 = vmatpush1.msra.mxu0 0.0
        %4110 = vmatprep.subr.mxu0 0.0
        %4111 = vmatpush1.msra.mxu0 0.0
        %4112 = vmatprep.subr.mxu0 0.0
        %4113 = vmatpush1.msra.mxu0 0.0
        %4114 = vmatprep.subr.mxu0 0.0
        %4115 = vmatpush1.msra.mxu0 0.0
        %4116 = vmatprep.subr.mxu0 0.0
        %4117 = vmatpush1.msra.mxu0 0.0
        %4118 = vmatprep.subr.mxu0 0.0
        %4119 = vmatpush1.msra.mxu0 0.0
        %4120 = vmatprep.subr.mxu0 0.0
        %4121 = vmatpush1.msra.mxu0 0.0
        %4122 = vmatprep.subr.mxu0 0.0
        %4123 = vmatpush1.msra.mxu0 0.0
        %4124 = vmatprep.subr.mxu0 0.0
        %4125 = vmatpush1.msra.mxu0 0.0
        %4126 = vmatprep.subr.mxu0 0.0
        %4127 = vmatpush1.msra.mxu0 0.0
        %4128 = vmatprep.mubr.f32.mxu0 0.0
        %4129 = vmatmul.mubr.f32.gmra.mrb[0].mxu0 %v4062
        %v4130 = vpop.f32.mrb[0].mxu0
        %v4131 = vadd.f32 0.0, %v4130
        %v4132 = vpop.f32.mrb[0].mxu0
        %4133 = vdwg.mxu0
        %v4135 = vsel %vm1679, %v3986, 0
        %4137 = vmatprep.subr.mxu0 0.0
        %4138 = vmatpush1.msra.mxu0 %v3562
        %4139 = vmatprep.subr.mxu0 0.0
        %4140 = vmatpush1.msra.mxu0 0.0
        %4141 = vmatprep.subr.mxu0 0.0
        %4142 = vmatpush1.msra.mxu0 0.0
        %4143 = vmatprep.subr.mxu0 0.0
        %4144 = vmatpush1.msra.mxu0 0.0
        %4145 = vmatprep.subr.mxu0 0.0
        %4146 = vmatpush1.msra.mxu0 0.0
        %4147 = vmatprep.subr.mxu0 0.0
        %4148 = vmatpush1.msra.mxu0 0.0
        %4149 = vmatprep.subr.mxu0 0.0
        %4150 = vmatpush1.msra.mxu0 0.0
        %4151 = vmatprep.subr.mxu0 0.0
        %4152 = vmatpush1.msra.mxu0 0.0
        %4153 = vmatprep.subr.mxu0 0.0
        %4154 = vmatpush1.msra.mxu0 0.0
        %4155 = vmatprep.subr.mxu0 0.0
        %4156 = vmatpush1.msra.mxu0 0.0
        %4157 = vmatprep.subr.mxu0 0.0
        %4158 = vmatpush1.msra.mxu0 0.0
        %4159 = vmatprep.subr.mxu0 0.0
        %4160 = vmatpush1.msra.mxu0 0.0
        %4161 = vmatprep.subr.mxu0 0.0
        %4162 = vmatpush1.msra.mxu0 0.0
        %4163 = vmatprep.subr.mxu0 0.0
        %4164 = vmatpush1.msra.mxu0 0.0
        %4165 = vmatprep.subr.mxu0 0.0
        %4166 = vmatpush1.msra.mxu0 0.0
        %4167 = vmatprep.subr.mxu0 0.0
        %4168 = vmatpush1.msra.mxu0 0.0
        %4169 = vmatprep.subr.mxu0 0.0
        %4170 = vmatpush1.msra.mxu0 0.0
        %4171 = vmatprep.subr.mxu0 0.0
        %4172 = vmatpush1.msra.mxu0 0.0
        %4173 = vmatprep.subr.mxu0 0.0
        %4174 = vmatpush1.msra.mxu0 0.0
        %4175 = vmatprep.subr.mxu0 0.0
        %4176 = vmatpush1.msra.mxu0 0.0
        %4177 = vmatprep.subr.mxu0 0.0
        %4178 = vmatpush1.msra.mxu0 0.0
        %4179 = vmatprep.subr.mxu0 0.0
        %4180 = vmatpush1.msra.mxu0 0.0
        %4181 = vmatprep.subr.mxu0 0.0
        %4182 = vmatpush1.msra.mxu0 0.0
        %4183 = vmatprep.subr.mxu0 0.0
        %4184 = vmatpush1.msra.mxu0 0.0
        %4185 = vmatprep.subr.mxu0 0.0
        %4186 = vmatpush1.msra.mxu0 0.0
        %4187 = vmatprep.subr.mxu0 0.0
        %4188 = vmatpush1.msra.mxu0 0.0
        %4189 = vmatprep.subr.mxu0 0.0
        %4190 = vmatpush1.msra.mxu0 0.0
        %4191 = vmatprep.subr.mxu0 0.0
        %4192 = vmatpush1.msra.mxu0 0.0
        %4193 = vmatprep.subr.mxu0 0.0
        %4194 = vmatpush1.msra.mxu0 0.0
        %4195 = vmatprep.subr.mxu0 0.0
        %4196 = vmatpush1.msra.mxu0 0.0
        %4197 = vmatprep.subr.mxu0 0.0
        %4198 = vmatpush1.msra.mxu0 0.0
        %4199 = vmatprep.subr.mxu0 0.0
        %4200 = vmatpush1.msra.mxu0 0.0
        %4201 = vmatprep.mubr.f32.mxu0 0.0
        %4202 = vmatmul.mubr.f32.gmra.mrb[0].mxu0 %v4135
        %v4203 = vpop.f32.mrb[0].mxu0
        %v4204 = vadd.f32 0.0, %v4203
        %v4205 = vpop.f32.mrb[0].mxu0
        %4206 = vdwg.mxu0
        %v4208 = vsel %vm1679, %v3987, 0
        %4210 = vmatprep.subr.mxu0 0.0
        %4211 = vmatpush1.msra.mxu0 %v3632
        %4212 = vmatprep.subr.mxu0 0.0
        %4213 = vmatpush1.msra.mxu0 0.0
        %4214 = vmatprep.subr.mxu0 0.0
        %4215 = vmatpush1.msra.mxu0 0.0
        %4216 = vmatprep.subr.mxu0 0.0
        %4217 = vmatpush1.msra.mxu0 0.0
        %4218 = vmatprep.subr.mxu0 0.0
        %4219 = vmatpush1.msra.mxu0 0.0
        %4220 = vmatprep.subr.mxu0 0.0
        %4221 = vmatpush1.msra.mxu0 0.0
        %4222 = vmatprep.subr.mxu0 0.0
        %4223 = vmatpush1.msra.mxu0 0.0
        %4224 = vmatprep.subr.mxu0 0.0
        %4225 = vmatpush1.msra.mxu0 0.0
        %4226 = vmatprep.subr.mxu0 0.0
        %4227 = vmatpush1.msra.mxu0 0.0
        %4228 = vmatprep.subr.mxu0 0.0
        %4229 = vmatpush1.msra.mxu0 0.0
        %4230 = vmatprep.subr.mxu0 0.0
        %4231 = vmatpush1.msra.mxu0 0.0
        %4232 = vmatprep.subr.mxu0 0.0
        %4233 = vmatpush1.msra.mxu0 0.0
        %4234 = vmatprep.subr.mxu0 0.0
        %4235 = vmatpush1.msra.mxu0 0.0
        %4236 = vmatprep.subr.mxu0 0.0
        %4237 = vmatpush1.msra.mxu0 0.0
        %4238 = vmatprep.subr.mxu0 0.0
        %4239 = vmatpush1.msra.mxu0 0.0
        %4240 = vmatprep.subr.mxu0 0.0
        %4241 = vmatpush1.msra.mxu0 0.0
        %4242 = vmatprep.subr.mxu0 0.0
        %4243 = vmatpush1.msra.mxu0 0.0
        %4244 = vmatprep.subr.mxu0 0.0
        %4245 = vmatpush1.msra.mxu0 0.0
        %4246 = vmatprep.subr.mxu0 0.0
        %4247 = vmatpush1.msra.mxu0 0.0
        %4248 = vmatprep.subr.mxu0 0.0
        %4249 = vmatpush1.msra.mxu0 0.0
        %4250 = vmatprep.subr.mxu0 0.0
        %4251 = vmatpush1.msra.mxu0 0.0
        %4252 = vmatprep.subr.mxu0 0.0
        %4253 = vmatpush1.msra.mxu0 0.0
        %4254 = vmatprep.subr.mxu0 0.0
        %4255 = vmatpush1.msra.mxu0 0.0
        %4256 = vmatprep.subr.mxu0 0.0
        %4257 = vmatpush1.msra.mxu0 0.0
        %4258 = vmatprep.subr.mxu0 0.0
        %4259 = vmatpush1.msra.mxu0 0.0
        %4260 = vmatprep.subr.mxu0 0.0
        %4261 = vmatpush1.msra.mxu0 0.0
        %4262 = vmatprep.subr.mxu0 0.0
        %4263 = vmatpush1.msra.mxu0 0.0
        %4264 = vmatprep.subr.mxu0 0.0
        %4265 = vmatpush1.msra.mxu0 0.0
        %4266 = vmatprep.subr.mxu0 0.0
        %4267 = vmatpush1.msra.mxu0 0.0
        %4268 = vmatprep.subr.mxu0 0.0
        %4269 = vmatpush1.msra.mxu0 0.0
        %4270 = vmatprep.subr.mxu0 0.0
        %4271 = vmatpush1.msra.mxu0 0.0
        %4272 = vmatprep.subr.mxu0 0.0
        %4273 = vmatpush1.msra.mxu0 0.0
        %4274 = vmatprep.mubr.f32.mxu0 0.0
        %4275 = vmatmul.mubr.f32.gmra.mrb[0].mxu0 %v4208
        %v4276 = vpop.f32.mrb[0].mxu0
        %v4277 = vadd.f32 0.0, %v4276
        %v4278 = vpop.f32.mrb[0].mxu0
        %4279 = vdwg.mxu0
        %v4281 = vsel %vm1679, %v4058, 0
        %4283 = vmatprep.subr.mxu0 0.0
        %4284 = vmatpush1.msra.mxu0 %v3635
        %4285 = vmatprep.subr.mxu0 0.0
        %4286 = vmatpush1.msra.mxu0 0.0
        %4287 = vmatprep.subr.mxu0 0.0
        %4288 = vmatpush1.msra.mxu0 0.0
        %4289 = vmatprep.subr.mxu0 0.0
        %4290 = vmatpush1.msra.mxu0 0.0
        %4291 = vmatprep.subr.mxu0 0.0
        %4292 = vmatpush1.msra.mxu0 0.0
        %4293 = vmatprep.subr.mxu0 0.0
        %4294 = vmatpush1.msra.mxu0 0.0
        %4295 = vmatprep.subr.mxu0 0.0
        %4296 = vmatpush1.msra.mxu0 0.0
        %4297 = vmatprep.subr.mxu0 0.0
        %4298 = vmatpush1.msra.mxu0 0.0
        %4299 = vmatprep.subr.mxu0 0.0
        %4300 = vmatpush1.msra.mxu0 0.0
        %4301 = vmatprep.subr.mxu0 0.0
        %4302 = vmatpush1.msra.mxu0 0.0
        %4303 = vmatprep.subr.mxu0 0.0
        %4304 = vmatpush1.msra.mxu0 0.0
        %4305 = vmatprep.subr.mxu0 0.0
        %4306 = vmatpush1.msra.mxu0 0.0
        %4307 = vmatprep.subr.mxu0 0.0
        %4308 = vmatpush1.msra.mxu0 0.0
        %4309 = vmatprep.subr.mxu0 0.0
        %4310 = vmatpush1.msra.mxu0 0.0
        %4311 = vmatprep.subr.mxu0 0.0
        %4312 = vmatpush1.msra.mxu0 0.0
        %4313 = vmatprep.subr.mxu0 0.0
        %4314 = vmatpush1.msra.mxu0 0.0
        %4315 = vmatprep.subr.mxu0 0.0
        %4316 = vmatpush1.msra.mxu0 0.0
        %4317 = vmatprep.subr.mxu0 0.0
        %4318 = vmatpush1.msra.mxu0 0.0
        %4319 = vmatprep.subr.mxu0 0.0
        %4320 = vmatpush1.msra.mxu0 0.0
        %4321 = vmatprep.subr.mxu0 0.0
        %4322 = vmatpush1.msra.mxu0 0.0
        %4323 = vmatprep.subr.mxu0 0.0
        %4324 = vmatpush1.msra.mxu0 0.0
        %4325 = vmatprep.subr.mxu0 0.0
        %4326 = vmatpush1.msra.mxu0 0.0
        %4327 = vmatprep.subr.mxu0 0.0
        %4328 = vmatpush1.msra.mxu0 0.0
        %4329 = vmatprep.subr.mxu0 0.0
        %4330 = vmatpush1.msra.mxu0 0.0
        %4331 = vmatprep.subr.mxu0 0.0
        %4332 = vmatpush1.msra.mxu0 0.0
        %4333 = vmatprep.subr.mxu0 0.0
        %4334 = vmatpush1.msra.mxu0 0.0
        %4335 = vmatprep.subr.mxu0 0.0
        %4336 = vmatpush1.msra.mxu0 0.0
        %4337 = vmatprep.subr.mxu0 0.0
        %4338 = vmatpush1.msra.mxu0 0.0
        %4339 = vmatprep.subr.mxu0 0.0
        %4340 = vmatpush1.msra.mxu0 0.0
        %4341 = vmatprep.subr.mxu0 0.0
        %4342 = vmatpush1.msra.mxu0 0.0
        %4343 = vmatprep.subr.mxu0 0.0
        %4344 = vmatpush1.msra.mxu0 0.0
        %4345 = vmatprep.subr.mxu0 0.0
        %4346 = vmatpush1.msra.mxu0 0.0
        %4347 = vmatprep.mubr.f32.mxu0 0.0
        %4348 = vmatmul.mubr.f32.gmra.mrb[0].mxu0 %v4281
        %v4349 = vpop.f32.mrb[0].mxu0
        %v4350 = vadd.f32 0.0, %v4349
        %v4351 = vpop.f32.mrb[0].mxu0
        %4352 = vdwg.mxu0
        %v4354 = vsel %vm1679, %v4131, 0
        %4356 = vmatprep.subr.mxu0 0.0
        %4357 = vmatpush1.msra.mxu0 %v3636
        %4358 = vmatprep.subr.mxu0 0.0
        %4359 = vmatpush1.msra.mxu0 0.0
        %4360 = vmatprep.subr.mxu0 0.0
        %4361 = vmatpush1.msra.mxu0 0.0
        %4362 = vmatprep.subr.mxu0 0.0
        %4363 = vmatpush1.msra.mxu0 0.0
        %4364 = vmatprep.subr.mxu0 0.0
        %4365 = vmatpush1.msra.mxu0 0.0
        %4366 = vmatprep.subr.mxu0 0.0
        %4367 = vmatpush1.msra.mxu0 0.0
        %4368 = vmatprep.subr.mxu0 0.0
        %4369 = vmatpush1.msra.mxu0 0.0
        %4370 = vmatprep.subr.mxu0 0.0
        %4371 = vmatpush1.msra.mxu0 0.0
        %4372 = vmatprep.subr.mxu0 0.0
        %4373 = vmatpush1.msra.mxu0 0.0
        %4374 = vmatprep.subr.mxu0 0.0
        %4375 = vmatpush1.msra.mxu0 0.0
        %4376 = vmatprep.subr.mxu0 0.0
        %4377 = vmatpush1.msra.mxu0 0.0
        %4378 = vmatprep.subr.mxu0 0.0
        %4379 = vmatpush1.msra.mxu0 0.0
        %4380 = vmatprep.subr.mxu0 0.0
        %4381 = vmatpush1.msra.mxu0 0.0
        %4382 = vmatprep.subr.mxu0 0.0
        %4383 = vmatpush1.msra.mxu0 0.0
        %4384 = vmatprep.subr.mxu0 0.0
        %4385 = vmatpush1.msra.mxu0 0.0
        %4386 = vmatprep.subr.mxu0 0.0
        %4387 = vmatpush1.msra.mxu0 0.0
        %4388 = vmatprep.subr.mxu0 0.0
        %4389 = vmatpush1.msra.mxu0 0.0
        %4390 = vmatprep.subr.mxu0 0.0
        %4391 = vmatpush1.msra.mxu0 0.0
        %4392 = vmatprep.subr.mxu0 0.0
        %4393 = vmatpush1.msra.mxu0 0.0
        %4394 = vmatprep.subr.mxu0 0.0
        %4395 = vmatpush1.msra.mxu0 0.0
        %4396 = vmatprep.subr.mxu0 0.0
        %4397 = vmatpush1.msra.mxu0 0.0
        %4398 = vmatprep.subr.mxu0 0.0
        %4399 = vmatpush1.msra.mxu0 0.0
        %4400 = vmatprep.subr.mxu0 0.0
        %4401 = vmatpush1.msra.mxu0 0.0
        %4402 = vmatprep.subr.mxu0 0.0
        %4403 = vmatpush1.msra.mxu0 0.0
        %4404 = vmatprep.subr.mxu0 0.0
        %4405 = vmatpush1.msra.mxu0 0.0
        %4406 = vmatprep.subr.mxu0 0.0
        %4407 = vmatpush1.msra.mxu0 0.0
        %4408 = vmatprep.subr.mxu0 0.0
        %4409 = vmatpush1.msra.mxu0 0.0
        %4410 = vmatprep.subr.mxu0 0.0
        %4411 = vmatpush1.msra.mxu0 0.0
        %4412 = vmatprep.subr.mxu0 0.0
        %4413 = vmatpush1.msra.mxu0 0.0
        %4414 = vmatprep.subr.mxu0 0.0
        %4415 = vmatpush1.msra.mxu0 0.0
        %4416 = vmatprep.subr.mxu0 0.0
        %4417 = vmatpush1.msra.mxu0 0.0
        %4418 = vmatprep.subr.mxu0 0.0
        %4419 = vmatpush1.msra.mxu0 0.0
        %4420 = vmatprep.mubr.f32.mxu0 0.0
        %4421 = vmatmul.mubr.f32.gmra.mrb[0].mxu0 %v4354
        %v4422 = vpop.f32.mrb[0].mxu0
        %v4423 = vadd.f32 0.0, %v4422
        %v4424 = vpop.f32.mrb[0].mxu0
        %4425 = vdwg.mxu0
        %v4427 = vsel %vm1679, %v4204, 0
        %4429 = vmatprep.subr.mxu0 0.0
        %4430 = vmatpush1.msra.mxu0 %v3637
        %4431 = vmatprep.subr.mxu0 0.0
        %4432 = vmatpush1.msra.mxu0 0.0
        %4433 = vmatprep.subr.mxu0 0.0
        %4434 = vmatpush1.msra.mxu0 0.0
        %4435 = vmatprep.subr.mxu0 0.0
        %4436 = vmatpush1.msra.mxu0 0.0
        %4437 = vmatprep.subr.mxu0 0.0
        %4438 = vmatpush1.msra.mxu0 0.0
        %4439 = vmatprep.subr.mxu0 0.0
        %4440 = vmatpush1.msra.mxu0 0.0
        %4441 = vmatprep.subr.mxu0 0.0
        %4442 = vmatpush1.msra.mxu0 0.0
        %4443 = vmatprep.subr.mxu0 0.0
        %4444 = vmatpush1.msra.mxu0 0.0
        %4445 = vmatprep.subr.mxu0 0.0
        %4446 = vmatpush1.msra.mxu0 0.0
        %4447 = vmatprep.subr.mxu0 0.0
        %4448 = vmatpush1.msra.mxu0 0.0
        %4449 = vmatprep.subr.mxu0 0.0
        %4450 = vmatpush1.msra.mxu0 0.0
        %4451 = vmatprep.subr.mxu0 0.0
        %4452 = vmatpush1.msra.mxu0 0.0
        %4453 = vmatprep.subr.mxu0 0.0
        %4454 = vmatpush1.msra.mxu0 0.0
        %4455 = vmatprep.subr.mxu0 0.0
        %4456 = vmatpush1.msra.mxu0 0.0
        %4457 = vmatprep.subr.mxu0 0.0
        %4458 = vmatpush1.msra.mxu0 0.0
        %4459 = vmatprep.subr.mxu0 0.0
        %4460 = vmatpush1.msra.mxu0 0.0
        %4461 = vmatprep.subr.mxu0 0.0
        %4462 = vmatpush1.msra.mxu0 0.0
        %4463 = vmatprep.subr.mxu0 0.0
        %4464 = vmatpush1.msra.mxu0 0.0
        %4465 = vmatprep.subr.mxu0 0.0
        %4466 = vmatpush1.msra.mxu0 0.0
        %4467 = vmatprep.subr.mxu0 0.0
        %4468 = vmatpush1.msra.mxu0 0.0
        %4469 = vmatprep.subr.mxu0 0.0
        %4470 = vmatpush1.msra.mxu0 0.0
        %4471 = vmatprep.subr.mxu0 0.0
        %4472 = vmatpush1.msra.mxu0 0.0
        %4473 = vmatprep.subr.mxu0 0.0
        %4474 = vmatpush1.msra.mxu0 0.0
        %4475 = vmatprep.subr.mxu0 0.0
        %4476 = vmatpush1.msra.mxu0 0.0
        %4477 = vmatprep.subr.mxu0 0.0
        %4478 = vmatpush1.msra.mxu0 0.0
        %4479 = vmatprep.subr.mxu0 0.0
        %4480 = vmatpush1.msra.mxu0 0.0
        %4481 = vmatprep.subr.mxu0 0.0
        %4482 = vmatpush1.msra.mxu0 0.0
        %4483 = vmatprep.subr.mxu0 0.0
        %4484 = vmatpush1.msra.mxu0 0.0
        %4485 = vmatprep.subr.mxu0 0.0
        %4486 = vmatpush1.msra.mxu0 0.0
        %4487 = vmatprep.subr.mxu0 0.0
        %4488 = vmatpush1.msra.mxu0 0.0
        %4489 = vmatprep.subr.mxu0 0.0
        %4490 = vmatpush1.msra.mxu0 0.0
        %4491 = vmatprep.subr.mxu0 0.0
        %4492 = vmatpush1.msra.mxu0 0.0
        %4493 = vmatprep.mubr.f32.mxu0 0.0
        %4494 = vmatmul.mubr.f32.gmra.mrb[0].mxu0 %v4427
        %v4495 = vpop.f32.mrb[0].mxu0
        %v4496 = vadd.f32 0.0, %v4495
        %v4497 = vpop.f32.mrb[0].mxu0
        %4498 = vdwg.mxu0
        %v4500 = vsel %vm1679, %v4277, 0
        %4502 = vmatprep.subr.mxu0 0.0
        %4503 = vmatpush1.msra.mxu0 %v3638
        %4504 = vmatprep.subr.mxu0 0.0
        %4505 = vmatpush1.msra.mxu0 0.0
        %4506 = vmatprep.subr.mxu0 0.0
        %4507 = vmatpush1.msra.mxu0 0.0
        %4508 = vmatprep.subr.mxu0 0.0
        %4509 = vmatpush1.msra.mxu0 0.0
        %4510 = vmatprep.subr.mxu0 0.0
        %4511 = vmatpush1.msra.mxu0 0.0
        %4512 = vmatprep.subr.mxu0 0.0
        %4513 = vmatpush1.msra.mxu0 0.0
        %4514 = vmatprep.subr.mxu0 0.0
        %4515 = vmatpush1.msra.mxu0 0.0
        %4516 = vmatprep.subr.mxu0 0.0
        %4517 = vmatpush1.msra.mxu0 0.0
        %4518 = vmatprep.subr.mxu0 0.0
        %4519 = vmatpush1.msra.mxu0 0.0
        %4520 = vmatprep.subr.mxu0 0.0
        %4521 = vmatpush1.msra.mxu0 0.0
        %4522 = vmatprep.subr.mxu0 0.0
        %4523 = vmatpush1.msra.mxu0 0.0
        %4524 = vmatprep.subr.mxu0 0.0
        %4525 = vmatpush1.msra.mxu0 0.0
        %4526 = vmatprep.subr.mxu0 0.0
        %4527 = vmatpush1.msra.mxu0 0.0
        %4528 = vmatprep.subr.mxu0 0.0
        %4529 = vmatpush1.msra.mxu0 0.0
        %4530 = vmatprep.subr.mxu0 0.0
        %4531 = vmatpush1.msra.mxu0 0.0
        %4532 = vmatprep.subr.mxu0 0.0
        %4533 = vmatpush1.msra.mxu0 0.0
        %4534 = vmatprep.subr.mxu0 0.0
        %4535 = vmatpush1.msra.mxu0 0.0
        %4536 = vmatprep.subr.mxu0 0.0
        %4537 = vmatpush1.msra.mxu0 0.0
        %4538 = vmatprep.subr.mxu0 0.0
        %4539 = vmatpush1.msra.mxu0 0.0
        %4540 = vmatprep.subr.mxu0 0.0
        %4541 = vmatpush1.msra.mxu0 0.0
        %4542 = vmatprep.subr.mxu0 0.0
        %4543 = vmatpush1.msra.mxu0 0.0
        %4544 = vmatprep.subr.mxu0 0.0
        %4545 = vmatpush1.msra.mxu0 0.0
        %4546 = vmatprep.subr.mxu0 0.0
        %4547 = vmatpush1.msra.mxu0 0.0
        %4548 = vmatprep.subr.mxu0 0.0
        %4549 = vmatpush1.msra.mxu0 0.0
        %4550 = vmatprep.subr.mxu0 0.0
        %4551 = vmatpush1.msra.mxu0 0.0
        %4552 = vmatprep.subr.mxu0 0.0
        %4553 = vmatpush1.msra.mxu0 0.0
        %4554 = vmatprep.subr.mxu0 0.0
        %4555 = vmatpush1.msra.mxu0 0.0
        %4556 = vmatprep.subr.mxu0 0.0
        %4557 = vmatpush1.msra.mxu0 0.0
        %4558 = vmatprep.subr.mxu0 0.0
        %4559 = vmatpush1.msra.mxu0 0.0
        %4560 = vmatprep.subr.mxu0 0.0
        %4561 = vmatpush1.msra.mxu0 0.0
        %4562 = vmatprep.subr.mxu0 0.0
        %4563 = vmatpush1.msra.mxu0 0.0
        %4564 = vmatprep.subr.mxu0 0.0
        %4565 = vmatpush1.msra.mxu0 0.0
        %4566 = vmatprep.mubr.f32.mxu0 0.0
        %4567 = vmatmul.mubr.f32.gmra.mrb[0].mxu0 %v4500
        %v4568 = vpop.f32.mrb[0].mxu0
        %v4569 = vadd.f32 0.0, %v4568
        %v4570 = vpop.f32.mrb[0].mxu0
        %4571 = vdwg.mxu0
        %v4572 = vsel %vm830, %v4350, 0.0
        %v4573 = vsel %vm830, %v4423, 0.0
        %v4574 = vadd.f32 %v4572, %v4573
        %v4575 = vsel %vm830, %v4496, 0.0
        %v4576 = vadd.f32 %v4574, %v4575
        %v4577 = vsel %vm830, %v4569, 0.0
        %v4578 = vadd.f32 %v4576, %v4577
        %v4580 = vlaneseq
        %v4581 = vshrl.u32 %v4580, 7
        %v4582 = vsub.s32 0, %v4581
        %v4583 = vrot.slane %v3639, %v4582
        %v4585 = vadd.f32 %v4578, %v4583
        %v4586 = vadd.f32 %v2656, %v4585
        %v4587 = vld [vmem:[%s14] sm:$0x1]
        %v4588 = vld [vmem:[%s15] sm:$0x1]
        %v4589 = vsel %vm830, %v4586, 0.0
        %4590 = vadd.xlane.f32.xlu0 %v4589
        %v4591 = vpop.xlane.xlu0 %4590
        %v4592 = vmul.f32 %v4591, %v2632
        %v4593 = vsub.f32 %v4586, %v4592
        %v4594 = vmul.f32 %v4593, %v4593
        %v4595 = vsel %vm830, %v4594, 0.0
        %4596 = vadd.xlane.f32.xlu0 %v4595
        %v4597 = vpop.xlane.xlu0 %4596
        %v4598 = vmul.f32 %v4597, %v2632
        %v4599 = vadd.f32 %v4598, 1e-05
        %v4600 = vrsqrt.pop %v4599
        %v4601 = vmul.f32 %v4593, %v4600
        %v4603 = vlaneseq
        %v4604 = vshrl.u32 %v4603, 7
        %v4605 = vsub.s32 0, %v4604
        %v4606 = vrot.slane %v4587, %v4605
        %v4608 = vmul.f32 %v4601, %v4606
        %v4610 = vlaneseq
        %v4611 = vshrl.u32 %v4610, 7
        %v4612 = vsub.s32 0, %v4611
        %v4613 = vrot.slane %v4588, %v4612
        %v4615 = vadd.f32 %v4608, %v4613
        %v4616 = vld [vmem:[%s16] sm:$0xff]
        %v4617 = vld [vmem:[%s16 + $0x8] sm:$0xff]
        %v4618 = vld [vmem:[%s16 + $0x10] sm:$0xff]
        %v4619 = vld [vmem:[%s16 + $0x18] sm:$0xff]
        %v4620 = vld [vmem:[%s17] sm:$0x1]
        %v4622 = vlaneseq
        %v4623 = vshrl.u32 %v4622, 7
        %v4624 = vsub.s32 0, %v4623
        %v4625 = vrot.slane %v4620, %v4624
        %v4628 = vsel %vm830, %v4615, 0
        %4630 = vmatprep.subr.mxu0 0.0
        %4631 = vmatpush1.msra.mxu0 %v4616
        %4632 = vmatprep.subr.mxu0 0.0
        %4633 = vmatpush1.msra.mxu0 %v4617
        %4634 = vmatprep.subr.mxu0 0.0
        %4635 = vmatpush1.msra.mxu0 %v4618
        %4636 = vmatprep.subr.mxu0 0.0
        %4637 = vmatpush1.msra.mxu0 %v4619
        %4638 = vmatprep.subr.mxu0 0.0
        %4639 = vmatpush1.msra.mxu0 0.0
        %4640 = vmatprep.subr.mxu0 0.0
        %4641 = vmatpush1.msra.mxu0 0.0
        %4642 = vmatprep.subr.mxu0 0.0
        %4643 = vmatpush1.msra.mxu0 0.0
        %4644 = vmatprep.subr.mxu0 0.0
        %4645 = vmatpush1.msra.mxu0 0.0
        %4646 = vmatprep.subr.mxu0 0.0
        %4647 = vmatpush1.msra.mxu0 0.0
        %4648 = vmatprep.subr.mxu0 0.0
        %4649 = vmatpush1.msra.mxu0 0.0
        %4650 = vmatprep.subr.mxu0 0.0
        %4651 = vmatpush1.msra.mxu0 0.0
        %4652 = vmatprep.subr.mxu0 0.0
        %4653 = vmatpush1.msra.mxu0 0.0
        %4654 = vmatprep.subr.mxu0 0.0
        %4655 = vmatpush1.msra.mxu0 0.0
        %4656 = vmatprep.subr.mxu0 0.0
        %4657 = vmatpush1.msra.mxu0 0.0
        %4658 = vmatprep.subr.mxu0 0.0
        %4659 = vmatpush1.msra.mxu0 0.0
        %4660 = vmatprep.subr.mxu0 0.0
        %4661 = vmatpush1.msra.mxu0 0.0
        %4662 = vmatprep.subr.mxu0 0.0
        %4663 = vmatpush1.msra.mxu0 0.0
        %4664 = vmatprep.subr.mxu0 0.0
        %4665 = vmatpush1.msra.mxu0 0.0
        %4666 = vmatprep.subr.mxu0 0.0
        %4667 = vmatpush1.msra.mxu0 0.0
        %4668 = vmatprep.subr.mxu0 0.0
        %4669 = vmatpush1.msra.mxu0 0.0
        %4670 = vmatprep.subr.mxu0 0.0
        %4671 = vmatpush1.msra.mxu0 0.0
        %4672 = vmatprep.subr.mxu0 0.0
        %4673 = vmatpush1.msra.mxu0 0.0
        %4674 = vmatprep.subr.mxu0 0.0
        %4675 = vmatpush1.msra.mxu0 0.0
        %4676 = vmatprep.subr.mxu0 0.0
        %4677 = vmatpush1.msra.mxu0 0.0
        %4678 = vmatprep.subr.mxu0 0.0
        %4679 = vmatpush1.msra.mxu0 0.0
        %4680 = vmatprep.subr.mxu0 0.0
        %4681 = vmatpush1.msra.mxu0 0.0
        %4682 = vmatprep.subr.mxu0 0.0
        %4683 = vmatpush1.msra.mxu0 0.0
        %4684 = vmatprep.subr.mxu0 0.0
        %4685 = vmatpush1.msra.mxu0 0.0
        %4686 = vmatprep.subr.mxu0 0.0
        %4687 = vmatpush1.msra.mxu0 0.0
        %4688 = vmatprep.subr.mxu0 0.0
        %4689 = vmatpush1.msra.mxu0 0.0
        %4690 = vmatprep.subr.mxu0 0.0
        %4691 = vmatpush1.msra.mxu0 0.0
        %4692 = vmatprep.subr.mxu0 0.0
        %4693 = vmatpush1.msra.mxu0 0.0
        %4694 = vmatprep.mubr.f32.mxu0 0.0
        %4695 = vmatmul.mubr.f32.gmra.mrb[0].mxu0 %v4628
        %v4696 = vpop.f32.mrb[0].mxu0
        %v4697 = vadd.f32 %v4625, %v4696
        %v4698 = vpop.f32.mrb[0].mxu0
        %4699 = vdwg.mxu0
        %v4700 = vmax.f32 %v4697, 0.0
        %v4701 = vld [vmem:[%s18] sm:$0xff]
        %v4702 = vld [vmem:[%s18 + $0x8] sm:$0xff]
        %v4703 = vld [vmem:[%s18 + $0x10] sm:$0xff]
        %v4704 = vld [vmem:[%s18 + $0x18] sm:$0xff]
        %v4705 = vld [vmem:[%s18 + $0x20] sm:$0xff]
        %v4706 = vld [vmem:[%s18 + $0x28] sm:$0xff]
        %v4707 = vld [vmem:[%s18 + $0x30] sm:$0xff]
        %v4708 = vld [vmem:[%s18 + $0x38] sm:$0xff]
        %v4709 = vld [vmem:[%s19] sm:$0x1]
        %v4711 = vlaneseq
        %v4712 = vshrl.u32 %v4711, 7
        %v4713 = vsub.s32 0, %v4712
        %v4714 = vrot.slane %v4709, %v4713
        %vm4716 = vcmask 523264
        %v4718 = vsel %vm4716, %v4700, 0
        %4720 = vmatprep.subr.mxu0 0.0
        %4721 = vmatpush1.msra.mxu0 %v4701
        %4722 = vmatprep.subr.mxu0 0.0
        %4723 = vmatpush1.msra.mxu0 %v4702
        %4724 = vmatprep.subr.mxu0 0.0
        %4725 = vmatpush1.msra.mxu0 %v4703
        %4726 = vmatprep.subr.mxu0 0.0
        %4727 = vmatpush1.msra.mxu0 %v4704
        %4728 = vmatprep.subr.mxu0 0.0
        %4729 = vmatpush1.msra.mxu0 %v4705
        %4730 = vmatprep.subr.mxu0 0.0
        %4731 = vmatpush1.msra.mxu0 %v4706
        %4732 = vmatprep.subr.mxu0 0.0
        %4733 = vmatpush1.msra.mxu0 %v4707
        %4734 = vmatprep.subr.mxu0 0.0
        %4735 = vmatpush1.msra.mxu0 %v4708
        %4736 = vmatprep.subr.mxu0 0.0
        %4737 = vmatpush1.msra.mxu0 0.0
        %4738 = vmatprep.subr.mxu0 0.0
        %4739 = vmatpush1.msra.mxu0 0.0
        %4740 = vmatprep.subr.mxu0 0.0
        %4741 = vmatpush1.msra.mxu0 0.0
        %4742 = vmatprep.subr.mxu0 0.0
        %4743 = vmatpush1.msra.mxu0 0.0
        %4744 = vmatprep.subr.mxu0 0.0
        %4745 = vmatpush1.msra.mxu0 0.0
        %4746 = vmatprep.subr.mxu0 0.0
        %4747 = vmatpush1.msra.mxu0 0.0
        %4748 = vmatprep.subr.mxu0 0.0
        %4749 = vmatpush1.msra.mxu0 0.0
        %4750 = vmatprep.subr.mxu0 0.0
        %4751 = vmatpush1.msra.mxu0 0.0
        %4752 = vmatprep.subr.mxu0 0.0
        %4753 = vmatpush1.msra.mxu0 0.0
        %4754 = vmatprep.subr.mxu0 0.0
        %4755 = vmatpush1.msra.mxu0 0.0
        %4756 = vmatprep.subr.mxu0 0.0
        %4757 = vmatpush1.msra.mxu0 0.0
        %4758 = vmatprep.subr.mxu0 0.0
        %4759 = vmatpush1.msra.mxu0 0.0
        %4760 = vmatprep.subr.mxu0 0.0
        %4761 = vmatpush1.msra.mxu0 0.0
        %4762 = vmatprep.subr.mxu0 0.0
        %4763 = vmatpush1.msra.mxu0 0.0
        %4764 = vmatprep.subr.mxu0 0.0
        %4765 = vmatpush1.msra.mxu0 0.0
        %4766 = vmatprep.subr.mxu0 0.0
        %4767 = vmatpush1.msra.mxu0 0.0
        %4768 = vmatprep.subr.mxu0 0.0
        %4769 = vmatpush1.msra.mxu0 0.0
        %4770 = vmatprep.subr.mxu0 0.0
        %4771 = vmatpush1.msra.mxu0 0.0
        %4772 = vmatprep.subr.mxu0 0.0
        %4773 = vmatpush1.msra.mxu0 0.0
        %4774 = vmatprep.subr.mxu0 0.0
        %4775 = vmatpush1.msra.mxu0 0.0
        %4776 = vmatprep.subr.mxu0 0.0
        %4777 = vmatpush1.msra.mxu0 0.0
        %4778 = vmatprep.subr.mxu0 0.0
        %4779 = vmatpush1.msra.mxu0 0.0
        %4780 = vmatprep.subr.mxu0 0.0
        %4781 = vmatpush1.msra.mxu0 0.0
        %4782 = vmatprep.subr.mxu0 0.0
        %4783 = vmatpush1.msra.mxu0 0.0
        %4784 = vmatprep.mubr.f32.mxu0 0.0
        %4785 = vmatmul.mubr.f32.gmra.mrb[0].mxu0 %v4718
        %v4786 = vpop.f32.mrb[0].mxu0
        %v4787 = vadd.f32 %v4714, %v4786
        %v4788 = vpop.f32.mrb[0].mxu0
        %4789 = vdwg.mxu0
        %v4790 = vadd.f32 %v4615, %v4787
        %v4791 = vld [vmem:[%s20] sm:$0x1]
        %v4792 = vld [vmem:[%s21] sm:$0x1]
        %v4793 = vsel %vm830, %v4790, 0.0
        %4794 = vadd.xlane.f32.xlu0 %v4793
        %v4795 = vpop.xlane.xlu0 %4794
        %v4796 = vmul.f32 %v4795, %v2632
        %v4797 = vsub.f32 %v4790, %v4796
        %v4798 = vmul.f32 %v4797, %v4797
        %v4799 = vsel %vm830, %v4798, 0.0
        %4800 = vadd.xlane.f32.xlu0 %v4799
        %v4801 = vpop.xlane.xlu0 %4800
        %v4802 = vmul.f32 %v4801, %v2632
        %v4803 = vadd.f32 %v4802, 1e-05
        %v4804 = vrsqrt.pop %v4803
        %v4805 = vmul.f32 %v4797, %v4804
        %v4807 = vlaneseq
        %v4808 = vshrl.u32 %v4807, 7
        %v4809 = vsub.s32 0, %v4808
        %v4810 = vrot.slane %v4791, %v4809
        %v4812 = vmul.f32 %v4805, %v4810
        %v4814 = vlaneseq
        %v4815 = vshrl.u32 %v4814, 7
        %v4816 = vsub.s32 0, %v4815
        %v4817 = vrot.slane %v4792, %v4816
        %v4819 = vadd.f32 %v4812, %v4817
        %4820 = vst.msk [vmem:[%s687] sm:$0xff] %vm830, %v4819
        %s4821 = sand.u32 %s516, 1
        %s4822 = scalar_lea.sflag [#allocation3], %s4821
        %s4823 = sand.u32 %s516, 1
        %s4824 = smul.addr %s4823, 8
        %s4825 = scalar_lea.vmem [#allocation2], %s4824
        // Predicated region
        $region109: #{_lambda_.1} parent=107 // pred_check
          %p4826 = pneg %p526
        $region110: #{_lambda_.1} parent=107 // pred_check_branch
          %4828 = sbr.rel (%p4826) target = $region112
        $region111: #{_lambda_.1} parent=107 // pred_region
          %s4830 = ssub.s32 128, 128
          %4831 = vsyncadd %s4822, %s4830
          %s4832 = smul.addr %s36, 128
          %s4833 = scalar_lea.hbm %s22, %s4832
          %s4835 = sshll.u32 %s4825, 4
          %s4836 = int_to_ptr.vmem [resolvable:$true] %s4835
          %4838 = dma.vmem_to_hbm [thread:$0]  %s4836, 128, %s4833, %s4822
        $region112: #{_lambda_.1} parent=107 // pred_fallthru
          _
      $region108: #{_lambda_.1} parent=5 // pred_fallthru
        _
      %p4839 = scmp.le.s32.totalorder 2, %s31
      // Predicated region
      $region113: #{_lambda_.1} parent=5 // pred_check
        %p4840 = pneg %p4839
      $region114: #{_lambda_.1} parent=5 // pred_check_branch
        %4842 = sbr.rel (%p4840) target = $region116
      $region115: #{_lambda_.1} parent=5 // pred_region
        %s4843 = ssub.s32 %s31, 2
        // Predicated region
        $region117: #{_lambda_.1} parent=115 // pred_check
          %p4844 = pneg %p532
        $region118: #{_lambda_.1} parent=115 // pred_check_branch
          %4846 = sbr.rel (%p4844) target = $region120
        $region119: #{_lambda_.1} parent=115 // pred_region
          %s4847 = sand.u32 %s517, 1
          %s4848 = scalar_lea.sflag [#allocation3], %s4847
          %s4849 = sand.u32 %s517, 1
          %s4850 = smul.addr %s4849, 8
          %s4851 = scalar_lea.vmem [#allocation2], %s4850
          %4852 = dma.done %s4848, 128
        $region120: #{_lambda_.1} parent=115 // pred_fallthru
          _
      $region116: #{_lambda_.1} parent=5 // pred_fallthru
        _
    $region6: #{_lambda_.1} parent=1 // loop_footer
      %s35 = sadd.s32 1, %s31
    $region7: #{_lambda_.1} parent=1 // loop_footer_branch
      %30 = sbr.rel target = $region3
    $region8: #{_lambda_.1} parent=1 // loop_exit
      _
    %4853 = vsyncpa [#allocation3], 1
    %s4854 = scalar_lea.sflag [#allocation3], 1
    %4855 = vsyncpa %s4854, 1

</llo_original>
